<compile_context>
chip_gen: v7x
topology: tpu7x:2x2x1
jax: 0.10.0
libtpu: 0.0.40
codegen_flags: <defaults>
</compile_context>

<pallas_src>
import functools
import math

import jax
import jax.numpy as jnp
from jax.experimental import pallas as pl
from jax.experimental.pallas import tpu as pltpu


# ----------------------------------------------------------------------------
# Pallas kernel
# ----------------------------------------------------------------------------
def _selfattn_rnn_kernel(x_ref, w_ref, out_ref, stage_ref, *,
                         num_layers, D, H, r, da, out_dim, max_in):
    f32 = jnp.float32
    B, T, cin = x_ref.shape
    DH = D * H
    L = max_in + DH + 1                       # weight-slab rows per RNN layer

    # Lanes 0..H-1 carry the forward direction, lanes H..2H-1 the backward one.
    fwd_mask = None
    if D == 2:
        fwd_mask = jax.lax.broadcasted_iota(jnp.int32, (B, DH), 1) < H

    inp = x_ref[...]                          # (B, T, cin)

    # ---- multi-layer tanh RNN, direction-fused recurrence --------------------
    for l in range(num_layers):
        in_dim = cin if l == 0 else DH
        base = l * L
        wih = w_ref[base:base + in_dim, 0:DH]                        # (in_dim, DH)
        whh = w_ref[base + max_in:base + max_in + DH, 0:DH]          # (DH, DH) blk-diag
        b = w_ref[base + max_in + DH:base + max_in + DH + 1, 0:DH]   # (1, DH)

        # One MXU slab matmul projects every timestep for both directions.
        xp = (jnp.dot(inp.reshape(B * T, in_dim), wih,
                      preferred_element_type=f32) + b).reshape(B, T, DH)

        # Fused recurrence: step i = forward time i and backward time T-1-i.
        # The per-step input select depends only on xp (off the serial chain).
        h = jnp.zeros((B, DH), f32)
        hs = []
        for i in range(T):
            if D == 2:
                x_in = jnp.where(fwd_mask, xp[:, i, :], xp[:, T - 1 - i, :])
            else:
                x_in = xp[:, i, :]
            h = jnp.tanh(x_in + jnp.dot(h, whh, preferred_element_type=f32))
            hs.append(h)

        # Pair forward time t with backward time t and stage the layer output
        # once per layer (T full-width row stores, not on the dependent chain).
        for t in range(T):
            if D == 2:
                o_t = jnp.where(fwd_mask, hs[t], hs[T - 1 - t])
            else:
                o_t = hs[t]
            stage_ref[:, t, :] = o_t
        inp = stage_ref[...]                  # (B, T, DH)

    rnn_out = inp                             # (B, T, DH)

    # ---- structured self-attention: softmax over time, no transposes --------
    o0 = num_layers * L
    w1t = w_ref[o0:o0 + DH, 0:da]                                    # (DH, da)
    w2t = w_ref[o0 + DH:o0 + DH + da, 0:r]                           # (da, r)
    fc0 = o0 + DH + da

    flat = rnn_out.reshape(B * T, DH)
    a1 = jnp.tanh(jnp.dot(flat, w1t, preferred_element_type=f32))    # (B*T, da)
    scores = jnp.dot(a1, w2t, preferred_element_type=f32).reshape(B, T, r)

    # Softmax over the time axis, unrolled over the (tiny, static) T slices so
    # every intermediate stays a plain (B, r) / (B, DH) 2-D tile.
    sc = [scores[:, t, :] for t in range(T)]                         # T x (B, r)
    m = sc[0]
    for t in range(1, T):
        m = jnp.maximum(m, sc[t])
    es = [jnp.exp(s_t - m) for s_t in sc]
    den = es[0]
    for t in range(1, T):
        den = den + es[t]
    inv = 1.0 / den                                                  # (B, r)

    # y = b_fc + sum_j (sum_t attn[:, t, j] * rnn_out[:, t, :]) @ Wfc_rows[j]
    bfc = w_ref[fc0 + r * DH:fc0 + r * DH + 1, 0:out_dim]            # (1, out)
    y = None
    for j in range(r):
        ctx_j = es[0][:, j:j + 1] * rnn_out[:, 0, :]
        for t in range(1, T):
            ctx_j = ctx_j + es[t][:, j:j + 1] * rnn_out[:, t, :]
        ctx_j = inv[:, j:j + 1] * ctx_j                              # (B, DH)
        wfc_j = w_ref[fc0 + j * DH:fc0 + (j + 1) * DH, 0:out_dim]    # (DH, out)
        yj = jnp.dot(ctx_j, wfc_j, preferred_element_type=f32)
        y = yj if y is None else y + yj
    out_ref[...] = (y + bfc).astype(out_ref.dtype)


# ----------------------------------------------------------------------------
# Wrapper: single packed weight slab + pallas_call
# ----------------------------------------------------------------------------
def _pack_weight_slab(params, *, num_layers, D, H, input_size, da, r, out_dim):
    """Pack every weight/bias into one contiguous (rows, lanes) f32 slab."""
    DH = D * H
    max_in = max(input_size, DH)
    L = max_in + DH + 1
    rows = num_layers * L + DH + da + r * DH + 1
    lanes = max(DH, da, r, out_dim)
    slab = jnp.zeros((rows, lanes), jnp.float32)

    for l in range(num_layers):
        in_dim = input_size if l == 0 else DH
        base = l * L
        # fused (both-direction) input projection: (in_dim, DH)
        wih_cat = jnp.concatenate([params["w_ih"][l][d].T for d in range(D)], axis=-1)
        slab = slab.at[base:base + in_dim, 0:DH].set(wih_cat)
        # block-diagonal recurrent weights (transposed blocks, off-diag exactly 0)
        for d in range(D):
            slab = slab.at[base + max_in + d * H:base + max_in + (d + 1) * H,
                           d * H:(d + 1) * H].set(params["w_hh"][l][d].T)
        # fused bias: b_ih + b_hh per direction, concatenated
        b_cat = jnp.concatenate(
            [params["b_ih"][l][d] + params["b_hh"][l][d] for d in range(D)], axis=-1)
        slab = slab.at[base + max_in + DH, 0:DH].set(b_cat)

    o0 = num_layers * L
    slab = slab.at[o0:o0 + DH, 0:da].set(params["w1"].T)
    slab = slab.at[o0 + DH:o0 + DH + da, 0:r].set(params["w2"].T)
    slab = slab.at[o0 + DH + da:o0 + DH + da + r * DH, 0:out_dim].set(params["w_fc"].T)
    slab = slab.at[o0 + DH + da + r * DH, 0:out_dim].set(params["b_fc"])
    return slab, max_in


def selfattn_series_rnn(x, params, *, num_layers, bidirectional, hidden_size,
                        dim_w1, dim_w2, output_size, batch_tile=None):
    B, T, cin = x.shape
    D = 2 if bidirectional else 1
    H = hidden_size
    DH = D * H
    da, r = dim_w1, dim_w2

    slab, max_in = _pack_weight_slab(params, num_layers=num_layers, D=D, H=H,
                                     input_size=cin, da=da, r=r,
                                     out_dim=output_size)

    # Batch grid axis ("parallel") so v7x's two TensorCores can split large
    # batches; for tiny batches the whole batch runs in a single grid step.
    if batch_tile is None:
        batch_tile = 8 if (B % 8 == 0) else B
    bt = batch_tile
    assert B % bt == 0, "batch must be divisible by the batch tile"

    kernel = functools.partial(_selfattn_rnn_kernel, num_layers=num_layers,
                               D=D, H=H, r=r, da=da, out_dim=output_size,
                               max_in=max_in)

    return pl.pallas_call(
        kernel,
        out_shape=jax.ShapeDtypeStruct((B, output_size), jnp.float32),
        grid=(B // bt,),
        in_specs=[
            pl.BlockSpec((bt, T, cin), lambda i: (i, 0, 0)),
            pl.BlockSpec(slab.shape, lambda i: (0, 0)),   # one resident weight slab
        ],
        out_specs=pl.BlockSpec((bt, output_size), lambda i: (i, 0)),
        scratch_shapes=[pltpu.VMEM((bt, T, DH), jnp.float32)],  # per-layer staging
        compiler_params=pltpu.CompilerParams(dimension_semantics=("parallel",)),
    )(x.astype(jnp.float32), slab)


# ----------------------------------------------------------------------------
# Pure-JAX reference (mirrors torch nn.RNN / SelfAttention / fc semantics)
# ----------------------------------------------------------------------------
def ref_forward(x, params, *, num_layers, bidirectional, hidden_size):
    B, T, _ = x.shape
    D = 2 if bidirectional else 1
    H = hidden_size
    inp = x
    for l in range(num_layers):
        outs = []
        for d in range(D):
            wih = params["w_ih"][l][d]
            whh = params["w_hh"][l][d]
            bih = params["b_ih"][l][d]
            bhh = params["b_hh"][l][d]
            h = jnp.zeros((B, H), x.dtype)
            hs = []
            t_order = range(T) if d == 0 else range(T - 1, -1, -1)
            for t in t_order:
                h = jnp.tanh(inp[:, t, :] @ wih.T + bih + h @ whh.T + bhh)
                hs.append(h)
            if d == 1:
                hs = hs[::-1]
            outs.append(jnp.stack(hs, axis=1))
        inp = jnp.concatenate(outs, axis=-1)
    rnn_out = inp                                        # (B, T, D*H)
    a1 = jnp.tanh(rnn_out @ params["w1"].T)
    scores = a1 @ params["w2"].T
    attn = jax.nn.softmax(scores, axis=1)
    ctx = jnp.einsum('btr,bth->brh', attn, rnn_out)
    return ctx.reshape(B, -1) @ params["w_fc"].T + params["b_fc"][None, :]


# ----------------------------------------------------------------------------
# Main
# ----------------------------------------------------------------------------
if __name__ == "__main__":
    # Small shapes consistent with the module.
    B = 2
    T = 8                 # sequence length
    input_size = 4
    hidden_size = 8
    num_layers = 2
    bidirectional = True
    dim_w1 = 6            # da
    dim_w2 = 3            # r
    output_size = 5

    D = 2 if bidirectional else 1
    DH = D * hidden_size

    key = jax.random.PRNGKey(0)
    ks = iter(jax.random.split(key, 4 * num_layers + 8))

    def init(k, shape, fan_in):
        return jax.random.normal(k, shape, jnp.float32) / math.sqrt(fan_in)

    w_ih, w_hh, b_ih, b_hh = [], [], [], []
    for l in range(num_layers):
        in_dim = input_size if l == 0 else DH
        w_ih.append(init(next(ks), (D, hidden_size, in_dim), in_dim))
        w_hh.append(init(next(ks), (D, hidden_size, hidden_size), hidden_size))
        b_ih.append(0.1 * jax.random.normal(next(ks), (D, hidden_size), jnp.float32))
        b_hh.append(0.1 * jax.random.normal(next(ks), (D, hidden_size), jnp.float32))

    params = {
        "w_ih": w_ih, "w_hh": w_hh, "b_ih": b_ih, "b_hh": b_hh,
        # SelfAttention: W1 (da, DH) no bias, W2 (r, da) no bias
        "w1": init(next(ks), (dim_w1, DH), DH),
        "w2": init(next(ks), (dim_w2, dim_w1), dim_w1),
        # final fc: Linear(r*DH, output_size)
        "w_fc": init(next(ks), (output_size, dim_w2 * DH), dim_w2 * DH),
        "b_fc": 0.1 * jax.random.normal(next(ks), (output_size,), jnp.float32),
    }

    # Input in the PyTorch call layout: (B, seq_len, input_size)
    x = jax.random.normal(next(ks), (B, T, input_size), jnp.float32)

    out = selfattn_series_rnn(x, params, num_layers=num_layers,
                              bidirectional=bidirectional,
                              hidden_size=hidden_size, dim_w1=dim_w1,
                              dim_w2=dim_w2, output_size=output_size)
    out = jax.block_until_ready(out)

    # Gold reference at float32 matmul precision.  The kernel's MXU dots run at
    # Mosaic's default f32 precision, so the tolerance must cover a possible
    # ~1e-3 accumulated difference through the 16-step recurrence; a genuine
    # layout/indexing bug produces O(1) errors and is still caught.
    with jax.default_matmul_precision("highest"):
        ref = ref_forward(x, params, num_layers=num_layers,
                          bidirectional=bidirectional, hidden_size=hidden_size)
    ref = jax.block_until_ready(ref)

    assert out.shape == (B, output_size)
    if not jnp.allclose(out, ref, rtol=5e-3, atol=5e-3):
        raise AssertionError(f"mismatch:\nkernel={out}\nref={ref}")
    print("KERNEL_OK")
</pallas_src>

<mosaic_0001>
module attributes {stable_mosaic.version = 11 : i64} {
  func.func @_selfattn_rnn_kernel(%arg0: i32, %arg1: memref<2x8x4xf32, #tpu.memory_space<vmem>>, %arg2: memref<137x16xf32, #tpu.memory_space<vmem>>, %arg3: memref<2x5xf32, #tpu.memory_space<vmem>>, %arg4: memref<2x8x16xf32, #tpu.memory_space<vmem>>) attributes {dimension_semantics = [#tpu.dimension_semantics<parallel>], iteration_bounds = array<i64: 1>, scalar_prefetch = 0 : i64, scratch_operands = 1 : i64, tpu.core_type = #tpu.core_type<tc>, window_params = [{transform_indices = @transform_0, window_bounds = array<i64: 2, 8, 4>}, {pipeline_mode = #tpu.pipeline_mode<synchronous>, transform_indices = @transform_1, window_bounds = array<i64: 137, 16>}, {transform_indices = @transform_2, window_bounds = array<i64: 2, 5>}]} {
    %0 = tpu.iota {dimensions = array<i32: 1>} : vector<2x16xi32>
    %c8_i32 = arith.constant 8 : i32
    %1 = vector.broadcast %c8_i32 : i32 to vector<2x16xi32>
    %2 = arith.cmpi slt, %0, %1 : vector<2x16xi32>
    %c0 = arith.constant 0 : index
    %c0_0 = arith.constant 0 : index
    %c0_1 = arith.constant 0 : index
    %3 = vector.load %arg1[%c0, %c0_0, %c0_1] : memref<2x8x4xf32, #tpu.memory_space<vmem>>, vector<2x8x4xf32>
    %c0_2 = arith.constant 0 : index
    %c0_3 = arith.constant 0 : index
    %4 = vector.load %arg2[%c0_2, %c0_3] : memref<137x16xf32, #tpu.memory_space<vmem>>, vector<4x16xf32>
    %c16 = arith.constant 16 : index
    %c0_4 = arith.constant 0 : index
    %5 = vector.load %arg2[%c16, %c0_4] : memref<137x16xf32, #tpu.memory_space<vmem>>, vector<16x16xf32>
    %c32 = arith.constant 32 : index
    %c0_5 = arith.constant 0 : index
    %6 = vector.load %arg2[%c32, %c0_5] : memref<137x16xf32, #tpu.memory_space<vmem>>, vector<1x16xf32>
    %7 = vector.shape_cast %3 : vector<2x8x4xf32> to vector<16x4xf32>
    %cst = arith.constant dense<0.000000e+00> : vector<16x16xf32>
    %8 = tpu.matmul %7, %4, %cst {dimension_numbers = #tpu.dot_dimension_numbers<[1], [0], [0], [1], [0, 0, 1, 1], [], []>} : vector<16x4xf32>, vector<4x16xf32>, vector<16x16xf32> -> vector<16x16xf32>
    %9 = vector.broadcast %6 : vector<1x16xf32> to vector<16x16xf32>
    %10 = arith.addf %8, %9 : vector<16x16xf32>
    %11 = vector.shape_cast %10 : vector<16x16xf32> to vector<2x8x16xf32>
    %cst_6 = arith.constant 0.000000e+00 : f32
    %12 = vector.broadcast %cst_6 : f32 to vector<2x16xf32>
    %13 = vector.extract_strided_slice %11 {offsets = [0, 0, 0], sizes = [2, 1, 16], strides = [1, 1, 1]} : vector<2x8x16xf32> to vector<2x1x16xf32>
    %14 = vector.shape_cast %13 : vector<2x1x16xf32> to vector<2x16xf32>
    %15 = vector.extract_strided_slice %11 {offsets = [0, 7, 0], sizes = [2, 1, 16], strides = [1, 1, 1]} : vector<2x8x16xf32> to vector<2x1x16xf32>
    %16 = vector.shape_cast %15 : vector<2x1x16xf32> to vector<2x16xf32>
    %17 = arith.select %2, %14, %16 : vector<2x16xi1>, vector<2x16xf32>
    %cst_7 = arith.constant dense<0.000000e+00> : vector<2x16xf32>
    %18 = tpu.matmul %12, %5, %cst_7 {dimension_numbers = #tpu.dot_dimension_numbers<[1], [0], [0], [1], [0, 0, 1, 1], [], []>} : vector<2x16xf32>, vector<16x16xf32>, vector<2x16xf32> -> vector<2x16xf32>
    %19 = arith.addf %17, %18 : vector<2x16xf32>
    %20 = math.tanh %19 : vector<2x16xf32>
    %21 = vector.extract_strided_slice %11 {offsets = [0, 1, 0], sizes = [2, 1, 16], strides = [1, 1, 1]} : vector<2x8x16xf32> to vector<2x1x16xf32>
    %22 = vector.shape_cast %21 : vector<2x1x16xf32> to vector<2x16xf32>
    %23 = vector.extract_strided_slice %11 {offsets = [0, 6, 0], sizes = [2, 1, 16], strides = [1, 1, 1]} : vector<2x8x16xf32> to vector<2x1x16xf32>
    %24 = vector.shape_cast %23 : vector<2x1x16xf32> to vector<2x16xf32>
    %25 = arith.select %2, %22, %24 : vector<2x16xi1>, vector<2x16xf32>
    %cst_8 = arith.constant dense<0.000000e+00> : vector<2x16xf32>
    %26 = tpu.matmul %20, %5, %cst_8 {dimension_numbers = #tpu.dot_dimension_numbers<[1], [0], [0], [1], [0, 0, 1, 1], [], []>} : vector<2x16xf32>, vector<16x16xf32>, vector<2x16xf32> -> vector<2x16xf32>
    %27 = arith.addf %25, %26 : vector<2x16xf32>
    %28 = math.tanh %27 : vector<2x16xf32>
    %29 = vector.extract_strided_slice %11 {offsets = [0, 2, 0], sizes = [2, 1, 16], strides = [1, 1, 1]} : vector<2x8x16xf32> to vector<2x1x16xf32>
    %30 = vector.shape_cast %29 : vector<2x1x16xf32> to vector<2x16xf32>
    %31 = vector.extract_strided_slice %11 {offsets = [0, 5, 0], sizes = [2, 1, 16], strides = [1, 1, 1]} : vector<2x8x16xf32> to vector<2x1x16xf32>
    %32 = vector.shape_cast %31 : vector<2x1x16xf32> to vector<2x16xf32>
    %33 = arith.select %2, %30, %32 : vector<2x16xi1>, vector<2x16xf32>
    %cst_9 = arith.constant dense<0.000000e+00> : vector<2x16xf32>
    %34 = tpu.matmul %28, %5, %cst_9 {dimension_numbers = #tpu.dot_dimension_numbers<[1], [0], [0], [1], [0, 0, 1, 1], [], []>} : vector<2x16xf32>, vector<16x16xf32>, vector<2x16xf32> -> vector<2x16xf32>
    %35 = arith.addf %33, %34 : vector<2x16xf32>
    %36 = math.tanh %35 : vector<2x16xf32>
    %37 = vector.extract_strided_slice %11 {offsets = [0, 3, 0], sizes = [2, 1, 16], strides = [1, 1, 1]} : vector<2x8x16xf32> to vector<2x1x16xf32>
    %38 = vector.shape_cast %37 : vector<2x1x16xf32> to vector<2x16xf32>
    %39 = vector.extract_strided_slice %11 {offsets = [0, 4, 0], sizes = [2, 1, 16], strides = [1, 1, 1]} : vector<2x8x16xf32> to vector<2x1x16xf32>
    %40 = vector.shape_cast %39 : vector<2x1x16xf32> to vector<2x16xf32>
    %41 = arith.select %2, %38, %40 : vector<2x16xi1>, vector<2x16xf32>
    %cst_10 = arith.constant dense<0.000000e+00> : vector<2x16xf32>
    %42 = tpu.matmul %36, %5, %cst_10 {dimension_numbers = #tpu.dot_dimension_numbers<[1], [0], [0], [1], [0, 0, 1, 1], [], []>} : vector<2x16xf32>, vector<16x16xf32>, vector<2x16xf32> -> vector<2x16xf32>
    %43 = arith.addf %41, %42 : vector<2x16xf32>
    %44 = math.tanh %43 : vector<2x16xf32>
    %45 = vector.extract_strided_slice %11 {offsets = [0, 4, 0], sizes = [2, 1, 16], strides = [1, 1, 1]} : vector<2x8x16xf32> to vector<2x1x16xf32>
    %46 = vector.shape_cast %45 : vector<2x1x16xf32> to vector<2x16xf32>
    %47 = vector.extract_strided_slice %11 {offsets = [0, 3, 0], sizes = [2, 1, 16], strides = [1, 1, 1]} : vector<2x8x16xf32> to vector<2x1x16xf32>
    %48 = vector.shape_cast %47 : vector<2x1x16xf32> to vector<2x16xf32>
    %49 = arith.select %2, %46, %48 : vector<2x16xi1>, vector<2x16xf32>
    %cst_11 = arith.constant dense<0.000000e+00> : vector<2x16xf32>
    %50 = tpu.matmul %44, %5, %cst_11 {dimension_numbers = #tpu.dot_dimension_numbers<[1], [0], [0], [1], [0, 0, 1, 1], [], []>} : vector<2x16xf32>, vector<16x16xf32>, vector<2x16xf32> -> vector<2x16xf32>
    %51 = arith.addf %49, %50 : vector<2x16xf32>
    %52 = math.tanh %51 : vector<2x16xf32>
    %53 = vector.extract_strided_slice %11 {offsets = [0, 5, 0], sizes = [2, 1, 16], strides = [1, 1, 1]} : vector<2x8x16xf32> to vector<2x1x16xf32>
    %54 = vector.shape_cast %53 : vector<2x1x16xf32> to vector<2x16xf32>
    %55 = vector.extract_strided_slice %11 {offsets = [0, 2, 0], sizes = [2, 1, 16], strides = [1, 1, 1]} : vector<2x8x16xf32> to vector<2x1x16xf32>
    %56 = vector.shape_cast %55 : vector<2x1x16xf32> to vector<2x16xf32>
    %57 = arith.select %2, %54, %56 : vector<2x16xi1>, vector<2x16xf32>
    %cst_12 = arith.constant dense<0.000000e+00> : vector<2x16xf32>
    %58 = tpu.matmul %52, %5, %cst_12 {dimension_numbers = #tpu.dot_dimension_numbers<[1], [0], [0], [1], [0, 0, 1, 1], [], []>} : vector<2x16xf32>, vector<16x16xf32>, vector<2x16xf32> -> vector<2x16xf32>
    %59 = arith.addf %57, %58 : vector<2x16xf32>
    %60 = math.tanh %59 : vector<2x16xf32>
    %61 = vector.extract_strided_slice %11 {offsets = [0, 6, 0], sizes = [2, 1, 16], strides = [1, 1, 1]} : vector<2x8x16xf32> to vector<2x1x16xf32>
    %62 = vector.shape_cast %61 : vector<2x1x16xf32> to vector<2x16xf32>
    %63 = vector.extract_strided_slice %11 {offsets = [0, 1, 0], sizes = [2, 1, 16], strides = [1, 1, 1]} : vector<2x8x16xf32> to vector<2x1x16xf32>
    %64 = vector.shape_cast %63 : vector<2x1x16xf32> to vector<2x16xf32>
    %65 = arith.select %2, %62, %64 : vector<2x16xi1>, vector<2x16xf32>
    %cst_13 = arith.constant dense<0.000000e+00> : vector<2x16xf32>
    %66 = tpu.matmul %60, %5, %cst_13 {dimension_numbers = #tpu.dot_dimension_numbers<[1], [0], [0], [1], [0, 0, 1, 1], [], []>} : vector<2x16xf32>, vector<16x16xf32>, vector<2x16xf32> -> vector<2x16xf32>
    %67 = arith.addf %65, %66 : vector<2x16xf32>
    %68 = math.tanh %67 : vector<2x16xf32>
    %69 = vector.extract_strided_slice %11 {offsets = [0, 7, 0], sizes = [2, 1, 16], strides = [1, 1, 1]} : vector<2x8x16xf32> to vector<2x1x16xf32>
    %70 = vector.shape_cast %69 : vector<2x1x16xf32> to vector<2x16xf32>
    %71 = vector.extract_strided_slice %11 {offsets = [0, 0, 0], sizes = [2, 1, 16], strides = [1, 1, 1]} : vector<2x8x16xf32> to vector<2x1x16xf32>
    %72 = vector.shape_cast %71 : vector<2x1x16xf32> to vector<2x16xf32>
    %73 = arith.select %2, %70, %72 : vector<2x16xi1>, vector<2x16xf32>
    %cst_14 = arith.constant dense<0.000000e+00> : vector<2x16xf32>
    %74 = tpu.matmul %68, %5, %cst_14 {dimension_numbers = #tpu.dot_dimension_numbers<[1], [0], [0], [1], [0, 0, 1, 1], [], []>} : vector<2x16xf32>, vector<16x16xf32>, vector<2x16xf32> -> vector<2x16xf32>
    %75 = arith.addf %73, %74 : vector<2x16xf32>
    %76 = math.tanh %75 : vector<2x16xf32>
    %77 = arith.select %2, %20, %76 : vector<2x16xi1>, vector<2x16xf32>
    %c0_15 = arith.constant 0 : index
    %c0_16 = arith.constant 0 : index
    %c0_17 = arith.constant 0 : index
    %78 = vector.load %arg4[%c0_15, %c0_16, %c0_17] : memref<2x8x16xf32, #tpu.memory_space<vmem>>, vector<2x1x16xf32>
    %79 = vector.shape_cast %78 : vector<2x1x16xf32> to vector<2x16xf32>
    %80 = vector.shape_cast %77 : vector<2x16xf32> to vector<2x1x16xf32>
    tpu.vector_store %arg4[%c0_15, %c0_16, %c0_17], %80 {strides = array<i32>} : memref<2x8x16xf32, #tpu.memory_space<vmem>>, vector<2x1x16xf32>,
    %81 = arith.select %2, %28, %68 : vector<2x16xi1>, vector<2x16xf32>
    %c0_18 = arith.constant 0 : index
    %c1 = arith.constant 1 : index
    %c0_19 = arith.constant 0 : index
    %82 = vector.load %arg4[%c0_18, %c1, %c0_19] : memref<2x8x16xf32, #tpu.memory_space<vmem>>, vector<2x1x16xf32>
    %83 = vector.shape_cast %82 : vector<2x1x16xf32> to vector<2x16xf32>
    %84 = vector.shape_cast %81 : vector<2x16xf32> to vector<2x1x16xf32>
    tpu.vector_store %arg4[%c0_18, %c1, %c0_19], %84 {strides = array<i32>} : memref<2x8x16xf32, #tpu.memory_space<vmem>>, vector<2x1x16xf32>,
    %85 = arith.select %2, %36, %60 : vector<2x16xi1>, vector<2x16xf32>
    %c0_20 = arith.constant 0 : index
    %c2 = arith.constant 2 : index
    %c0_21 = arith.constant 0 : index
    %86 = vector.load %arg4[%c0_20, %c2, %c0_21] : memref<2x8x16xf32, #tpu.memory_space<vmem>>, vector<2x1x16xf32>
    %87 = vector.shape_cast %86 : vector<2x1x16xf32> to vector<2x16xf32>
    %88 = vector.shape_cast %85 : vector<2x16xf32> to vector<2x1x16xf32>
    tpu.vector_store %arg4[%c0_20, %c2, %c0_21], %88 {strides = array<i32>} : memref<2x8x16xf32, #tpu.memory_space<vmem>>, vector<2x1x16xf32>,
    %89 = arith.select %2, %44, %52 : vector<2x16xi1>, vector<2x16xf32>
    %c0_22 = arith.constant 0 : index
    %c3 = arith.constant 3 : index
    %c0_23 = arith.constant 0 : index
    %90 = vector.load %arg4[%c0_22, %c3, %c0_23] : memref<2x8x16xf32, #tpu.memory_space<vmem>>, vector<2x1x16xf32>
    %91 = vector.shape_cast %90 : vector<2x1x16xf32> to vector<2x16xf32>
    %92 = vector.shape_cast %89 : vector<2x16xf32> to vector<2x1x16xf32>
    tpu.vector_store %arg4[%c0_22, %c3, %c0_23], %92 {strides = array<i32>} : memref<2x8x16xf32, #tpu.memory_space<vmem>>, vector<2x1x16xf32>,
    %93 = arith.select %2, %52, %44 : vector<2x16xi1>, vector<2x16xf32>
    %c0_24 = arith.constant 0 : index
    %c4 = arith.constant 4 : index
    %c0_25 = arith.constant 0 : index
    %94 = vector.load %arg4[%c0_24, %c4, %c0_25] : memref<2x8x16xf32, #tpu.memory_space<vmem>>, vector<2x1x16xf32>
    %95 = vector.shape_cast %94 : vector<2x1x16xf32> to vector<2x16xf32>
    %96 = vector.shape_cast %93 : vector<2x16xf32> to vector<2x1x16xf32>
    tpu.vector_store %arg4[%c0_24, %c4, %c0_25], %96 {strides = array<i32>} : memref<2x8x16xf32, #tpu.memory_space<vmem>>, vector<2x1x16xf32>,
    %97 = arith.select %2, %60, %36 : vector<2x16xi1>, vector<2x16xf32>
    %c0_26 = arith.constant 0 : index
    %c5 = arith.constant 5 : index
    %c0_27 = arith.constant 0 : index
    %98 = vector.load %arg4[%c0_26, %c5, %c0_27] : memref<2x8x16xf32, #tpu.memory_space<vmem>>, vector<2x1x16xf32>
    %99 = vector.shape_cast %98 : vector<2x1x16xf32> to vector<2x16xf32>
    %100 = vector.shape_cast %97 : vector<2x16xf32> to vector<2x1x16xf32>
    tpu.vector_store %arg4[%c0_26, %c5, %c0_27], %100 {strides = array<i32>} : memref<2x8x16xf32, #tpu.memory_space<vmem>>, vector<2x1x16xf32>,
    %101 = arith.select %2, %68, %28 : vector<2x16xi1>, vector<2x16xf32>
    %c0_28 = arith.constant 0 : index
    %c6 = arith.constant 6 : index
    %c0_29 = arith.constant 0 : index
    %102 = vector.load %arg4[%c0_28, %c6, %c0_29] : memref<2x8x16xf32, #tpu.memory_space<vmem>>, vector<2x1x16xf32>
    %103 = vector.shape_cast %102 : vector<2x1x16xf32> to vector<2x16xf32>
    %104 = vector.shape_cast %101 : vector<2x16xf32> to vector<2x1x16xf32>
    tpu.vector_store %arg4[%c0_28, %c6, %c0_29], %104 {strides = array<i32>} : memref<2x8x16xf32, #tpu.memory_space<vmem>>, vector<2x1x16xf32>,
    %105 = arith.select %2, %76, %20 : vector<2x16xi1>, vector<2x16xf32>
    %c0_30 = arith.constant 0 : index
    %c7 = arith.constant 7 : index
    %c0_31 = arith.constant 0 : index
    %106 = vector.load %arg4[%c0_30, %c7, %c0_31] : memref<2x8x16xf32, #tpu.memory_space<vmem>>, vector<2x1x16xf32>
    %107 = vector.shape_cast %106 : vector<2x1x16xf32> to vector<2x16xf32>
    %108 = vector.shape_cast %105 : vector<2x16xf32> to vector<2x1x16xf32>
    tpu.vector_store %arg4[%c0_30, %c7, %c0_31], %108 {strides = array<i32>} : memref<2x8x16xf32, #tpu.memory_space<vmem>>, vector<2x1x16xf32>,
    %c0_32 = arith.constant 0 : index
    %c0_33 = arith.constant 0 : index
    %c0_34 = arith.constant 0 : index
    %109 = vector.load %arg4[%c0_32, %c0_33, %c0_34] : memref<2x8x16xf32, #tpu.memory_space<vmem>>, vector<2x8x16xf32>
    %c33 = arith.constant 33 : index
    %c0_35 = arith.constant 0 : index
    %110 = vector.load %arg2[%c33, %c0_35] : memref<137x16xf32, #tpu.memory_space<vmem>>, vector<16x16xf32>
    %c49 = arith.constant 49 : index
    %c0_36 = arith.constant 0 : index
    %111 = vector.load %arg2[%c49, %c0_36] : memref<137x16xf32, #tpu.memory_space<vmem>>, vector<16x16xf32>
    %c65 = arith.constant 65 : index
    %c0_37 = arith.constant 0 : index
    %112 = vector.load %arg2[%c65, %c0_37] : memref<137x16xf32, #tpu.memory_space<vmem>>, vector<1x16xf32>
    %113 = vector.shape_cast %109 : vector<2x8x16xf32> to vector<16x16xf32>
    %cst_38 = arith.constant dense<0.000000e+00> : vector<16x16xf32>
    %114 = tpu.matmul %113, %110, %cst_38 {dimension_numbers = #tpu.dot_dimension_numbers<[1], [0], [0], [1], [0, 0, 1, 1], [], []>} : vector<16x16xf32>, vector<16x16xf32>, vector<16x16xf32> -> vector<16x16xf32>
    %115 = vector.broadcast %112 : vector<1x16xf32> to vector<16x16xf32>
    %116 = arith.addf %114, %115 : vector<16x16xf32>
    %117 = vector.shape_cast %116 : vector<16x16xf32> to vector<2x8x16xf32>
    %cst_39 = arith.constant 0.000000e+00 : f32
    %118 = vector.broadcast %cst_39 : f32 to vector<2x16xf32>
    %119 = vector.extract_strided_slice %117 {offsets = [0, 0, 0], sizes = [2, 1, 16], strides = [1, 1, 1]} : vector<2x8x16xf32> to vector<2x1x16xf32>
    %120 = vector.shape_cast %119 : vector<2x1x16xf32> to vector<2x16xf32>
    %121 = vector.extract_strided_slice %117 {offsets = [0, 7, 0], sizes = [2, 1, 16], strides = [1, 1, 1]} : vector<2x8x16xf32> to vector<2x1x16xf32>
    %122 = vector.shape_cast %121 : vector<2x1x16xf32> to vector<2x16xf32>
    %123 = arith.select %2, %120, %122 : vector<2x16xi1>, vector<2x16xf32>
    %cst_40 = arith.constant dense<0.000000e+00> : vector<2x16xf32>
    %124 = tpu.matmul %118, %111, %cst_40 {dimension_numbers = #tpu.dot_dimension_numbers<[1], [0], [0], [1], [0, 0, 1, 1], [], []>} : vector<2x16xf32>, vector<16x16xf32>, vector<2x16xf32> -> vector<2x16xf32>
    %125 = arith.addf %123, %124 : vector<2x16xf32>
    %126 = math.tanh %125 : vector<2x16xf32>
    %127 = vector.extract_strided_slice %117 {offsets = [0, 1, 0], sizes = [2, 1, 16], strides = [1, 1, 1]} : vector<2x8x16xf32> to vector<2x1x16xf32>
    %128 = vector.shape_cast %127 : vector<2x1x16xf32> to vector<2x16xf32>
    %129 = vector.extract_strided_slice %117 {offsets = [0, 6, 0], sizes = [2, 1, 16], strides = [1, 1, 1]} : vector<2x8x16xf32> to vector<2x1x16xf32>
    %130 = vector.shape_cast %129 : vector<2x1x16xf32> to vector<2x16xf32>
    %131 = arith.select %2, %128, %130 : vector<2x16xi1>, vector<2x16xf32>
    %cst_41 = arith.constant dense<0.000000e+00> : vector<2x16xf32>
    %132 = tpu.matmul %126, %111, %cst_41 {dimension_numbers = #tpu.dot_dimension_numbers<[1], [0], [0], [1], [0, 0, 1, 1], [], []>} : vector<2x16xf32>, vector<16x16xf32>, vector<2x16xf32> -> vector<2x16xf32>
    %133 = arith.addf %131, %132 : vector<2x16xf32>
    %134 = math.tanh %133 : vector<2x16xf32>
    %135 = vector.extract_strided_slice %117 {offsets = [0, 2, 0], sizes = [2, 1, 16], strides = [1, 1, 1]} : vector<2x8x16xf32> to vector<2x1x16xf32>
    %136 = vector.shape_cast %135 : vector<2x1x16xf32> to vector<2x16xf32>
    %137 = vector.extract_strided_slice %117 {offsets = [0, 5, 0], sizes = [2, 1, 16], strides = [1, 1, 1]} : vector<2x8x16xf32> to vector<2x1x16xf32>
    %138 = vector.shape_cast %137 : vector<2x1x16xf32> to vector<2x16xf32>
    %139 = arith.select %2, %136, %138 : vector<2x16xi1>, vector<2x16xf32>
    %cst_42 = arith.constant dense<0.000000e+00> : vector<2x16xf32>
    %140 = tpu.matmul %134, %111, %cst_42 {dimension_numbers = #tpu.dot_dimension_numbers<[1], [0], [0], [1], [0, 0, 1, 1], [], []>} : vector<2x16xf32>, vector<16x16xf32>, vector<2x16xf32> -> vector<2x16xf32>
    %141 = arith.addf %139, %140 : vector<2x16xf32>
    %142 = math.tanh %141 : vector<2x16xf32>
    %143 = vector.extract_strided_slice %117 {offsets = [0, 3, 0], sizes = [2, 1, 16], strides = [1, 1, 1]} : vector<2x8x16xf32> to vector<2x1x16xf32>
    %144 = vector.shape_cast %143 : vector<2x1x16xf32> to vector<2x16xf32>
    %145 = vector.extract_strided_slice %117 {offsets = [0, 4, 0], sizes = [2, 1, 16], strides = [1, 1, 1]} : vector<2x8x16xf32> to vector<2x1x16xf32>
    %146 = vector.shape_cast %145 : vector<2x1x16xf32> to vector<2x16xf32>
    %147 = arith.select %2, %144, %146 : vector<2x16xi1>, vector<2x16xf32>
    %cst_43 = arith.constant dense<0.000000e+00> : vector<2x16xf32>
    %148 = tpu.matmul %142, %111, %cst_43 {dimension_numbers = #tpu.dot_dimension_numbers<[1], [0], [0], [1], [0, 0, 1, 1], [], []>} : vector<2x16xf32>, vector<16x16xf32>, vector<2x16xf32> -> vector<2x16xf32>
    %149 = arith.addf %147, %148 : vector<2x16xf32>
    %150 = math.tanh %149 : vector<2x16xf32>
    %151 = vector.extract_strided_slice %117 {offsets = [0, 4, 0], sizes = [2, 1, 16], strides = [1, 1, 1]} : vector<2x8x16xf32> to vector<2x1x16xf32>
    %152 = vector.shape_cast %151 : vector<2x1x16xf32> to vector<2x16xf32>
    %153 = vector.extract_strided_slice %117 {offsets = [0, 3, 0], sizes = [2, 1, 16], strides = [1, 1, 1]} : vector<2x8x16xf32> to vector<2x1x16xf32>
    %154 = vector.shape_cast %153 : vector<2x1x16xf32> to vector<2x16xf32>
    %155 = arith.select %2, %152, %154 : vector<2x16xi1>, vector<2x16xf32>
    %cst_44 = arith.constant dense<0.000000e+00> : vector<2x16xf32>
    %156 = tpu.matmul %150, %111, %cst_44 {dimension_numbers = #tpu.dot_dimension_numbers<[1], [0], [0], [1], [0, 0, 1, 1], [], []>} : vector<2x16xf32>, vector<16x16xf32>, vector<2x16xf32> -> vector<2x16xf32>
    %157 = arith.addf %155, %156 : vector<2x16xf32>
    %158 = math.tanh %157 : vector<2x16xf32>
    %159 = vector.extract_strided_slice %117 {offsets = [0, 5, 0], sizes = [2, 1, 16], strides = [1, 1, 1]} : vector<2x8x16xf32> to vector<2x1x16xf32>
    %160 = vector.shape_cast %159 : vector<2x1x16xf32> to vector<2x16xf32>
    %161 = vector.extract_strided_slice %117 {offsets = [0, 2, 0], sizes = [2, 1, 16], strides = [1, 1, 1]} : vector<2x8x16xf32> to vector<2x1x16xf32>
    %162 = vector.shape_cast %161 : vector<2x1x16xf32> to vector<2x16xf32>
    %163 = arith.select %2, %160, %162 : vector<2x16xi1>, vector<2x16xf32>
    %cst_45 = arith.constant dense<0.000000e+00> : vector<2x16xf32>
    %164 = tpu.matmul %158, %111, %cst_45 {dimension_numbers = #tpu.dot_dimension_numbers<[1], [0], [0], [1], [0, 0, 1, 1], [], []>} : vector<2x16xf32>, vector<16x16xf32>, vector<2x16xf32> -> vector<2x16xf32>
    %165 = arith.addf %163, %164 : vector<2x16xf32>
    %166 = math.tanh %165 : vector<2x16xf32>
    %167 = vector.extract_strided_slice %117 {offsets = [0, 6, 0], sizes = [2, 1, 16], strides = [1, 1, 1]} : vector<2x8x16xf32> to vector<2x1x16xf32>
    %168 = vector.shape_cast %167 : vector<2x1x16xf32> to vector<2x16xf32>
    %169 = vector.extract_strided_slice %117 {offsets = [0, 1, 0], sizes = [2, 1, 16], strides = [1, 1, 1]} : vector<2x8x16xf32> to vector<2x1x16xf32>
    %170 = vector.shape_cast %169 : vector<2x1x16xf32> to vector<2x16xf32>
    %171 = arith.select %2, %168, %170 : vector<2x16xi1>, vector<2x16xf32>
    %cst_46 = arith.constant dense<0.000000e+00> : vector<2x16xf32>
    %172 = tpu.matmul %166, %111, %cst_46 {dimension_numbers = #tpu.dot_dimension_numbers<[1], [0], [0], [1], [0, 0, 1, 1], [], []>} : vector<2x16xf32>, vector<16x16xf32>, vector<2x16xf32> -> vector<2x16xf32>
    %173 = arith.addf %171, %172 : vector<2x16xf32>
    %174 = math.tanh %173 : vector<2x16xf32>
    %175 = vector.extract_strided_slice %117 {offsets = [0, 7, 0], sizes = [2, 1, 16], strides = [1, 1, 1]} : vector<2x8x16xf32> to vector<2x1x16xf32>
    %176 = vector.shape_cast %175 : vector<2x1x16xf32> to vector<2x16xf32>
    %177 = vector.extract_strided_slice %117 {offsets = [0, 0, 0], sizes = [2, 1, 16], strides = [1, 1, 1]} : vector<2x8x16xf32> to vector<2x1x16xf32>
    %178 = vector.shape_cast %177 : vector<2x1x16xf32> to vector<2x16xf32>
    %179 = arith.select %2, %176, %178 : vector<2x16xi1>, vector<2x16xf32>
    %cst_47 = arith.constant dense<0.000000e+00> : vector<2x16xf32>
    %180 = tpu.matmul %174, %111, %cst_47 {dimension_numbers = #tpu.dot_dimension_numbers<[1], [0], [0], [1], [0, 0, 1, 1], [], []>} : vector<2x16xf32>, vector<16x16xf32>, vector<2x16xf32> -> vector<2x16xf32>
    %181 = arith.addf %179, %180 : vector<2x16xf32>
    %182 = math.tanh %181 : vector<2x16xf32>
    %183 = arith.select %2, %126, %182 : vector<2x16xi1>, vector<2x16xf32>
    %c0_48 = arith.constant 0 : index
    %c0_49 = arith.constant 0 : index
    %c0_50 = arith.constant 0 : index
    %184 = vector.load %arg4[%c0_48, %c0_49, %c0_50] : memref<2x8x16xf32, #tpu.memory_space<vmem>>, vector<2x1x16xf32>
    %185 = vector.shape_cast %184 : vector<2x1x16xf32> to vector<2x16xf32>
    %186 = vector.shape_cast %183 : vector<2x16xf32> to vector<2x1x16xf32>
    tpu.vector_store %arg4[%c0_48, %c0_49, %c0_50], %186 {strides = array<i32>} : memref<2x8x16xf32, #tpu.memory_space<vmem>>, vector<2x1x16xf32>,
    %187 = arith.select %2, %134, %174 : vector<2x16xi1>, vector<2x16xf32>
    %c0_51 = arith.constant 0 : index
    %c1_52 = arith.constant 1 : index
    %c0_53 = arith.constant 0 : index
    %188 = vector.load %arg4[%c0_51, %c1_52, %c0_53] : memref<2x8x16xf32, #tpu.memory_space<vmem>>, vector<2x1x16xf32>
    %189 = vector.shape_cast %188 : vector<2x1x16xf32> to vector<2x16xf32>
    %190 = vector.shape_cast %187 : vector<2x16xf32> to vector<2x1x16xf32>
    tpu.vector_store %arg4[%c0_51, %c1_52, %c0_53], %190 {strides = array<i32>} : memref<2x8x16xf32, #tpu.memory_space<vmem>>, vector<2x1x16xf32>,
    %191 = arith.select %2, %142, %166 : vector<2x16xi1>, vector<2x16xf32>
    %c0_54 = arith.constant 0 : index
    %c2_55 = arith.constant 2 : index
    %c0_56 = arith.constant 0 : index
    %192 = vector.load %arg4[%c0_54, %c2_55, %c0_56] : memref<2x8x16xf32, #tpu.memory_space<vmem>>, vector<2x1x16xf32>
    %193 = vector.shape_cast %192 : vector<2x1x16xf32> to vector<2x16xf32>
    %194 = vector.shape_cast %191 : vector<2x16xf32> to vector<2x1x16xf32>
    tpu.vector_store %arg4[%c0_54, %c2_55, %c0_56], %194 {strides = array<i32>} : memref<2x8x16xf32, #tpu.memory_space<vmem>>, vector<2x1x16xf32>,
    %195 = arith.select %2, %150, %158 : vector<2x16xi1>, vector<2x16xf32>
    %c0_57 = arith.constant 0 : index
    %c3_58 = arith.constant 3 : index
    %c0_59 = arith.constant 0 : index
    %196 = vector.load %arg4[%c0_57, %c3_58, %c0_59] : memref<2x8x16xf32, #tpu.memory_space<vmem>>, vector<2x1x16xf32>
    %197 = vector.shape_cast %196 : vector<2x1x16xf32> to vector<2x16xf32>
    %198 = vector.shape_cast %195 : vector<2x16xf32> to vector<2x1x16xf32>
    tpu.vector_store %arg4[%c0_57, %c3_58, %c0_59], %198 {strides = array<i32>} : memref<2x8x16xf32, #tpu.memory_space<vmem>>, vector<2x1x16xf32>,
    %199 = arith.select %2, %158, %150 : vector<2x16xi1>, vector<2x16xf32>
    %c0_60 = arith.constant 0 : index
    %c4_61 = arith.constant 4 : index
    %c0_62 = arith.constant 0 : index
    %200 = vector.load %arg4[%c0_60, %c4_61, %c0_62] : memref<2x8x16xf32, #tpu.memory_space<vmem>>, vector<2x1x16xf32>
    %201 = vector.shape_cast %200 : vector<2x1x16xf32> to vector<2x16xf32>
    %202 = vector.shape_cast %199 : vector<2x16xf32> to vector<2x1x16xf32>
    tpu.vector_store %arg4[%c0_60, %c4_61, %c0_62], %202 {strides = array<i32>} : memref<2x8x16xf32, #tpu.memory_space<vmem>>, vector<2x1x16xf32>,
    %203 = arith.select %2, %166, %142 : vector<2x16xi1>, vector<2x16xf32>
    %c0_63 = arith.constant 0 : index
    %c5_64 = arith.constant 5 : index
    %c0_65 = arith.constant 0 : index
    %204 = vector.load %arg4[%c0_63, %c5_64, %c0_65] : memref<2x8x16xf32, #tpu.memory_space<vmem>>, vector<2x1x16xf32>
    %205 = vector.shape_cast %204 : vector<2x1x16xf32> to vector<2x16xf32>
    %206 = vector.shape_cast %203 : vector<2x16xf32> to vector<2x1x16xf32>
    tpu.vector_store %arg4[%c0_63, %c5_64, %c0_65], %206 {strides = array<i32>} : memref<2x8x16xf32, #tpu.memory_space<vmem>>, vector<2x1x16xf32>,
    %207 = arith.select %2, %174, %134 : vector<2x16xi1>, vector<2x16xf32>
    %c0_66 = arith.constant 0 : index
    %c6_67 = arith.constant 6 : index
    %c0_68 = arith.constant 0 : index
    %208 = vector.load %arg4[%c0_66, %c6_67, %c0_68] : memref<2x8x16xf32, #tpu.memory_space<vmem>>, vector<2x1x16xf32>
    %209 = vector.shape_cast %208 : vector<2x1x16xf32> to vector<2x16xf32>
    %210 = vector.shape_cast %207 : vector<2x16xf32> to vector<2x1x16xf32>
    tpu.vector_store %arg4[%c0_66, %c6_67, %c0_68], %210 {strides = array<i32>} : memref<2x8x16xf32, #tpu.memory_space<vmem>>, vector<2x1x16xf32>,
    %211 = arith.select %2, %182, %126 : vector<2x16xi1>, vector<2x16xf32>
    %c0_69 = arith.constant 0 : index
    %c7_70 = arith.constant 7 : index
    %c0_71 = arith.constant 0 : index
    %212 = vector.load %arg4[%c0_69, %c7_70, %c0_71] : memref<2x8x16xf32, #tpu.memory_space<vmem>>, vector<2x1x16xf32>
    %213 = vector.shape_cast %212 : vector<2x1x16xf32> to vector<2x16xf32>
    %214 = vector.shape_cast %211 : vector<2x16xf32> to vector<2x1x16xf32>
    tpu.vector_store %arg4[%c0_69, %c7_70, %c0_71], %214 {strides = array<i32>} : memref<2x8x16xf32, #tpu.memory_space<vmem>>, vector<2x1x16xf32>,
    %c0_72 = arith.constant 0 : index
    %c0_73 = arith.constant 0 : index
    %c0_74 = arith.constant 0 : index
    %215 = vector.load %arg4[%c0_72, %c0_73, %c0_74] : memref<2x8x16xf32, #tpu.memory_space<vmem>>, vector<2x8x16xf32>
    %c66 = arith.constant 66 : index
    %c0_75 = arith.constant 0 : index
    %216 = vector.load %arg2[%c66, %c0_75] : memref<137x16xf32, #tpu.memory_space<vmem>>, vector<16x6xf32>
    %c82 = arith.constant 82 : index
    %c0_76 = arith.constant 0 : index
    %217 = vector.load %arg2[%c82, %c0_76] : memref<137x16xf32, #tpu.memory_space<vmem>>, vector<6x3xf32>
    %218 = vector.shape_cast %215 : vector<2x8x16xf32> to vector<16x16xf32>
    %cst_77 = arith.constant dense<0.000000e+00> : vector<16x6xf32>
    %219 = tpu.matmul %218, %216, %cst_77 {dimension_numbers = #tpu.dot_dimension_numbers<[1], [0], [0], [1], [0, 0, 1, 1], [], []>} : vector<16x16xf32>, vector<16x6xf32>, vector<16x6xf32> -> vector<16x6xf32>
    %220 = math.tanh %219 : vector<16x6xf32>
    %cst_78 = arith.constant dense<0.000000e+00> : vector<16x3xf32>
    %221 = tpu.matmul %220, %217, %cst_78 {dimension_numbers = #tpu.dot_dimension_numbers<[1], [0], [0], [1], [0, 0, 1, 1], [], []>} : vector<16x6xf32>, vector<6x3xf32>, vector<16x3xf32> -> vector<16x3xf32>
    %222 = vector.shape_cast %221 : vector<16x3xf32> to vector<2x8x3xf32>
    %223 = vector.extract_strided_slice %222 {offsets = [0, 0, 0], sizes = [2, 1, 3], strides = [1, 1, 1]} : vector<2x8x3xf32> to vector<2x1x3xf32>
    %224 = vector.shape_cast %223 : vector<2x1x3xf32> to vector<2x3xf32>
    %225 = vector.extract_strided_slice %222 {offsets = [0, 1, 0], sizes = [2, 1, 3], strides = [1, 1, 1]} : vector<2x8x3xf32> to vector<2x1x3xf32>
    %226 = vector.shape_cast %225 : vector<2x1x3xf32> to vector<2x3xf32>
    %227 = vector.extract_strided_slice %222 {offsets = [0, 2, 0], sizes = [2, 1, 3], strides = [1, 1, 1]} : vector<2x8x3xf32> to vector<2x1x3xf32>
    %228 = vector.shape_cast %227 : vector<2x1x3xf32> to vector<2x3xf32>
    %229 = vector.extract_strided_slice %222 {offsets = [0, 3, 0], sizes = [2, 1, 3], strides = [1, 1, 1]} : vector<2x8x3xf32> to vector<2x1x3xf32>
    %230 = vector.shape_cast %229 : vector<2x1x3xf32> to vector<2x3xf32>
    %231 = vector.extract_strided_slice %222 {offsets = [0, 4, 0], sizes = [2, 1, 3], strides = [1, 1, 1]} : vector<2x8x3xf32> to vector<2x1x3xf32>
    %232 = vector.shape_cast %231 : vector<2x1x3xf32> to vector<2x3xf32>
    %233 = vector.extract_strided_slice %222 {offsets = [0, 5, 0], sizes = [2, 1, 3], strides = [1, 1, 1]} : vector<2x8x3xf32> to vector<2x1x3xf32>
    %234 = vector.shape_cast %233 : vector<2x1x3xf32> to vector<2x3xf32>
    %235 = vector.extract_strided_slice %222 {offsets = [0, 6, 0], sizes = [2, 1, 3], strides = [1, 1, 1]} : vector<2x8x3xf32> to vector<2x1x3xf32>
    %236 = vector.shape_cast %235 : vector<2x1x3xf32> to vector<2x3xf32>
    %237 = vector.extract_strided_slice %222 {offsets = [0, 7, 0], sizes = [2, 1, 3], strides = [1, 1, 1]} : vector<2x8x3xf32> to vector<2x1x3xf32>
    %238 = vector.shape_cast %237 : vector<2x1x3xf32> to vector<2x3xf32>
    %239 = arith.maximumf %224, %226 : vector<2x3xf32>
    %240 = arith.maximumf %239, %228 : vector<2x3xf32>
    %241 = arith.maximumf %240, %230 : vector<2x3xf32>
    %242 = arith.maximumf %241, %232 : vector<2x3xf32>
    %243 = arith.maximumf %242, %234 : vector<2x3xf32>
    %244 = arith.maximumf %243, %236 : vector<2x3xf32>
    %245 = arith.maximumf %244, %238 : vector<2x3xf32>
    %246 = arith.subf %224, %245 : vector<2x3xf32>
    %247 = math.exp %246 : vector<2x3xf32>
    %248 = arith.subf %226, %245 : vector<2x3xf32>
    %249 = math.exp %248 : vector<2x3xf32>
    %250 = arith.subf %228, %245 : vector<2x3xf32>
    %251 = math.exp %250 : vector<2x3xf32>
    %252 = arith.subf %230, %245 : vector<2x3xf32>
    %253 = math.exp %252 : vector<2x3xf32>
    %254 = arith.subf %232, %245 : vector<2x3xf32>
    %255 = math.exp %254 : vector<2x3xf32>
    %256 = arith.subf %234, %245 : vector<2x3xf32>
    %257 = math.exp %256 : vector<2x3xf32>
    %258 = arith.subf %236, %245 : vector<2x3xf32>
    %259 = math.exp %258 : vector<2x3xf32>
    %260 = arith.subf %238, %245 : vector<2x3xf32>
    %261 = math.exp %260 : vector<2x3xf32>
    %262 = arith.addf %247, %249 : vector<2x3xf32>
    %263 = arith.addf %262, %251 : vector<2x3xf32>
    %264 = arith.addf %263, %253 : vector<2x3xf32>
    %265 = arith.addf %264, %255 : vector<2x3xf32>
    %266 = arith.addf %265, %257 : vector<2x3xf32>
    %267 = arith.addf %266, %259 : vector<2x3xf32>
    %268 = arith.addf %267, %261 : vector<2x3xf32>
    %cst_79 = arith.constant 1.000000e+00 : f32
    %269 = vector.broadcast %cst_79 : f32 to vector<2x3xf32>
    %270 = arith.divf %269, %268 : vector<2x3xf32>
    %c136 = arith.constant 136 : index
    %c0_80 = arith.constant 0 : index
    %271 = vector.load %arg2[%c136, %c0_80] : memref<137x16xf32, #tpu.memory_space<vmem>>, vector<1x5xf32>
    %272 = vector.extract_strided_slice %247 {offsets = [0, 0], sizes = [2, 1], strides = [1, 1]} : vector<2x3xf32> to vector<2x1xf32>
    %273 = vector.extract_strided_slice %215 {offsets = [0, 0, 0], sizes = [2, 1, 16], strides = [1, 1, 1]} : vector<2x8x16xf32> to vector<2x1x16xf32>
    %274 = vector.shape_cast %273 : vector<2x1x16xf32> to vector<2x16xf32>
    %275 = vector.broadcast %272 : vector<2x1xf32> to vector<2x16xf32>
    %276 = arith.mulf %275, %274 : vector<2x16xf32>
    %277 = vector.extract_strided_slice %249 {offsets = [0, 0], sizes = [2, 1], strides = [1, 1]} : vector<2x3xf32> to vector<2x1xf32>
    %278 = vector.extract_strided_slice %215 {offsets = [0, 1, 0], sizes = [2, 1, 16], strides = [1, 1, 1]} : vector<2x8x16xf32> to vector<2x1x16xf32>
    %279 = vector.shape_cast %278 : vector<2x1x16xf32> to vector<2x16xf32>
    %280 = vector.broadcast %277 : vector<2x1xf32> to vector<2x16xf32>
    %281 = arith.mulf %280, %279 : vector<2x16xf32>
    %282 = arith.addf %276, %281 : vector<2x16xf32>
    %283 = vector.extract_strided_slice %251 {offsets = [0, 0], sizes = [2, 1], strides = [1, 1]} : vector<2x3xf32> to vector<2x1xf32>
    %284 = vector.extract_strided_slice %215 {offsets = [0, 2, 0], sizes = [2, 1, 16], strides = [1, 1, 1]} : vector<2x8x16xf32> to vector<2x1x16xf32>
    %285 = vector.shape_cast %284 : vector<2x1x16xf32> to vector<2x16xf32>
    %286 = vector.broadcast %283 : vector<2x1xf32> to vector<2x16xf32>
    %287 = arith.mulf %286, %285 : vector<2x16xf32>
    %288 = arith.addf %282, %287 : vector<2x16xf32>
    %289 = vector.extract_strided_slice %253 {offsets = [0, 0], sizes = [2, 1], strides = [1, 1]} : vector<2x3xf32> to vector<2x1xf32>
    %290 = vector.extract_strided_slice %215 {offsets = [0, 3, 0], sizes = [2, 1, 16], strides = [1, 1, 1]} : vector<2x8x16xf32> to vector<2x1x16xf32>
    %291 = vector.shape_cast %290 : vector<2x1x16xf32> to vector<2x16xf32>
    %292 = vector.broadcast %289 : vector<2x1xf32> to vector<2x16xf32>
    %293 = arith.mulf %292, %291 : vector<2x16xf32>
    %294 = arith.addf %288, %293 : vector<2x16xf32>
    %295 = vector.extract_strided_slice %255 {offsets = [0, 0], sizes = [2, 1], strides = [1, 1]} : vector<2x3xf32> to vector<2x1xf32>
    %296 = vector.extract_strided_slice %215 {offsets = [0, 4, 0], sizes = [2, 1, 16], strides = [1, 1, 1]} : vector<2x8x16xf32> to vector<2x1x16xf32>
    %297 = vector.shape_cast %296 : vector<2x1x16xf32> to vector<2x16xf32>
    %298 = vector.broadcast %295 : vector<2x1xf32> to vector<2x16xf32>
    %299 = arith.mulf %298, %297 : vector<2x16xf32>
    %300 = arith.addf %294, %299 : vector<2x16xf32>
    %301 = vector.extract_strided_slice %257 {offsets = [0, 0], sizes = [2, 1], strides = [1, 1]} : vector<2x3xf32> to vector<2x1xf32>
    %302 = vector.extract_strided_slice %215 {offsets = [0, 5, 0], sizes = [2, 1, 16], strides = [1, 1, 1]} : vector<2x8x16xf32> to vector<2x1x16xf32>
    %303 = vector.shape_cast %302 : vector<2x1x16xf32> to vector<2x16xf32>
    %304 = vector.broadcast %301 : vector<2x1xf32> to vector<2x16xf32>
    %305 = arith.mulf %304, %303 : vector<2x16xf32>
    %306 = arith.addf %300, %305 : vector<2x16xf32>
    %307 = vector.extract_strided_slice %259 {offsets = [0, 0], sizes = [2, 1], strides = [1, 1]} : vector<2x3xf32> to vector<2x1xf32>
    %308 = vector.extract_strided_slice %215 {offsets = [0, 6, 0], sizes = [2, 1, 16], strides = [1, 1, 1]} : vector<2x8x16xf32> to vector<2x1x16xf32>
    %309 = vector.shape_cast %308 : vector<2x1x16xf32> to vector<2x16xf32>
    %310 = vector.broadcast %307 : vector<2x1xf32> to vector<2x16xf32>
    %311 = arith.mulf %310, %309 : vector<2x16xf32>
    %312 = arith.addf %306, %311 : vector<2x16xf32>
    %313 = vector.extract_strided_slice %261 {offsets = [0, 0], sizes = [2, 1], strides = [1, 1]} : vector<2x3xf32> to vector<2x1xf32>
    %314 = vector.extract_strided_slice %215 {offsets = [0, 7, 0], sizes = [2, 1, 16], strides = [1, 1, 1]} : vector<2x8x16xf32> to vector<2x1x16xf32>
    %315 = vector.shape_cast %314 : vector<2x1x16xf32> to vector<2x16xf32>
    %316 = vector.broadcast %313 : vector<2x1xf32> to vector<2x16xf32>
    %317 = arith.mulf %316, %315 : vector<2x16xf32>
    %318 = arith.addf %312, %317 : vector<2x16xf32>
    %319 = vector.extract_strided_slice %270 {offsets = [0, 0], sizes = [2, 1], strides = [1, 1]} : vector<2x3xf32> to vector<2x1xf32>
    %320 = vector.broadcast %319 : vector<2x1xf32> to vector<2x16xf32>
    %321 = arith.mulf %320, %318 : vector<2x16xf32>
    %c88 = arith.constant 88 : index
    %c0_81 = arith.constant 0 : index
    %322 = vector.load %arg2[%c88, %c0_81] : memref<137x16xf32, #tpu.memory_space<vmem>>, vector<16x5xf32>
    %cst_82 = arith.constant dense<0.000000e+00> : vector<2x5xf32>
    %323 = tpu.matmul %321, %322, %cst_82 {dimension_numbers = #tpu.dot_dimension_numbers<[1], [0], [0], [1], [0, 0, 1, 1], [], []>} : vector<2x16xf32>, vector<16x5xf32>, vector<2x5xf32> -> vector<2x5xf32>
    %324 = vector.extract_strided_slice %247 {offsets = [0, 1], sizes = [2, 1], strides = [1, 1]} : vector<2x3xf32> to vector<2x1xf32>
    %325 = vector.extract_strided_slice %215 {offsets = [0, 0, 0], sizes = [2, 1, 16], strides = [1, 1, 1]} : vector<2x8x16xf32> to vector<2x1x16xf32>
    %326 = vector.shape_cast %325 : vector<2x1x16xf32> to vector<2x16xf32>
    %327 = vector.broadcast %324 : vector<2x1xf32> to vector<2x16xf32>
    %328 = arith.mulf %327, %326 : vector<2x16xf32>
    %329 = vector.extract_strided_slice %249 {offsets = [0, 1], sizes = [2, 1], strides = [1, 1]} : vector<2x3xf32> to vector<2x1xf32>
    %330 = vector.extract_strided_slice %215 {offsets = [0, 1, 0], sizes = [2, 1, 16], strides = [1, 1, 1]} : vector<2x8x16xf32> to vector<2x1x16xf32>
    %331 = vector.shape_cast %330 : vector<2x1x16xf32> to vector<2x16xf32>
    %332 = vector.broadcast %329 : vector<2x1xf32> to vector<2x16xf32>
    %333 = arith.mulf %332, %331 : vector<2x16xf32>
    %334 = arith.addf %328, %333 : vector<2x16xf32>
    %335 = vector.extract_strided_slice %251 {offsets = [0, 1], sizes = [2, 1], strides = [1, 1]} : vector<2x3xf32> to vector<2x1xf32>
    %336 = vector.extract_strided_slice %215 {offsets = [0, 2, 0], sizes = [2, 1, 16], strides = [1, 1, 1]} : vector<2x8x16xf32> to vector<2x1x16xf32>
    %337 = vector.shape_cast %336 : vector<2x1x16xf32> to vector<2x16xf32>
    %338 = vector.broadcast %335 : vector<2x1xf32> to vector<2x16xf32>
    %339 = arith.mulf %338, %337 : vector<2x16xf32>
    %340 = arith.addf %334, %339 : vector<2x16xf32>
    %341 = vector.extract_strided_slice %253 {offsets = [0, 1], sizes = [2, 1], strides = [1, 1]} : vector<2x3xf32> to vector<2x1xf32>
    %342 = vector.extract_strided_slice %215 {offsets = [0, 3, 0], sizes = [2, 1, 16], strides = [1, 1, 1]} : vector<2x8x16xf32> to vector<2x1x16xf32>
    %343 = vector.shape_cast %342 : vector<2x1x16xf32> to vector<2x16xf32>
    %344 = vector.broadcast %341 : vector<2x1xf32> to vector<2x16xf32>
    %345 = arith.mulf %344, %343 : vector<2x16xf32>
    %346 = arith.addf %340, %345 : vector<2x16xf32>
    %347 = vector.extract_strided_slice %255 {offsets = [0, 1], sizes = [2, 1], strides = [1, 1]} : vector<2x3xf32> to vector<2x1xf32>
    %348 = vector.extract_strided_slice %215 {offsets = [0, 4, 0], sizes = [2, 1, 16], strides = [1, 1, 1]} : vector<2x8x16xf32> to vector<2x1x16xf32>
    %349 = vector.shape_cast %348 : vector<2x1x16xf32> to vector<2x16xf32>
    %350 = vector.broadcast %347 : vector<2x1xf32> to vector<2x16xf32>
    %351 = arith.mulf %350, %349 : vector<2x16xf32>
    %352 = arith.addf %346, %351 : vector<2x16xf32>
    %353 = vector.extract_strided_slice %257 {offsets = [0, 1], sizes = [2, 1], strides = [1, 1]} : vector<2x3xf32> to vector<2x1xf32>
    %354 = vector.extract_strided_slice %215 {offsets = [0, 5, 0], sizes = [2, 1, 16], strides = [1, 1, 1]} : vector<2x8x16xf32> to vector<2x1x16xf32>
    %355 = vector.shape_cast %354 : vector<2x1x16xf32> to vector<2x16xf32>
    %356 = vector.broadcast %353 : vector<2x1xf32> to vector<2x16xf32>
    %357 = arith.mulf %356, %355 : vector<2x16xf32>
    %358 = arith.addf %352, %357 : vector<2x16xf32>
    %359 = vector.extract_strided_slice %259 {offsets = [0, 1], sizes = [2, 1], strides = [1, 1]} : vector<2x3xf32> to vector<2x1xf32>
    %360 = vector.extract_strided_slice %215 {offsets = [0, 6, 0], sizes = [2, 1, 16], strides = [1, 1, 1]} : vector<2x8x16xf32> to vector<2x1x16xf32>
    %361 = vector.shape_cast %360 : vector<2x1x16xf32> to vector<2x16xf32>
    %362 = vector.broadcast %359 : vector<2x1xf32> to vector<2x16xf32>
    %363 = arith.mulf %362, %361 : vector<2x16xf32>
    %364 = arith.addf %358, %363 : vector<2x16xf32>
    %365 = vector.extract_strided_slice %261 {offsets = [0, 1], sizes = [2, 1], strides = [1, 1]} : vector<2x3xf32> to vector<2x1xf32>
    %366 = vector.extract_strided_slice %215 {offsets = [0, 7, 0], sizes = [2, 1, 16], strides = [1, 1, 1]} : vector<2x8x16xf32> to vector<2x1x16xf32>
    %367 = vector.shape_cast %366 : vector<2x1x16xf32> to vector<2x16xf32>
    %368 = vector.broadcast %365 : vector<2x1xf32> to vector<2x16xf32>
    %369 = arith.mulf %368, %367 : vector<2x16xf32>
    %370 = arith.addf %364, %369 : vector<2x16xf32>
    %371 = vector.extract_strided_slice %270 {offsets = [0, 1], sizes = [2, 1], strides = [1, 1]} : vector<2x3xf32> to vector<2x1xf32>
    %372 = vector.broadcast %371 : vector<2x1xf32> to vector<2x16xf32>
    %373 = arith.mulf %372, %370 : vector<2x16xf32>
    %c104 = arith.constant 104 : index
    %c0_83 = arith.constant 0 : index
    %374 = vector.load %arg2[%c104, %c0_83] : memref<137x16xf32, #tpu.memory_space<vmem>>, vector<16x5xf32>
    %cst_84 = arith.constant dense<0.000000e+00> : vector<2x5xf32>
    %375 = tpu.matmul %373, %374, %cst_84 {dimension_numbers = #tpu.dot_dimension_numbers<[1], [0], [0], [1], [0, 0, 1, 1], [], []>} : vector<2x16xf32>, vector<16x5xf32>, vector<2x5xf32> -> vector<2x5xf32>
    %376 = arith.addf %323, %375 : vector<2x5xf32>
    %377 = vector.extract_strided_slice %247 {offsets = [0, 2], sizes = [2, 1], strides = [1, 1]} : vector<2x3xf32> to vector<2x1xf32>
    %378 = vector.extract_strided_slice %215 {offsets = [0, 0, 0], sizes = [2, 1, 16], strides = [1, 1, 1]} : vector<2x8x16xf32> to vector<2x1x16xf32>
    %379 = vector.shape_cast %378 : vector<2x1x16xf32> to vector<2x16xf32>
    %380 = vector.broadcast %377 : vector<2x1xf32> to vector<2x16xf32>
    %381 = arith.mulf %380, %379 : vector<2x16xf32>
    %382 = vector.extract_strided_slice %249 {offsets = [0, 2], sizes = [2, 1], strides = [1, 1]} : vector<2x3xf32> to vector<2x1xf32>
    %383 = vector.extract_strided_slice %215 {offsets = [0, 1, 0], sizes = [2, 1, 16], strides = [1, 1, 1]} : vector<2x8x16xf32> to vector<2x1x16xf32>
    %384 = vector.shape_cast %383 : vector<2x1x16xf32> to vector<2x16xf32>
    %385 = vector.broadcast %382 : vector<2x1xf32> to vector<2x16xf32>
    %386 = arith.mulf %385, %384 : vector<2x16xf32>
    %387 = arith.addf %381, %386 : vector<2x16xf32>
    %388 = vector.extract_strided_slice %251 {offsets = [0, 2], sizes = [2, 1], strides = [1, 1]} : vector<2x3xf32> to vector<2x1xf32>
    %389 = vector.extract_strided_slice %215 {offsets = [0, 2, 0], sizes = [2, 1, 16], strides = [1, 1, 1]} : vector<2x8x16xf32> to vector<2x1x16xf32>
    %390 = vector.shape_cast %389 : vector<2x1x16xf32> to vector<2x16xf32>
    %391 = vector.broadcast %388 : vector<2x1xf32> to vector<2x16xf32>
    %392 = arith.mulf %391, %390 : vector<2x16xf32>
    %393 = arith.addf %387, %392 : vector<2x16xf32>
    %394 = vector.extract_strided_slice %253 {offsets = [0, 2], sizes = [2, 1], strides = [1, 1]} : vector<2x3xf32> to vector<2x1xf32>
    %395 = vector.extract_strided_slice %215 {offsets = [0, 3, 0], sizes = [2, 1, 16], strides = [1, 1, 1]} : vector<2x8x16xf32> to vector<2x1x16xf32>
    %396 = vector.shape_cast %395 : vector<2x1x16xf32> to vector<2x16xf32>
    %397 = vector.broadcast %394 : vector<2x1xf32> to vector<2x16xf32>
    %398 = arith.mulf %397, %396 : vector<2x16xf32>
    %399 = arith.addf %393, %398 : vector<2x16xf32>
    %400 = vector.extract_strided_slice %255 {offsets = [0, 2], sizes = [2, 1], strides = [1, 1]} : vector<2x3xf32> to vector<2x1xf32>
    %401 = vector.extract_strided_slice %215 {offsets = [0, 4, 0], sizes = [2, 1, 16], strides = [1, 1, 1]} : vector<2x8x16xf32> to vector<2x1x16xf32>
    %402 = vector.shape_cast %401 : vector<2x1x16xf32> to vector<2x16xf32>
    %403 = vector.broadcast %400 : vector<2x1xf32> to vector<2x16xf32>
    %404 = arith.mulf %403, %402 : vector<2x16xf32>
    %405 = arith.addf %399, %404 : vector<2x16xf32>
    %406 = vector.extract_strided_slice %257 {offsets = [0, 2], sizes = [2, 1], strides = [1, 1]} : vector<2x3xf32> to vector<2x1xf32>
    %407 = vector.extract_strided_slice %215 {offsets = [0, 5, 0], sizes = [2, 1, 16], strides = [1, 1, 1]} : vector<2x8x16xf32> to vector<2x1x16xf32>
    %408 = vector.shape_cast %407 : vector<2x1x16xf32> to vector<2x16xf32>
    %409 = vector.broadcast %406 : vector<2x1xf32> to vector<2x16xf32>
    %410 = arith.mulf %409, %408 : vector<2x16xf32>
    %411 = arith.addf %405, %410 : vector<2x16xf32>
    %412 = vector.extract_strided_slice %259 {offsets = [0, 2], sizes = [2, 1], strides = [1, 1]} : vector<2x3xf32> to vector<2x1xf32>
    %413 = vector.extract_strided_slice %215 {offsets = [0, 6, 0], sizes = [2, 1, 16], strides = [1, 1, 1]} : vector<2x8x16xf32> to vector<2x1x16xf32>
    %414 = vector.shape_cast %413 : vector<2x1x16xf32> to vector<2x16xf32>
    %415 = vector.broadcast %412 : vector<2x1xf32> to vector<2x16xf32>
    %416 = arith.mulf %415, %414 : vector<2x16xf32>
    %417 = arith.addf %411, %416 : vector<2x16xf32>
    %418 = vector.extract_strided_slice %261 {offsets = [0, 2], sizes = [2, 1], strides = [1, 1]} : vector<2x3xf32> to vector<2x1xf32>
    %419 = vector.extract_strided_slice %215 {offsets = [0, 7, 0], sizes = [2, 1, 16], strides = [1, 1, 1]} : vector<2x8x16xf32> to vector<2x1x16xf32>
    %420 = vector.shape_cast %419 : vector<2x1x16xf32> to vector<2x16xf32>
    %421 = vector.broadcast %418 : vector<2x1xf32> to vector<2x16xf32>
    %422 = arith.mulf %421, %420 : vector<2x16xf32>
    %423 = arith.addf %417, %422 : vector<2x16xf32>
    %424 = vector.extract_strided_slice %270 {offsets = [0, 2], sizes = [2, 1], strides = [1, 1]} : vector<2x3xf32> to vector<2x1xf32>
    %425 = vector.broadcast %424 : vector<2x1xf32> to vector<2x16xf32>
    %426 = arith.mulf %425, %423 : vector<2x16xf32>
    %c120 = arith.constant 120 : index
    %c0_85 = arith.constant 0 : index
    %427 = vector.load %arg2[%c120, %c0_85] : memref<137x16xf32, #tpu.memory_space<vmem>>, vector<16x5xf32>
    %cst_86 = arith.constant dense<0.000000e+00> : vector<2x5xf32>
    %428 = tpu.matmul %426, %427, %cst_86 {dimension_numbers = #tpu.dot_dimension_numbers<[1], [0], [0], [1], [0, 0, 1, 1], [], []>} : vector<2x16xf32>, vector<16x5xf32>, vector<2x5xf32> -> vector<2x5xf32>
    %429 = arith.addf %376, %428 : vector<2x5xf32>
    %430 = vector.broadcast %271 : vector<1x5xf32> to vector<2x5xf32>
    %431 = arith.addf %429, %430 : vector<2x5xf32>
    %c0_87 = arith.constant 0 : index
    %c0_88 = arith.constant 0 : index
    %432 = vector.load %arg3[%c0_87, %c0_88] : memref<2x5xf32, #tpu.memory_space<vmem>>, vector<2x5xf32>
    tpu.vector_store %arg3[%c0_87, %c0_88], %431 {strides = array<i32>} : memref<2x5xf32, #tpu.memory_space<vmem>>, vector<2x5xf32>,
    return
  }
  func.func @transform_0(%arg0: i32) -> (i32, i32, i32) {
    %c0_i32 = arith.constant 0 : i32
    %c0_i32_0 = arith.constant 0 : i32
    %c0_i32_1 = arith.constant 0 : i32
    return %arg0, %c0_i32, %c0_i32_0 : i32, i32, i32
  }
  func.func @transform_1(%arg0: i32) -> (i32, i32) {
    %c0_i32 = arith.constant 0 : i32
    %c0_i32_0 = arith.constant 0 : i32
    %c0_i32_1 = arith.constant 0 : i32
    return %c0_i32, %c0_i32_0 : i32, i32
  }
  func.func @transform_2(%arg0: i32) -> (i32, i32) {
    %c0_i32 = arith.constant 0 : i32
    %c0_i32_0 = arith.constant 0 : i32
    return %arg0, %c0_i32 : i32, i32
  }
}

</mosaic_0001>

<llo_original>
// kernel: tpu_custom_call.1
$region0: #{tpu_custom_call.1}
  #allocation0 [shape = 'u32[]', space=smem, size = 0x4, offset = 0x4, fixed_abs, tag = 'smem constant byte address 0x4 - core index']
  #allocation1 [shape = 'u32[144,128]{1,0:T(1,128)}', space=vmem, size = 0x12000, scoped, tag = 'internal scratch']
  #allocation2 [shape = 'f32[2,8,16]{2,1,0:T(8,128)}', space=vmem, size = 0x2000, scoped, tag = 'scratch operand']
  %s0 = inlined_call_operand.vmem [shape: f32[2,8,4], index: 0, kind: input, shape index: {}]
  %s1 = inlined_call_operand.vmem [shape: f32[137,16], index: 1, kind: input, shape index: {}]
  %s2 = inlined_call_operand.hbm [shape: f32[2,5], index: 2, kind: output, shape index: {}]
  %s3 = sld [smem:[#allocation0]]
  $region18: #{tpu_custom_call.1} parent=0
    _
  %s5 = ssub.s32 1, %s3
  %s6 = scalar_select 0, %s5, %s3
  $region1: #{tpu_custom_call.1} parent=0
    #allocation3 [shape = 'u8[1024]{0}', space=vmem, size = 0x400, scoped, tag = 'output window, operand 0, single buffered']
    #allocation4 [shape = 's32[1]{0}', space=sflag, size = 0x4, scoped, tag = 'scoped memory for tpu_custom_call.1']
    %7 = vsyncpa [#allocation4], 0
    // Predicated region
    $region2: #{tpu_custom_call.1} parent=1 // pred_check
      _
    $region3: #{tpu_custom_call.1} parent=1 // pred_check_branch
      %9 = sbr.rel (0) target = $region5
    $region4: #{tpu_custom_call.1} parent=1 // pred_region
      _
    $region5: #{tpu_custom_call.1} parent=1 // pred_fallthru
      _
    // Predicated region
    $region6: #{tpu_custom_call.1} parent=1 // pred_check
      _
    $region7: #{tpu_custom_call.1} parent=1 // pred_check_branch
      %11 = sbr.rel (0) target = $region9
    $region8: #{tpu_custom_call.1} parent=1 // pred_region
      _
    $region9: #{tpu_custom_call.1} parent=1 // pred_fallthru
      _
    %v12 = vlaneseq
    %v13 = vand.u32 %v12, 127
    %vm14 = vcmp.lt.s32.totalorder %v13, 8
    %v15 = vld [vmem:[%s0] sm:$0xff]
    %v16 = vld [vmem:[%s0 + $0x8] sm:$0xff]
    %v17 = vld [vmem:[%s1] sm:$0xf]
    %v18 = vld [vmem:[%s1 + $0x10] sm:$0xff]
    %v19 = vld [vmem:[%s1 + $0x18] sm:$0xff]
    %v20 = vld [vmem:[%s1 + $0x20] sm:$0x1]
    %v21 = vlaneseq
    %v22 = vshrl.u32 %v21, 7
    %v23 = vsub.s32 0, %v22
    %v24 = vrot.slane %v20, %v23
    %vm25 = vcmask 31744
    %v27 = vsel %vm25, %v15, 0
    %v30 = vsel %vm25, %v16, 0
    %vm32 = vcmask 1043456
    %v34 = vsel %vm32, %v17, 0
    %36 = vmatprep.subr.mxu0 0.0
    %37 = vmatpush1.msra.mxu0 %v34
    %38 = vmatprep.subr.mxu0 0.0
    %39 = vmatpush1.msra.mxu0 0.0
    %40 = vmatprep.subr.mxu0 0.0
    %41 = vmatpush1.msra.mxu0 0.0
    %42 = vmatprep.subr.mxu0 0.0
    %43 = vmatpush1.msra.mxu0 0.0
    %44 = vmatprep.subr.mxu0 0.0
    %45 = vmatpush1.msra.mxu0 0.0
    %46 = vmatprep.subr.mxu0 0.0
    %47 = vmatpush1.msra.mxu0 0.0
    %48 = vmatprep.subr.mxu0 0.0
    %49 = vmatpush1.msra.mxu0 0.0
    %50 = vmatprep.subr.mxu0 0.0
    %51 = vmatpush1.msra.mxu0 0.0
    %52 = vmatprep.subr.mxu0 0.0
    %53 = vmatpush1.msra.mxu0 0.0
    %54 = vmatprep.subr.mxu0 0.0
    %55 = vmatpush1.msra.mxu0 0.0
    %56 = vmatprep.subr.mxu0 0.0
    %57 = vmatpush1.msra.mxu0 0.0
    %58 = vmatprep.subr.mxu0 0.0
    %59 = vmatpush1.msra.mxu0 0.0
    %60 = vmatprep.subr.mxu0 0.0
    %61 = vmatpush1.msra.mxu0 0.0
    %62 = vmatprep.subr.mxu0 0.0
    %63 = vmatpush1.msra.mxu0 0.0
    %64 = vmatprep.subr.mxu0 0.0
    %65 = vmatpush1.msra.mxu0 0.0
    %66 = vmatprep.subr.mxu0 0.0
    %67 = vmatpush1.msra.mxu0 0.0
    %68 = vmatprep.subr.mxu0 0.0
    %69 = vmatpush1.msra.mxu0 0.0
    %70 = vmatprep.subr.mxu0 0.0
    %71 = vmatpush1.msra.mxu0 0.0
    %72 = vmatprep.subr.mxu0 0.0
    %73 = vmatpush1.msra.mxu0 0.0
    %74 = vmatprep.subr.mxu0 0.0
    %75 = vmatpush1.msra.mxu0 0.0
    %76 = vmatprep.subr.mxu0 0.0
    %77 = vmatpush1.msra.mxu0 0.0
    %78 = vmatprep.subr.mxu0 0.0
    %79 = vmatpush1.msra.mxu0 0.0
    %80 = vmatprep.subr.mxu0 0.0
    %81 = vmatpush1.msra.mxu0 0.0
    %82 = vmatprep.subr.mxu0 0.0
    %83 = vmatpush1.msra.mxu0 0.0
    %84 = vmatprep.subr.mxu0 0.0
    %85 = vmatpush1.msra.mxu0 0.0
    %86 = vmatprep.subr.mxu0 0.0
    %87 = vmatpush1.msra.mxu0 0.0
    %88 = vmatprep.subr.mxu0 0.0
    %89 = vmatpush1.msra.mxu0 0.0
    %90 = vmatprep.subr.mxu0 0.0
    %91 = vmatpush1.msra.mxu0 0.0
    %92 = vmatprep.subr.mxu0 0.0
    %93 = vmatpush1.msra.mxu0 0.0
    %94 = vmatprep.subr.mxu0 0.0
    %95 = vmatpush1.msra.mxu0 0.0
    %96 = vmatprep.subr.mxu0 0.0
    %97 = vmatpush1.msra.mxu0 0.0
    %98 = vmatprep.subr.mxu0 0.0
    %99 = vmatpush1.msra.mxu0 0.0
    %100 = vmatprep.mubr.f32.mxu0 0.0
    %101 = vmatmul.mubr.f32.gmra.mrb[0].mxu0 %v27
    %v102 = vpop.f32.mrb[0].mxu0
    %v103 = vadd.f32 %v24, %v102
    %v104 = vpop.f32.mrb[0].mxu0
    %105 = vmatprep.mubr.f32.mxu0 0.0
    %106 = vmatmul.mubr.f32.gmra.mrb[0].mxu0 %v30
    %v107 = vpop.f32.mrb[0].mxu0
    %v108 = vadd.f32 %v24, %v107
    %v109 = vpop.f32.mrb[0].mxu0
    %110 = vdwg.mxu0
    %v113 = vrot.slane %v108, 7
    %vm114 = vcmask 1041409
    %v115 = vsel %vm114, %v113, %v103
    %v117 = vrot.slane %v103, 7
    %v118 = vrot.slane %v108, 6
    %v119 = vsel %vm114, %v118, %v117
    %v121 = vsel %vm14, %v115, %v119
    %vm122 = vcmask 130048
    %v124 = vsel %vm122, 0.0, 0
    %126 = vmatprep.subr.mxu0 0.0
    %127 = vmatpush1.msra.mxu0 %v18
    %128 = vmatprep.subr.mxu0 0.0
    %129 = vmatpush1.msra.mxu0 %v19
    %130 = vmatprep.subr.mxu0 0.0
    %131 = vmatpush1.msra.mxu0 0.0
    %132 = vmatprep.subr.mxu0 0.0
    %133 = vmatpush1.msra.mxu0 0.0
    %134 = vmatprep.subr.mxu0 0.0
    %135 = vmatpush1.msra.mxu0 0.0
    %136 = vmatprep.subr.mxu0 0.0
    %137 = vmatpush1.msra.mxu0 0.0
    %138 = vmatprep.subr.mxu0 0.0
    %139 = vmatpush1.msra.mxu0 0.0
    %140 = vmatprep.subr.mxu0 0.0
    %141 = vmatpush1.msra.mxu0 0.0
    %142 = vmatprep.subr.mxu0 0.0
    %143 = vmatpush1.msra.mxu0 0.0
    %144 = vmatprep.subr.mxu0 0.0
    %145 = vmatpush1.msra.mxu0 0.0
    %146 = vmatprep.subr.mxu0 0.0
    %147 = vmatpush1.msra.mxu0 0.0
    %148 = vmatprep.subr.mxu0 0.0
    %149 = vmatpush1.msra.mxu0 0.0
    %150 = vmatprep.subr.mxu0 0.0
    %151 = vmatpush1.msra.mxu0 0.0
    %152 = vmatprep.subr.mxu0 0.0
    %153 = vmatpush1.msra.mxu0 0.0
    %154 = vmatprep.subr.mxu0 0.0
    %155 = vmatpush1.msra.mxu0 0.0
    %156 = vmatprep.subr.mxu0 0.0
    %157 = vmatpush1.msra.mxu0 0.0
    %158 = vmatprep.subr.mxu0 0.0
    %159 = vmatpush1.msra.mxu0 0.0
    %160 = vmatprep.subr.mxu0 0.0
    %161 = vmatpush1.msra.mxu0 0.0
    %162 = vmatprep.subr.mxu0 0.0
    %163 = vmatpush1.msra.mxu0 0.0
    %164 = vmatprep.subr.mxu0 0.0
    %165 = vmatpush1.msra.mxu0 0.0
    %166 = vmatprep.subr.mxu0 0.0
    %167 = vmatpush1.msra.mxu0 0.0
    %168 = vmatprep.subr.mxu0 0.0
    %169 = vmatpush1.msra.mxu0 0.0
    %170 = vmatprep.subr.mxu0 0.0
    %171 = vmatpush1.msra.mxu0 0.0
    %172 = vmatprep.subr.mxu0 0.0
    %173 = vmatpush1.msra.mxu0 0.0
    %174 = vmatprep.subr.mxu0 0.0
    %175 = vmatpush1.msra.mxu0 0.0
    %176 = vmatprep.subr.mxu0 0.0
    %177 = vmatpush1.msra.mxu0 0.0
    %178 = vmatprep.subr.mxu0 0.0
    %179 = vmatpush1.msra.mxu0 0.0
    %180 = vmatprep.subr.mxu0 0.0
    %181 = vmatpush1.msra.mxu0 0.0
    %182 = vmatprep.subr.mxu0 0.0
    %183 = vmatpush1.msra.mxu0 0.0
    %184 = vmatprep.subr.mxu0 0.0
    %185 = vmatpush1.msra.mxu0 0.0
    %186 = vmatprep.subr.mxu0 0.0
    %187 = vmatpush1.msra.mxu0 0.0
    %188 = vmatprep.subr.mxu0 0.0
    %189 = vmatpush1.msra.mxu0 0.0
    %190 = vmatprep.mubr.f32.mxu0 0.0
    %191 = vmatmul.mubr.f32.gmra.mrb[0].mxu0 %v124
    %v192 = vpop.f32.mrb[0].mxu0
    %v193 = vadd.f32 0.0, %v192
    %v194 = vpop.f32.mrb[0].mxu0
    %195 = vdwg.mxu0
    %v196 = vadd.f32 %v121, %v193
    %v197 = vtanh.pop %v196
    %v198 = vrot.slane %v103, 1
    %v199 = vsel %vm114, %v108, %v198
    %v201 = vrot.slane %v103, 6
    %v202 = vrot.slane %v108, 5
    %v203 = vsel %vm114, %v202, %v201
    %v205 = vsel %vm14, %v199, %v203
    %v207 = vsel %vm122, %v197, 0
    %209 = vmatprep.subr.mxu0 0.0
    %210 = vmatpush1.msra.mxu0 %v18
    %211 = vmatprep.subr.mxu0 0.0
    %212 = vmatpush1.msra.mxu0 %v19
    %213 = vmatprep.subr.mxu0 0.0
    %214 = vmatpush1.msra.mxu0 0.0
    %215 = vmatprep.subr.mxu0 0.0
    %216 = vmatpush1.msra.mxu0 0.0
    %217 = vmatprep.subr.mxu0 0.0
    %218 = vmatpush1.msra.mxu0 0.0
    %219 = vmatprep.subr.mxu0 0.0
    %220 = vmatpush1.msra.mxu0 0.0
    %221 = vmatprep.subr.mxu0 0.0
    %222 = vmatpush1.msra.mxu0 0.0
    %223 = vmatprep.subr.mxu0 0.0
    %224 = vmatpush1.msra.mxu0 0.0
    %225 = vmatprep.subr.mxu0 0.0
    %226 = vmatpush1.msra.mxu0 0.0
    %227 = vmatprep.subr.mxu0 0.0
    %228 = vmatpush1.msra.mxu0 0.0
    %229 = vmatprep.subr.mxu0 0.0
    %230 = vmatpush1.msra.mxu0 0.0
    %231 = vmatprep.subr.mxu0 0.0
    %232 = vmatpush1.msra.mxu0 0.0
    %233 = vmatprep.subr.mxu0 0.0
    %234 = vmatpush1.msra.mxu0 0.0
    %235 = vmatprep.subr.mxu0 0.0
    %236 = vmatpush1.msra.mxu0 0.0
    %237 = vmatprep.subr.mxu0 0.0
    %238 = vmatpush1.msra.mxu0 0.0
    %239 = vmatprep.subr.mxu0 0.0
    %240 = vmatpush1.msra.mxu0 0.0
    %241 = vmatprep.subr.mxu0 0.0
    %242 = vmatpush1.msra.mxu0 0.0
    %243 = vmatprep.subr.mxu0 0.0
    %244 = vmatpush1.msra.mxu0 0.0
    %245 = vmatprep.subr.mxu0 0.0
    %246 = vmatpush1.msra.mxu0 0.0
    %247 = vmatprep.subr.mxu0 0.0
    %248 = vmatpush1.msra.mxu0 0.0
    %249 = vmatprep.subr.mxu0 0.0
    %250 = vmatpush1.msra.mxu0 0.0
    %251 = vmatprep.subr.mxu0 0.0
    %252 = vmatpush1.msra.mxu0 0.0
    %253 = vmatprep.subr.mxu0 0.0
    %254 = vmatpush1.msra.mxu0 0.0
    %255 = vmatprep.subr.mxu0 0.0
    %256 = vmatpush1.msra.mxu0 0.0
    %257 = vmatprep.subr.mxu0 0.0
    %258 = vmatpush1.msra.mxu0 0.0
    %259 = vmatprep.subr.mxu0 0.0
    %260 = vmatpush1.msra.mxu0 0.0
    %261 = vmatprep.subr.mxu0 0.0
    %262 = vmatpush1.msra.mxu0 0.0
    %263 = vmatprep.subr.mxu0 0.0
    %264 = vmatpush1.msra.mxu0 0.0
    %265 = vmatprep.subr.mxu0 0.0
    %266 = vmatpush1.msra.mxu0 0.0
    %267 = vmatprep.subr.mxu0 0.0
    %268 = vmatpush1.msra.mxu0 0.0
    %269 = vmatprep.subr.mxu0 0.0
    %270 = vmatpush1.msra.mxu0 0.0
    %271 = vmatprep.subr.mxu0 0.0
    %272 = vmatpush1.msra.mxu0 0.0
    %273 = vmatprep.mubr.f32.mxu0 0.0
    %274 = vmatmul.mubr.f32.gmra.mrb[0].mxu0 %v207
    %v275 = vpop.f32.mrb[0].mxu0
    %v276 = vadd.f32 0.0, %v275
    %v277 = vpop.f32.mrb[0].mxu0
    %278 = vdwg.mxu0
    %v279 = vadd.f32 %v205, %v276
    %v280 = vtanh.pop %v279
    %v281 = vrot.slane %v103, 2
    %v282 = vrot.slane %v108, 1
    %v283 = vsel %vm114, %v282, %v281
    %v285 = vrot.slane %v103, 5
    %v286 = vrot.slane %v108, 4
    %v287 = vsel %vm114, %v286, %v285
    %v289 = vsel %vm14, %v283, %v287
    %v291 = vsel %vm122, %v280, 0
    %293 = vmatprep.subr.mxu0 0.0
    %294 = vmatpush1.msra.mxu0 %v18
    %295 = vmatprep.subr.mxu0 0.0
    %296 = vmatpush1.msra.mxu0 %v19
    %297 = vmatprep.subr.mxu0 0.0
    %298 = vmatpush1.msra.mxu0 0.0
    %299 = vmatprep.subr.mxu0 0.0
    %300 = vmatpush1.msra.mxu0 0.0
    %301 = vmatprep.subr.mxu0 0.0
    %302 = vmatpush1.msra.mxu0 0.0
    %303 = vmatprep.subr.mxu0 0.0
    %304 = vmatpush1.msra.mxu0 0.0
    %305 = vmatprep.subr.mxu0 0.0
    %306 = vmatpush1.msra.mxu0 0.0
    %307 = vmatprep.subr.mxu0 0.0
    %308 = vmatpush1.msra.mxu0 0.0
    %309 = vmatprep.subr.mxu0 0.0
    %310 = vmatpush1.msra.mxu0 0.0
    %311 = vmatprep.subr.mxu0 0.0
    %312 = vmatpush1.msra.mxu0 0.0
    %313 = vmatprep.subr.mxu0 0.0
    %314 = vmatpush1.msra.mxu0 0.0
    %315 = vmatprep.subr.mxu0 0.0
    %316 = vmatpush1.msra.mxu0 0.0
    %317 = vmatprep.subr.mxu0 0.0
    %318 = vmatpush1.msra.mxu0 0.0
    %319 = vmatprep.subr.mxu0 0.0
    %320 = vmatpush1.msra.mxu0 0.0
    %321 = vmatprep.subr.mxu0 0.0
    %322 = vmatpush1.msra.mxu0 0.0
    %323 = vmatprep.subr.mxu0 0.0
    %324 = vmatpush1.msra.mxu0 0.0
    %325 = vmatprep.subr.mxu0 0.0
    %326 = vmatpush1.msra.mxu0 0.0
    %327 = vmatprep.subr.mxu0 0.0
    %328 = vmatpush1.msra.mxu0 0.0
    %329 = vmatprep.subr.mxu0 0.0
    %330 = vmatpush1.msra.mxu0 0.0
    %331 = vmatprep.subr.mxu0 0.0
    %332 = vmatpush1.msra.mxu0 0.0
    %333 = vmatprep.subr.mxu0 0.0
    %334 = vmatpush1.msra.mxu0 0.0
    %335 = vmatprep.subr.mxu0 0.0
    %336 = vmatpush1.msra.mxu0 0.0
    %337 = vmatprep.subr.mxu0 0.0
    %338 = vmatpush1.msra.mxu0 0.0
    %339 = vmatprep.subr.mxu0 0.0
    %340 = vmatpush1.msra.mxu0 0.0
    %341 = vmatprep.subr.mxu0 0.0
    %342 = vmatpush1.msra.mxu0 0.0
    %343 = vmatprep.subr.mxu0 0.0
    %344 = vmatpush1.msra.mxu0 0.0
    %345 = vmatprep.subr.mxu0 0.0
    %346 = vmatpush1.msra.mxu0 0.0
    %347 = vmatprep.subr.mxu0 0.0
    %348 = vmatpush1.msra.mxu0 0.0
    %349 = vmatprep.subr.mxu0 0.0
    %350 = vmatpush1.msra.mxu0 0.0
    %351 = vmatprep.subr.mxu0 0.0
    %352 = vmatpush1.msra.mxu0 0.0
    %353 = vmatprep.subr.mxu0 0.0
    %354 = vmatpush1.msra.mxu0 0.0
    %355 = vmatprep.subr.mxu0 0.0
    %356 = vmatpush1.msra.mxu0 0.0
    %357 = vmatprep.mubr.f32.mxu0 0.0
    %358 = vmatmul.mubr.f32.gmra.mrb[0].mxu0 %v291
    %v359 = vpop.f32.mrb[0].mxu0
    %v360 = vadd.f32 0.0, %v359
    %v361 = vpop.f32.mrb[0].mxu0
    %362 = vdwg.mxu0
    %v363 = vadd.f32 %v289, %v360
    %v364 = vtanh.pop %v363
    %v365 = vrot.slane %v103, 3
    %v366 = vrot.slane %v108, 2
    %v367 = vsel %vm114, %v366, %v365
    %v369 = vrot.slane %v103, 4
    %v370 = vrot.slane %v108, 3
    %v371 = vsel %vm114, %v370, %v369
    %v373 = vsel %vm14, %v367, %v371
    %v375 = vsel %vm122, %v364, 0
    %377 = vmatprep.subr.mxu0 0.0
    %378 = vmatpush1.msra.mxu0 %v18
    %379 = vmatprep.subr.mxu0 0.0
    %380 = vmatpush1.msra.mxu0 %v19
    %381 = vmatprep.subr.mxu0 0.0
    %382 = vmatpush1.msra.mxu0 0.0
    %383 = vmatprep.subr.mxu0 0.0
    %384 = vmatpush1.msra.mxu0 0.0
    %385 = vmatprep.subr.mxu0 0.0
    %386 = vmatpush1.msra.mxu0 0.0
    %387 = vmatprep.subr.mxu0 0.0
    %388 = vmatpush1.msra.mxu0 0.0
    %389 = vmatprep.subr.mxu0 0.0
    %390 = vmatpush1.msra.mxu0 0.0
    %391 = vmatprep.subr.mxu0 0.0
    %392 = vmatpush1.msra.mxu0 0.0
    %393 = vmatprep.subr.mxu0 0.0
    %394 = vmatpush1.msra.mxu0 0.0
    %395 = vmatprep.subr.mxu0 0.0
    %396 = vmatpush1.msra.mxu0 0.0
    %397 = vmatprep.subr.mxu0 0.0
    %398 = vmatpush1.msra.mxu0 0.0
    %399 = vmatprep.subr.mxu0 0.0
    %400 = vmatpush1.msra.mxu0 0.0
    %401 = vmatprep.subr.mxu0 0.0
    %402 = vmatpush1.msra.mxu0 0.0
    %403 = vmatprep.subr.mxu0 0.0
    %404 = vmatpush1.msra.mxu0 0.0
    %405 = vmatprep.subr.mxu0 0.0
    %406 = vmatpush1.msra.mxu0 0.0
    %407 = vmatprep.subr.mxu0 0.0
    %408 = vmatpush1.msra.mxu0 0.0
    %409 = vmatprep.subr.mxu0 0.0
    %410 = vmatpush1.msra.mxu0 0.0
    %411 = vmatprep.subr.mxu0 0.0
    %412 = vmatpush1.msra.mxu0 0.0
    %413 = vmatprep.subr.mxu0 0.0
    %414 = vmatpush1.msra.mxu0 0.0
    %415 = vmatprep.subr.mxu0 0.0
    %416 = vmatpush1.msra.mxu0 0.0
    %417 = vmatprep.subr.mxu0 0.0
    %418 = vmatpush1.msra.mxu0 0.0
    %419 = vmatprep.subr.mxu0 0.0
    %420 = vmatpush1.msra.mxu0 0.0
    %421 = vmatprep.subr.mxu0 0.0
    %422 = vmatpush1.msra.mxu0 0.0
    %423 = vmatprep.subr.mxu0 0.0
    %424 = vmatpush1.msra.mxu0 0.0
    %425 = vmatprep.subr.mxu0 0.0
    %426 = vmatpush1.msra.mxu0 0.0
    %427 = vmatprep.subr.mxu0 0.0
    %428 = vmatpush1.msra.mxu0 0.0
    %429 = vmatprep.subr.mxu0 0.0
    %430 = vmatpush1.msra.mxu0 0.0
    %431 = vmatprep.subr.mxu0 0.0
    %432 = vmatpush1.msra.mxu0 0.0
    %433 = vmatprep.subr.mxu0 0.0
    %434 = vmatpush1.msra.mxu0 0.0
    %435 = vmatprep.subr.mxu0 0.0
    %436 = vmatpush1.msra.mxu0 0.0
    %437 = vmatprep.subr.mxu0 0.0
    %438 = vmatpush1.msra.mxu0 0.0
    %439 = vmatprep.subr.mxu0 0.0
    %440 = vmatpush1.msra.mxu0 0.0
    %441 = vmatprep.mubr.f32.mxu0 0.0
    %442 = vmatmul.mubr.f32.gmra.mrb[0].mxu0 %v375
    %v443 = vpop.f32.mrb[0].mxu0
    %v444 = vadd.f32 0.0, %v443
    %v445 = vpop.f32.mrb[0].mxu0
    %446 = vdwg.mxu0
    %v447 = vadd.f32 %v373, %v444
    %v448 = vtanh.pop %v447
    %v449 = vsel %vm14, %v371, %v367
    %v451 = vsel %vm122, %v448, 0
    %453 = vmatprep.subr.mxu0 0.0
    %454 = vmatpush1.msra.mxu0 %v18
    %455 = vmatprep.subr.mxu0 0.0
    %456 = vmatpush1.msra.mxu0 %v19
    %457 = vmatprep.subr.mxu0 0.0
    %458 = vmatpush1.msra.mxu0 0.0
    %459 = vmatprep.subr.mxu0 0.0
    %460 = vmatpush1.msra.mxu0 0.0
    %461 = vmatprep.subr.mxu0 0.0
    %462 = vmatpush1.msra.mxu0 0.0
    %463 = vmatprep.subr.mxu0 0.0
    %464 = vmatpush1.msra.mxu0 0.0
    %465 = vmatprep.subr.mxu0 0.0
    %466 = vmatpush1.msra.mxu0 0.0
    %467 = vmatprep.subr.mxu0 0.0
    %468 = vmatpush1.msra.mxu0 0.0
    %469 = vmatprep.subr.mxu0 0.0
    %470 = vmatpush1.msra.mxu0 0.0
    %471 = vmatprep.subr.mxu0 0.0
    %472 = vmatpush1.msra.mxu0 0.0
    %473 = vmatprep.subr.mxu0 0.0
    %474 = vmatpush1.msra.mxu0 0.0
    %475 = vmatprep.subr.mxu0 0.0
    %476 = vmatpush1.msra.mxu0 0.0
    %477 = vmatprep.subr.mxu0 0.0
    %478 = vmatpush1.msra.mxu0 0.0
    %479 = vmatprep.subr.mxu0 0.0
    %480 = vmatpush1.msra.mxu0 0.0
    %481 = vmatprep.subr.mxu0 0.0
    %482 = vmatpush1.msra.mxu0 0.0
    %483 = vmatprep.subr.mxu0 0.0
    %484 = vmatpush1.msra.mxu0 0.0
    %485 = vmatprep.subr.mxu0 0.0
    %486 = vmatpush1.msra.mxu0 0.0
    %487 = vmatprep.subr.mxu0 0.0
    %488 = vmatpush1.msra.mxu0 0.0
    %489 = vmatprep.subr.mxu0 0.0
    %490 = vmatpush1.msra.mxu0 0.0
    %491 = vmatprep.subr.mxu0 0.0
    %492 = vmatpush1.msra.mxu0 0.0
    %493 = vmatprep.subr.mxu0 0.0
    %494 = vmatpush1.msra.mxu0 0.0
    %495 = vmatprep.subr.mxu0 0.0
    %496 = vmatpush1.msra.mxu0 0.0
    %497 = vmatprep.subr.mxu0 0.0
    %498 = vmatpush1.msra.mxu0 0.0
    %499 = vmatprep.subr.mxu0 0.0
    %500 = vmatpush1.msra.mxu0 0.0
    %501 = vmatprep.subr.mxu0 0.0
    %502 = vmatpush1.msra.mxu0 0.0
    %503 = vmatprep.subr.mxu0 0.0
    %504 = vmatpush1.msra.mxu0 0.0
    %505 = vmatprep.subr.mxu0 0.0
    %506 = vmatpush1.msra.mxu0 0.0
    %507 = vmatprep.subr.mxu0 0.0
    %508 = vmatpush1.msra.mxu0 0.0
    %509 = vmatprep.subr.mxu0 0.0
    %510 = vmatpush1.msra.mxu0 0.0
    %511 = vmatprep.subr.mxu0 0.0
    %512 = vmatpush1.msra.mxu0 0.0
    %513 = vmatprep.subr.mxu0 0.0
    %514 = vmatpush1.msra.mxu0 0.0
    %515 = vmatprep.subr.mxu0 0.0
    %516 = vmatpush1.msra.mxu0 0.0
    %517 = vmatprep.mubr.f32.mxu0 0.0
    %518 = vmatmul.mubr.f32.gmra.mrb[0].mxu0 %v451
    %v519 = vpop.f32.mrb[0].mxu0
    %v520 = vadd.f32 0.0, %v519
    %v521 = vpop.f32.mrb[0].mxu0
    %522 = vdwg.mxu0
    %v523 = vadd.f32 %v449, %v520
    %v524 = vtanh.pop %v523
    %v525 = vsel %vm14, %v287, %v283
    %v527 = vsel %vm122, %v524, 0
    %529 = vmatprep.subr.mxu0 0.0
    %530 = vmatpush1.msra.mxu0 %v18
    %531 = vmatprep.subr.mxu0 0.0
    %532 = vmatpush1.msra.mxu0 %v19
    %533 = vmatprep.subr.mxu0 0.0
    %534 = vmatpush1.msra.mxu0 0.0
    %535 = vmatprep.subr.mxu0 0.0
    %536 = vmatpush1.msra.mxu0 0.0
    %537 = vmatprep.subr.mxu0 0.0
    %538 = vmatpush1.msra.mxu0 0.0
    %539 = vmatprep.subr.mxu0 0.0
    %540 = vmatpush1.msra.mxu0 0.0
    %541 = vmatprep.subr.mxu0 0.0
    %542 = vmatpush1.msra.mxu0 0.0
    %543 = vmatprep.subr.mxu0 0.0
    %544 = vmatpush1.msra.mxu0 0.0
    %545 = vmatprep.subr.mxu0 0.0
    %546 = vmatpush1.msra.mxu0 0.0
    %547 = vmatprep.subr.mxu0 0.0
    %548 = vmatpush1.msra.mxu0 0.0
    %549 = vmatprep.subr.mxu0 0.0
    %550 = vmatpush1.msra.mxu0 0.0
    %551 = vmatprep.subr.mxu0 0.0
    %552 = vmatpush1.msra.mxu0 0.0
    %553 = vmatprep.subr.mxu0 0.0
    %554 = vmatpush1.msra.mxu0 0.0
    %555 = vmatprep.subr.mxu0 0.0
    %556 = vmatpush1.msra.mxu0 0.0
    %557 = vmatprep.subr.mxu0 0.0
    %558 = vmatpush1.msra.mxu0 0.0
    %559 = vmatprep.subr.mxu0 0.0
    %560 = vmatpush1.msra.mxu0 0.0
    %561 = vmatprep.subr.mxu0 0.0
    %562 = vmatpush1.msra.mxu0 0.0
    %563 = vmatprep.subr.mxu0 0.0
    %564 = vmatpush1.msra.mxu0 0.0
    %565 = vmatprep.subr.mxu0 0.0
    %566 = vmatpush1.msra.mxu0 0.0
    %567 = vmatprep.subr.mxu0 0.0
    %568 = vmatpush1.msra.mxu0 0.0
    %569 = vmatprep.subr.mxu0 0.0
    %570 = vmatpush1.msra.mxu0 0.0
    %571 = vmatprep.subr.mxu0 0.0
    %572 = vmatpush1.msra.mxu0 0.0
    %573 = vmatprep.subr.mxu0 0.0
    %574 = vmatpush1.msra.mxu0 0.0
    %575 = vmatprep.subr.mxu0 0.0
    %576 = vmatpush1.msra.mxu0 0.0
    %577 = vmatprep.subr.mxu0 0.0
    %578 = vmatpush1.msra.mxu0 0.0
    %579 = vmatprep.subr.mxu0 0.0
    %580 = vmatpush1.msra.mxu0 0.0
    %581 = vmatprep.subr.mxu0 0.0
    %582 = vmatpush1.msra.mxu0 0.0
    %583 = vmatprep.subr.mxu0 0.0
    %584 = vmatpush1.msra.mxu0 0.0
    %585 = vmatprep.subr.mxu0 0.0
    %586 = vmatpush1.msra.mxu0 0.0
    %587 = vmatprep.subr.mxu0 0.0
    %588 = vmatpush1.msra.mxu0 0.0
    %589 = vmatprep.subr.mxu0 0.0
    %590 = vmatpush1.msra.mxu0 0.0
    %591 = vmatprep.subr.mxu0 0.0
    %592 = vmatpush1.msra.mxu0 0.0
    %593 = vmatprep.mubr.f32.mxu0 0.0
    %594 = vmatmul.mubr.f32.gmra.mrb[0].mxu0 %v527
    %v595 = vpop.f32.mrb[0].mxu0
    %v596 = vadd.f32 0.0, %v595
    %v597 = vpop.f32.mrb[0].mxu0
    %598 = vdwg.mxu0
    %v599 = vadd.f32 %v525, %v596
    %v600 = vtanh.pop %v599
    %v601 = vsel %vm14, %v203, %v199
    %v603 = vsel %vm122, %v600, 0
    %605 = vmatprep.subr.mxu0 0.0
    %606 = vmatpush1.msra.mxu0 %v18
    %607 = vmatprep.subr.mxu0 0.0
    %608 = vmatpush1.msra.mxu0 %v19
    %609 = vmatprep.subr.mxu0 0.0
    %610 = vmatpush1.msra.mxu0 0.0
    %611 = vmatprep.subr.mxu0 0.0
    %612 = vmatpush1.msra.mxu0 0.0
    %613 = vmatprep.subr.mxu0 0.0
    %614 = vmatpush1.msra.mxu0 0.0
    %615 = vmatprep.subr.mxu0 0.0
    %616 = vmatpush1.msra.mxu0 0.0
    %617 = vmatprep.subr.mxu0 0.0
    %618 = vmatpush1.msra.mxu0 0.0
    %619 = vmatprep.subr.mxu0 0.0
    %620 = vmatpush1.msra.mxu0 0.0
    %621 = vmatprep.subr.mxu0 0.0
    %622 = vmatpush1.msra.mxu0 0.0
    %623 = vmatprep.subr.mxu0 0.0
    %624 = vmatpush1.msra.mxu0 0.0
    %625 = vmatprep.subr.mxu0 0.0
    %626 = vmatpush1.msra.mxu0 0.0
    %627 = vmatprep.subr.mxu0 0.0
    %628 = vmatpush1.msra.mxu0 0.0
    %629 = vmatprep.subr.mxu0 0.0
    %630 = vmatpush1.msra.mxu0 0.0
    %631 = vmatprep.subr.mxu0 0.0
    %632 = vmatpush1.msra.mxu0 0.0
    %633 = vmatprep.subr.mxu0 0.0
    %634 = vmatpush1.msra.mxu0 0.0
    %635 = vmatprep.subr.mxu0 0.0
    %636 = vmatpush1.msra.mxu0 0.0
    %637 = vmatprep.subr.mxu0 0.0
    %638 = vmatpush1.msra.mxu0 0.0
    %639 = vmatprep.subr.mxu0 0.0
    %640 = vmatpush1.msra.mxu0 0.0
    %641 = vmatprep.subr.mxu0 0.0
    %642 = vmatpush1.msra.mxu0 0.0
    %643 = vmatprep.subr.mxu0 0.0
    %644 = vmatpush1.msra.mxu0 0.0
    %645 = vmatprep.subr.mxu0 0.0
    %646 = vmatpush1.msra.mxu0 0.0
    %647 = vmatprep.subr.mxu0 0.0
    %648 = vmatpush1.msra.mxu0 0.0
    %649 = vmatprep.subr.mxu0 0.0
    %650 = vmatpush1.msra.mxu0 0.0
    %651 = vmatprep.subr.mxu0 0.0
    %652 = vmatpush1.msra.mxu0 0.0
    %653 = vmatprep.subr.mxu0 0.0
    %654 = vmatpush1.msra.mxu0 0.0
    %655 = vmatprep.subr.mxu0 0.0
    %656 = vmatpush1.msra.mxu0 0.0
    %657 = vmatprep.subr.mxu0 0.0
    %658 = vmatpush1.msra.mxu0 0.0
    %659 = vmatprep.subr.mxu0 0.0
    %660 = vmatpush1.msra.mxu0 0.0
    %661 = vmatprep.subr.mxu0 0.0
    %662 = vmatpush1.msra.mxu0 0.0
    %663 = vmatprep.subr.mxu0 0.0
    %664 = vmatpush1.msra.mxu0 0.0
    %665 = vmatprep.subr.mxu0 0.0
    %666 = vmatpush1.msra.mxu0 0.0
    %667 = vmatprep.subr.mxu0 0.0
    %668 = vmatpush1.msra.mxu0 0.0
    %669 = vmatprep.mubr.f32.mxu0 0.0
    %670 = vmatmul.mubr.f32.gmra.mrb[0].mxu0 %v603
    %v671 = vpop.f32.mrb[0].mxu0
    %v672 = vadd.f32 0.0, %v671
    %v673 = vpop.f32.mrb[0].mxu0
    %674 = vdwg.mxu0
    %v675 = vadd.f32 %v601, %v672
    %v676 = vtanh.pop %v675
    %v677 = vsel %vm14, %v119, %v115
    %v679 = vsel %vm122, %v676, 0
    %681 = vmatprep.subr.mxu0 0.0
    %682 = vmatpush1.msra.mxu0 %v18
    %683 = vmatprep.subr.mxu0 0.0
    %684 = vmatpush1.msra.mxu0 %v19
    %685 = vmatprep.subr.mxu0 0.0
    %686 = vmatpush1.msra.mxu0 0.0
    %687 = vmatprep.subr.mxu0 0.0
    %688 = vmatpush1.msra.mxu0 0.0
    %689 = vmatprep.subr.mxu0 0.0
    %690 = vmatpush1.msra.mxu0 0.0
    %691 = vmatprep.subr.mxu0 0.0
    %692 = vmatpush1.msra.mxu0 0.0
    %693 = vmatprep.subr.mxu0 0.0
    %694 = vmatpush1.msra.mxu0 0.0
    %695 = vmatprep.subr.mxu0 0.0
    %696 = vmatpush1.msra.mxu0 0.0
    %697 = vmatprep.subr.mxu0 0.0
    %698 = vmatpush1.msra.mxu0 0.0
    %699 = vmatprep.subr.mxu0 0.0
    %700 = vmatpush1.msra.mxu0 0.0
    %701 = vmatprep.subr.mxu0 0.0
    %702 = vmatpush1.msra.mxu0 0.0
    %703 = vmatprep.subr.mxu0 0.0
    %704 = vmatpush1.msra.mxu0 0.0
    %705 = vmatprep.subr.mxu0 0.0
    %706 = vmatpush1.msra.mxu0 0.0
    %707 = vmatprep.subr.mxu0 0.0
    %708 = vmatpush1.msra.mxu0 0.0
    %709 = vmatprep.subr.mxu0 0.0
    %710 = vmatpush1.msra.mxu0 0.0
    %711 = vmatprep.subr.mxu0 0.0
    %712 = vmatpush1.msra.mxu0 0.0
    %713 = vmatprep.subr.mxu0 0.0
    %714 = vmatpush1.msra.mxu0 0.0
    %715 = vmatprep.subr.mxu0 0.0
    %716 = vmatpush1.msra.mxu0 0.0
    %717 = vmatprep.subr.mxu0 0.0
    %718 = vmatpush1.msra.mxu0 0.0
    %719 = vmatprep.subr.mxu0 0.0
    %720 = vmatpush1.msra.mxu0 0.0
    %721 = vmatprep.subr.mxu0 0.0
    %722 = vmatpush1.msra.mxu0 0.0
    %723 = vmatprep.subr.mxu0 0.0
    %724 = vmatpush1.msra.mxu0 0.0
    %725 = vmatprep.subr.mxu0 0.0
    %726 = vmatpush1.msra.mxu0 0.0
    %727 = vmatprep.subr.mxu0 0.0
    %728 = vmatpush1.msra.mxu0 0.0
    %729 = vmatprep.subr.mxu0 0.0
    %730 = vmatpush1.msra.mxu0 0.0
    %731 = vmatprep.subr.mxu0 0.0
    %732 = vmatpush1.msra.mxu0 0.0
    %733 = vmatprep.subr.mxu0 0.0
    %734 = vmatpush1.msra.mxu0 0.0
    %735 = vmatprep.subr.mxu0 0.0
    %736 = vmatpush1.msra.mxu0 0.0
    %737 = vmatprep.subr.mxu0 0.0
    %738 = vmatpush1.msra.mxu0 0.0
    %739 = vmatprep.subr.mxu0 0.0
    %740 = vmatpush1.msra.mxu0 0.0
    %741 = vmatprep.subr.mxu0 0.0
    %742 = vmatpush1.msra.mxu0 0.0
    %743 = vmatprep.subr.mxu0 0.0
    %744 = vmatpush1.msra.mxu0 0.0
    %745 = vmatprep.mubr.f32.mxu0 0.0
    %746 = vmatmul.mubr.f32.gmra.mrb[0].mxu0 %v679
    %v747 = vpop.f32.mrb[0].mxu0
    %v748 = vadd.f32 0.0, %v747
    %v749 = vpop.f32.mrb[0].mxu0
    %750 = vdwg.mxu0
    %v751 = vadd.f32 %v677, %v748
    %v752 = vtanh.pop %v751
    %v753 = vsel %vm14, %v197, %v752
    %v756 = vunpack.c.l.s4 1966171168
    %v757 = vunpack.c.0.s8 %v756
    %v758 = vlaneseq
    %v759 = vshrl.u32 %v758, 7
    %v760 = vsub.s32 %v757, %v759
    %v761 = vrot.slane %v753, %v760
    %v762 = vcombine.high %v761, %v761
    %v764 = vunpack.c.l.s4 1966171168
    %v765 = vunpack.c.0.s8 %v764
    %v766 = vlaneseq
    %v767 = vshrl.u32 %v766, 7
    %v768 = vsub.s32 %v765, %v767
    %v769 = vrot.slane %v761, %v768
    %v771 = vunpack.c.l.s4 1966171168
    %v772 = vunpack.c.0.s8 %v771
    %v773 = vlaneseq
    %v774 = vshrl.u32 %v773, 7
    %v775 = vsub.s32 %v772, %v774
    %v776 = vrot.slane %v762, %v775
    %vm779 = vcmask 122880
    %780 = vst.msk [vmem:[#allocation2] sm:$0x1] %vm779, %v769
    %781 = vst.msk [vmem:[#allocation2 + $0x8] sm:$0x1] %vm779, %v776
    %v782 = vsel %vm14, %v280, %v676
    %v785 = vunpack.c.l.s4 1966171168
    %v786 = vunpack.c.0.s8 %v785
    %v787 = vlaneseq
    %v788 = vshrl.u32 %v787, 7
    %v789 = vsub.s32 %v786, %v788
    %v790 = vrot.slane %v782, %v789
    %v791 = vcombine.high %v790, %v790
    %v793 = vunpack.c.l.s4 1966171168
    %v794 = vunpack.c.0.s8 %v793
    %v795 = vlaneseq
    %v796 = vshrl.u32 %v795, 7
    %v797 = vsub.s32 %v794, %v796
    %v798 = vrot.slane %v790, %v797
    %v800 = vunpack.c.l.s4 1966171168
    %v801 = vunpack.c.0.s8 %v800
    %v802 = vlaneseq
    %v803 = vshrl.u32 %v802, 7
    %v804 = vsub.s32 %v801, %v803
    %v805 = vrot.slane %v791, %v804
    %808 = vst.msk [vmem:[#allocation2 + $0x1] sm:$0x1] %vm779, %v798
    %809 = vst.msk [vmem:[#allocation2 + $0x9] sm:$0x1] %vm779, %v805
    %v810 = vsel %vm14, %v364, %v600
    %v813 = vunpack.c.l.s4 1966171168
    %v814 = vunpack.c.0.s8 %v813
    %v815 = vlaneseq
    %v816 = vshrl.u32 %v815, 7
    %v817 = vsub.s32 %v814, %v816
    %v818 = vrot.slane %v810, %v817
    %v819 = vcombine.high %v818, %v818
    %v821 = vunpack.c.l.s4 1966171168
    %v822 = vunpack.c.0.s8 %v821
    %v823 = vlaneseq
    %v824 = vshrl.u32 %v823, 7
    %v825 = vsub.s32 %v822, %v824
    %v826 = vrot.slane %v818, %v825
    %v828 = vunpack.c.l.s4 1966171168
    %v829 = vunpack.c.0.s8 %v828
    %v830 = vlaneseq
    %v831 = vshrl.u32 %v830, 7
    %v832 = vsub.s32 %v829, %v831
    %v833 = vrot.slane %v819, %v832
    %836 = vst.msk [vmem:[#allocation2 + $0x2] sm:$0x1] %vm779, %v826
    %837 = vst.msk [vmem:[#allocation2 + $0xa] sm:$0x1] %vm779, %v833
    %v838 = vsel %vm14, %v448, %v524
    %v841 = vunpack.c.l.s4 1966171168
    %v842 = vunpack.c.0.s8 %v841
    %v843 = vlaneseq
    %v844 = vshrl.u32 %v843, 7
    %v845 = vsub.s32 %v842, %v844
    %v846 = vrot.slane %v838, %v845
    %v847 = vcombine.high %v846, %v846
    %v849 = vunpack.c.l.s4 1966171168
    %v850 = vunpack.c.0.s8 %v849
    %v851 = vlaneseq
    %v852 = vshrl.u32 %v851, 7
    %v853 = vsub.s32 %v850, %v852
    %v854 = vrot.slane %v846, %v853
    %v856 = vunpack.c.l.s4 1966171168
    %v857 = vunpack.c.0.s8 %v856
    %v858 = vlaneseq
    %v859 = vshrl.u32 %v858, 7
    %v860 = vsub.s32 %v857, %v859
    %v861 = vrot.slane %v847, %v860
    %864 = vst.msk [vmem:[#allocation2 + $0x3] sm:$0x1] %vm779, %v854
    %865 = vst.msk [vmem:[#allocation2 + $0xb] sm:$0x1] %vm779, %v861
    %v866 = vsel %vm14, %v524, %v448
    %v869 = vunpack.c.l.s4 1966171168
    %v870 = vunpack.c.0.s8 %v869
    %v871 = vlaneseq
    %v872 = vshrl.u32 %v871, 7
    %v873 = vsub.s32 %v870, %v872
    %v874 = vrot.slane %v866, %v873
    %v875 = vcombine.high %v874, %v874
    %v877 = vunpack.c.l.s4 1966171168
    %v878 = vunpack.c.0.s8 %v877
    %v879 = vlaneseq
    %v880 = vshrl.u32 %v879, 7
    %v881 = vsub.s32 %v878, %v880
    %v882 = vrot.slane %v874, %v881
    %v884 = vunpack.c.l.s4 1966171168
    %v885 = vunpack.c.0.s8 %v884
    %v886 = vlaneseq
    %v887 = vshrl.u32 %v886, 7
    %v888 = vsub.s32 %v885, %v887
    %v889 = vrot.slane %v875, %v888
    %892 = vst.msk [vmem:[#allocation2 + $0x4] sm:$0x1] %vm779, %v882
    %893 = vst.msk [vmem:[#allocation2 + $0xc] sm:$0x1] %vm779, %v889
    %v894 = vsel %vm14, %v600, %v364
    %v897 = vunpack.c.l.s4 1966171168
    %v898 = vunpack.c.0.s8 %v897
    %v899 = vlaneseq
    %v900 = vshrl.u32 %v899, 7
    %v901 = vsub.s32 %v898, %v900
    %v902 = vrot.slane %v894, %v901
    %v903 = vcombine.high %v902, %v902
    %v905 = vunpack.c.l.s4 1966171168
    %v906 = vunpack.c.0.s8 %v905
    %v907 = vlaneseq
    %v908 = vshrl.u32 %v907, 7
    %v909 = vsub.s32 %v906, %v908
    %v910 = vrot.slane %v902, %v909
    %v912 = vunpack.c.l.s4 1966171168
    %v913 = vunpack.c.0.s8 %v912
    %v914 = vlaneseq
    %v915 = vshrl.u32 %v914, 7
    %v916 = vsub.s32 %v913, %v915
    %v917 = vrot.slane %v903, %v916
    %920 = vst.msk [vmem:[#allocation2 + $0x5] sm:$0x1] %vm779, %v910
    %921 = vst.msk [vmem:[#allocation2 + $0xd] sm:$0x1] %vm779, %v917
    %v922 = vsel %vm14, %v676, %v280
    %v925 = vunpack.c.l.s4 1966171168
    %v926 = vunpack.c.0.s8 %v925
    %v927 = vlaneseq
    %v928 = vshrl.u32 %v927, 7
    %v929 = vsub.s32 %v926, %v928
    %v930 = vrot.slane %v922, %v929
    %v931 = vcombine.high %v930, %v930
    %v933 = vunpack.c.l.s4 1966171168
    %v934 = vunpack.c.0.s8 %v933
    %v935 = vlaneseq
    %v936 = vshrl.u32 %v935, 7
    %v937 = vsub.s32 %v934, %v936
    %v938 = vrot.slane %v930, %v937
    %v940 = vunpack.c.l.s4 1966171168
    %v941 = vunpack.c.0.s8 %v940
    %v942 = vlaneseq
    %v943 = vshrl.u32 %v942, 7
    %v944 = vsub.s32 %v941, %v943
    %v945 = vrot.slane %v931, %v944
    %948 = vst.msk [vmem:[#allocation2 + $0x6] sm:$0x1] %vm779, %v938
    %949 = vst.msk [vmem:[#allocation2 + $0xe] sm:$0x1] %vm779, %v945
    %v950 = vsel %vm14, %v752, %v197
    %v953 = vunpack.c.l.s4 1966171168
    %v954 = vunpack.c.0.s8 %v953
    %v955 = vlaneseq
    %v956 = vshrl.u32 %v955, 7
    %v957 = vsub.s32 %v954, %v956
    %v958 = vrot.slane %v950, %v957
    %v959 = vcombine.high %v958, %v958
    %v961 = vunpack.c.l.s4 1966171168
    %v962 = vunpack.c.0.s8 %v961
    %v963 = vlaneseq
    %v964 = vshrl.u32 %v963, 7
    %v965 = vsub.s32 %v962, %v964
    %v966 = vrot.slane %v958, %v965
    %v968 = vunpack.c.l.s4 1966171168
    %v969 = vunpack.c.0.s8 %v968
    %v970 = vlaneseq
    %v971 = vshrl.u32 %v970, 7
    %v972 = vsub.s32 %v969, %v971
    %v973 = vrot.slane %v959, %v972
    %976 = vst.msk [vmem:[#allocation2 + $0x7] sm:$0x1] %vm779, %v966
    %977 = vst.msk [vmem:[#allocation2 + $0xf] sm:$0x1] %vm779, %v973
    %v978 = vld [vmem:[#allocation2] sm:$0xff]
    %v979 = vld [vmem:[#allocation2 + $0x8] sm:$0xff]
    %v980 = vld [vmem:[%s1 + $0x21] sm:$0xff]
    %v981 = vld [vmem:[%s1 + $0x29] sm:$0xff]
    %v982 = vld [vmem:[%s1 + $0x31] sm:$0xff]
    %v983 = vld [vmem:[%s1 + $0x39] sm:$0xff]
    %v984 = vld [vmem:[%s1 + $0x41] sm:$0x1]
    %v985 = vlaneseq
    %v986 = vshrl.u32 %v985, 7
    %v987 = vsub.s32 0, %v986
    %v988 = vrot.slane %v984, %v987
    %v990 = vsel %vm122, %v978, 0
    %v993 = vsel %vm122, %v979, 0
    %995 = vmatprep.subr.mxu0 0.0
    %996 = vmatpush1.msra.mxu0 %v980
    %997 = vmatprep.subr.mxu0 0.0
    %998 = vmatpush1.msra.mxu0 %v981
    %999 = vmatprep.subr.mxu0 0.0
    %1000 = vmatpush1.msra.mxu0 0.0
    %1001 = vmatprep.subr.mxu0 0.0
    %1002 = vmatpush1.msra.mxu0 0.0
    %1003 = vmatprep.subr.mxu0 0.0
    %1004 = vmatpush1.msra.mxu0 0.0
    %1005 = vmatprep.subr.mxu0 0.0
    %1006 = vmatpush1.msra.mxu0 0.0
    %1007 = vmatprep.subr.mxu0 0.0
    %1008 = vmatpush1.msra.mxu0 0.0
    %1009 = vmatprep.subr.mxu0 0.0
    %1010 = vmatpush1.msra.mxu0 0.0
    %1011 = vmatprep.subr.mxu0 0.0
    %1012 = vmatpush1.msra.mxu0 0.0
    %1013 = vmatprep.subr.mxu0 0.0
    %1014 = vmatpush1.msra.mxu0 0.0
    %1015 = vmatprep.subr.mxu0 0.0
    %1016 = vmatpush1.msra.mxu0 0.0
    %1017 = vmatprep.subr.mxu0 0.0
    %1018 = vmatpush1.msra.mxu0 0.0
    %1019 = vmatprep.subr.mxu0 0.0
    %1020 = vmatpush1.msra.mxu0 0.0
    %1021 = vmatprep.subr.mxu0 0.0
    %1022 = vmatpush1.msra.mxu0 0.0
    %1023 = vmatprep.subr.mxu0 0.0
    %1024 = vmatpush1.msra.mxu0 0.0
    %1025 = vmatprep.subr.mxu0 0.0
    %1026 = vmatpush1.msra.mxu0 0.0
    %1027 = vmatprep.subr.mxu0 0.0
    %1028 = vmatpush1.msra.mxu0 0.0
    %1029 = vmatprep.subr.mxu0 0.0
    %1030 = vmatpush1.msra.mxu0 0.0
    %1031 = vmatprep.subr.mxu0 0.0
    %1032 = vmatpush1.msra.mxu0 0.0
    %1033 = vmatprep.subr.mxu0 0.0
    %1034 = vmatpush1.msra.mxu0 0.0
    %1035 = vmatprep.subr.mxu0 0.0
    %1036 = vmatpush1.msra.mxu0 0.0
    %1037 = vmatprep.subr.mxu0 0.0
    %1038 = vmatpush1.msra.mxu0 0.0
    %1039 = vmatprep.subr.mxu0 0.0
    %1040 = vmatpush1.msra.mxu0 0.0
    %1041 = vmatprep.subr.mxu0 0.0
    %1042 = vmatpush1.msra.mxu0 0.0
    %1043 = vmatprep.subr.mxu0 0.0
    %1044 = vmatpush1.msra.mxu0 0.0
    %1045 = vmatprep.subr.mxu0 0.0
    %1046 = vmatpush1.msra.mxu0 0.0
    %1047 = vmatprep.subr.mxu0 0.0
    %1048 = vmatpush1.msra.mxu0 0.0
    %1049 = vmatprep.subr.mxu0 0.0
    %1050 = vmatpush1.msra.mxu0 0.0
    %1051 = vmatprep.subr.mxu0 0.0
    %1052 = vmatpush1.msra.mxu0 0.0
    %1053 = vmatprep.subr.mxu0 0.0
    %1054 = vmatpush1.msra.mxu0 0.0
    %1055 = vmatprep.subr.mxu0 0.0
    %1056 = vmatpush1.msra.mxu0 0.0
    %1057 = vmatprep.subr.mxu0 0.0
    %1058 = vmatpush1.msra.mxu0 0.0
    %1059 = vmatprep.mubr.f32.mxu0 0.0
    %1060 = vmatmul.mubr.f32.gmra.mrb[0].mxu0 %v990
    %v1061 = vpop.f32.mrb[0].mxu0
    %v1062 = vadd.f32 %v988, %v1061
    %v1063 = vpop.f32.mrb[0].mxu0
    %1064 = vmatprep.mubr.f32.mxu0 0.0
    %1065 = vmatmul.mubr.f32.gmra.mrb[0].mxu0 %v993
    %v1066 = vpop.f32.mrb[0].mxu0
    %v1067 = vadd.f32 %v988, %v1066
    %v1068 = vpop.f32.mrb[0].mxu0
    %1069 = vdwg.mxu0
    %v1072 = vrot.slane %v1067, 7
    %v1073 = vsel %vm114, %v1072, %v1062
    %v1075 = vrot.slane %v1062, 7
    %v1076 = vrot.slane %v1067, 6
    %v1077 = vsel %vm114, %v1076, %v1075
    %v1079 = vsel %vm14, %v1073, %v1077
    %1080 = vmatprep.subr.mxu0 0.0
    %1081 = vmatpush1.msra.mxu0 %v982
    %1082 = vmatprep.subr.mxu0 0.0
    %1083 = vmatpush1.msra.mxu0 %v983
    %1084 = vmatprep.subr.mxu0 0.0
    %1085 = vmatpush1.msra.mxu0 0.0
    %1086 = vmatprep.subr.mxu0 0.0
    %1087 = vmatpush1.msra.mxu0 0.0
    %1088 = vmatprep.subr.mxu0 0.0
    %1089 = vmatpush1.msra.mxu0 0.0
    %1090 = vmatprep.subr.mxu0 0.0
    %1091 = vmatpush1.msra.mxu0 0.0
    %1092 = vmatprep.subr.mxu0 0.0
    %1093 = vmatpush1.msra.mxu0 0.0
    %1094 = vmatprep.subr.mxu0 0.0
    %1095 = vmatpush1.msra.mxu0 0.0
    %1096 = vmatprep.subr.mxu0 0.0
    %1097 = vmatpush1.msra.mxu0 0.0
    %1098 = vmatprep.subr.mxu0 0.0
    %1099 = vmatpush1.msra.mxu0 0.0
    %1100 = vmatprep.subr.mxu0 0.0
    %1101 = vmatpush1.msra.mxu0 0.0
    %1102 = vmatprep.subr.mxu0 0.0
    %1103 = vmatpush1.msra.mxu0 0.0
    %1104 = vmatprep.subr.mxu0 0.0
    %1105 = vmatpush1.msra.mxu0 0.0
    %1106 = vmatprep.subr.mxu0 0.0
    %1107 = vmatpush1.msra.mxu0 0.0
    %1108 = vmatprep.subr.mxu0 0.0
    %1109 = vmatpush1.msra.mxu0 0.0
    %1110 = vmatprep.subr.mxu0 0.0
    %1111 = vmatpush1.msra.mxu0 0.0
    %1112 = vmatprep.subr.mxu0 0.0
    %1113 = vmatpush1.msra.mxu0 0.0
    %1114 = vmatprep.subr.mxu0 0.0
    %1115 = vmatpush1.msra.mxu0 0.0
    %1116 = vmatprep.subr.mxu0 0.0
    %1117 = vmatpush1.msra.mxu0 0.0
    %1118 = vmatprep.subr.mxu0 0.0
    %1119 = vmatpush1.msra.mxu0 0.0
    %1120 = vmatprep.subr.mxu0 0.0
    %1121 = vmatpush1.msra.mxu0 0.0
    %1122 = vmatprep.subr.mxu0 0.0
    %1123 = vmatpush1.msra.mxu0 0.0
    %1124 = vmatprep.subr.mxu0 0.0
    %1125 = vmatpush1.msra.mxu0 0.0
    %1126 = vmatprep.subr.mxu0 0.0
    %1127 = vmatpush1.msra.mxu0 0.0
    %1128 = vmatprep.subr.mxu0 0.0
    %1129 = vmatpush1.msra.mxu0 0.0
    %1130 = vmatprep.subr.mxu0 0.0
    %1131 = vmatpush1.msra.mxu0 0.0
    %1132 = vmatprep.subr.mxu0 0.0
    %1133 = vmatpush1.msra.mxu0 0.0
    %1134 = vmatprep.subr.mxu0 0.0
    %1135 = vmatpush1.msra.mxu0 0.0
    %1136 = vmatprep.subr.mxu0 0.0
    %1137 = vmatpush1.msra.mxu0 0.0
    %1138 = vmatprep.subr.mxu0 0.0
    %1139 = vmatpush1.msra.mxu0 0.0
    %1140 = vmatprep.subr.mxu0 0.0
    %1141 = vmatpush1.msra.mxu0 0.0
    %1142 = vmatprep.subr.mxu0 0.0
    %1143 = vmatpush1.msra.mxu0 0.0
    %1144 = vmatprep.mubr.f32.mxu0 0.0
    %1145 = vmatmul.mubr.f32.gmra.mrb[0].mxu0 %v124
    %v1146 = vpop.f32.mrb[0].mxu0
    %v1147 = vadd.f32 0.0, %v1146
    %v1148 = vpop.f32.mrb[0].mxu0
    %1149 = vdwg.mxu0
    %v1150 = vadd.f32 %v1079, %v1147
    %v1151 = vtanh.pop %v1150
    %v1152 = vrot.slane %v1062, 1
    %v1153 = vsel %vm114, %v1067, %v1152
    %v1155 = vrot.slane %v1062, 6
    %v1156 = vrot.slane %v1067, 5
    %v1157 = vsel %vm114, %v1156, %v1155
    %v1159 = vsel %vm14, %v1153, %v1157
    %v1161 = vsel %vm122, %v1151, 0
    %1163 = vmatprep.subr.mxu0 0.0
    %1164 = vmatpush1.msra.mxu0 %v982
    %1165 = vmatprep.subr.mxu0 0.0
    %1166 = vmatpush1.msra.mxu0 %v983
    %1167 = vmatprep.subr.mxu0 0.0
    %1168 = vmatpush1.msra.mxu0 0.0
    %1169 = vmatprep.subr.mxu0 0.0
    %1170 = vmatpush1.msra.mxu0 0.0
    %1171 = vmatprep.subr.mxu0 0.0
    %1172 = vmatpush1.msra.mxu0 0.0
    %1173 = vmatprep.subr.mxu0 0.0
    %1174 = vmatpush1.msra.mxu0 0.0
    %1175 = vmatprep.subr.mxu0 0.0
    %1176 = vmatpush1.msra.mxu0 0.0
    %1177 = vmatprep.subr.mxu0 0.0
    %1178 = vmatpush1.msra.mxu0 0.0
    %1179 = vmatprep.subr.mxu0 0.0
    %1180 = vmatpush1.msra.mxu0 0.0
    %1181 = vmatprep.subr.mxu0 0.0
    %1182 = vmatpush1.msra.mxu0 0.0
    %1183 = vmatprep.subr.mxu0 0.0
    %1184 = vmatpush1.msra.mxu0 0.0
    %1185 = vmatprep.subr.mxu0 0.0
    %1186 = vmatpush1.msra.mxu0 0.0
    %1187 = vmatprep.subr.mxu0 0.0
    %1188 = vmatpush1.msra.mxu0 0.0
    %1189 = vmatprep.subr.mxu0 0.0
    %1190 = vmatpush1.msra.mxu0 0.0
    %1191 = vmatprep.subr.mxu0 0.0
    %1192 = vmatpush1.msra.mxu0 0.0
    %1193 = vmatprep.subr.mxu0 0.0
    %1194 = vmatpush1.msra.mxu0 0.0
    %1195 = vmatprep.subr.mxu0 0.0
    %1196 = vmatpush1.msra.mxu0 0.0
    %1197 = vmatprep.subr.mxu0 0.0
    %1198 = vmatpush1.msra.mxu0 0.0
    %1199 = vmatprep.subr.mxu0 0.0
    %1200 = vmatpush1.msra.mxu0 0.0
    %1201 = vmatprep.subr.mxu0 0.0
    %1202 = vmatpush1.msra.mxu0 0.0
    %1203 = vmatprep.subr.mxu0 0.0
    %1204 = vmatpush1.msra.mxu0 0.0
    %1205 = vmatprep.subr.mxu0 0.0
    %1206 = vmatpush1.msra.mxu0 0.0
    %1207 = vmatprep.subr.mxu0 0.0
    %1208 = vmatpush1.msra.mxu0 0.0
    %1209 = vmatprep.subr.mxu0 0.0
    %1210 = vmatpush1.msra.mxu0 0.0
    %1211 = vmatprep.subr.mxu0 0.0
    %1212 = vmatpush1.msra.mxu0 0.0
    %1213 = vmatprep.subr.mxu0 0.0
    %1214 = vmatpush1.msra.mxu0 0.0
    %1215 = vmatprep.subr.mxu0 0.0
    %1216 = vmatpush1.msra.mxu0 0.0
    %1217 = vmatprep.subr.mxu0 0.0
    %1218 = vmatpush1.msra.mxu0 0.0
    %1219 = vmatprep.subr.mxu0 0.0
    %1220 = vmatpush1.msra.mxu0 0.0
    %1221 = vmatprep.subr.mxu0 0.0
    %1222 = vmatpush1.msra.mxu0 0.0
    %1223 = vmatprep.subr.mxu0 0.0
    %1224 = vmatpush1.msra.mxu0 0.0
    %1225 = vmatprep.subr.mxu0 0.0
    %1226 = vmatpush1.msra.mxu0 0.0
    %1227 = vmatprep.mubr.f32.mxu0 0.0
    %1228 = vmatmul.mubr.f32.gmra.mrb[0].mxu0 %v1161
    %v1229 = vpop.f32.mrb[0].mxu0
    %v1230 = vadd.f32 0.0, %v1229
    %v1231 = vpop.f32.mrb[0].mxu0
    %1232 = vdwg.mxu0
    %v1233 = vadd.f32 %v1159, %v1230
    %v1234 = vtanh.pop %v1233
    %v1235 = vrot.slane %v1062, 2
    %v1236 = vrot.slane %v1067, 1
    %v1237 = vsel %vm114, %v1236, %v1235
    %v1239 = vrot.slane %v1062, 5
    %v1240 = vrot.slane %v1067, 4
    %v1241 = vsel %vm114, %v1240, %v1239
    %v1243 = vsel %vm14, %v1237, %v1241
    %v1245 = vsel %vm122, %v1234, 0
    %1247 = vmatprep.subr.mxu0 0.0
    %1248 = vmatpush1.msra.mxu0 %v982
    %1249 = vmatprep.subr.mxu0 0.0
    %1250 = vmatpush1.msra.mxu0 %v983
    %1251 = vmatprep.subr.mxu0 0.0
    %1252 = vmatpush1.msra.mxu0 0.0
    %1253 = vmatprep.subr.mxu0 0.0
    %1254 = vmatpush1.msra.mxu0 0.0
    %1255 = vmatprep.subr.mxu0 0.0
    %1256 = vmatpush1.msra.mxu0 0.0
    %1257 = vmatprep.subr.mxu0 0.0
    %1258 = vmatpush1.msra.mxu0 0.0
    %1259 = vmatprep.subr.mxu0 0.0
    %1260 = vmatpush1.msra.mxu0 0.0
    %1261 = vmatprep.subr.mxu0 0.0
    %1262 = vmatpush1.msra.mxu0 0.0
    %1263 = vmatprep.subr.mxu0 0.0
    %1264 = vmatpush1.msra.mxu0 0.0
    %1265 = vmatprep.subr.mxu0 0.0
    %1266 = vmatpush1.msra.mxu0 0.0
    %1267 = vmatprep.subr.mxu0 0.0
    %1268 = vmatpush1.msra.mxu0 0.0
    %1269 = vmatprep.subr.mxu0 0.0
    %1270 = vmatpush1.msra.mxu0 0.0
    %1271 = vmatprep.subr.mxu0 0.0
    %1272 = vmatpush1.msra.mxu0 0.0
    %1273 = vmatprep.subr.mxu0 0.0
    %1274 = vmatpush1.msra.mxu0 0.0
    %1275 = vmatprep.subr.mxu0 0.0
    %1276 = vmatpush1.msra.mxu0 0.0
    %1277 = vmatprep.subr.mxu0 0.0
    %1278 = vmatpush1.msra.mxu0 0.0
    %1279 = vmatprep.subr.mxu0 0.0
    %1280 = vmatpush1.msra.mxu0 0.0
    %1281 = vmatprep.subr.mxu0 0.0
    %1282 = vmatpush1.msra.mxu0 0.0
    %1283 = vmatprep.subr.mxu0 0.0
    %1284 = vmatpush1.msra.mxu0 0.0
    %1285 = vmatprep.subr.mxu0 0.0
    %1286 = vmatpush1.msra.mxu0 0.0
    %1287 = vmatprep.subr.mxu0 0.0
    %1288 = vmatpush1.msra.mxu0 0.0
    %1289 = vmatprep.subr.mxu0 0.0
    %1290 = vmatpush1.msra.mxu0 0.0
    %1291 = vmatprep.subr.mxu0 0.0
    %1292 = vmatpush1.msra.mxu0 0.0
    %1293 = vmatprep.subr.mxu0 0.0
    %1294 = vmatpush1.msra.mxu0 0.0
    %1295 = vmatprep.subr.mxu0 0.0
    %1296 = vmatpush1.msra.mxu0 0.0
    %1297 = vmatprep.subr.mxu0 0.0
    %1298 = vmatpush1.msra.mxu0 0.0
    %1299 = vmatprep.subr.mxu0 0.0
    %1300 = vmatpush1.msra.mxu0 0.0
    %1301 = vmatprep.subr.mxu0 0.0
    %1302 = vmatpush1.msra.mxu0 0.0
    %1303 = vmatprep.subr.mxu0 0.0
    %1304 = vmatpush1.msra.mxu0 0.0
    %1305 = vmatprep.subr.mxu0 0.0
    %1306 = vmatpush1.msra.mxu0 0.0
    %1307 = vmatprep.subr.mxu0 0.0
    %1308 = vmatpush1.msra.mxu0 0.0
    %1309 = vmatprep.subr.mxu0 0.0
    %1310 = vmatpush1.msra.mxu0 0.0
    %1311 = vmatprep.mubr.f32.mxu0 0.0
    %1312 = vmatmul.mubr.f32.gmra.mrb[0].mxu0 %v1245
    %v1313 = vpop.f32.mrb[0].mxu0
    %v1314 = vadd.f32 0.0, %v1313
    %v1315 = vpop.f32.mrb[0].mxu0
    %1316 = vdwg.mxu0
    %v1317 = vadd.f32 %v1243, %v1314
    %v1318 = vtanh.pop %v1317
    %v1319 = vrot.slane %v1062, 3
    %v1320 = vrot.slane %v1067, 2
    %v1321 = vsel %vm114, %v1320, %v1319
    %v1323 = vrot.slane %v1062, 4
    %v1324 = vrot.slane %v1067, 3
    %v1325 = vsel %vm114, %v1324, %v1323
    %v1327 = vsel %vm14, %v1321, %v1325
    %v1329 = vsel %vm122, %v1318, 0
    %1331 = vmatprep.subr.mxu0 0.0
    %1332 = vmatpush1.msra.mxu0 %v982
    %1333 = vmatprep.subr.mxu0 0.0
    %1334 = vmatpush1.msra.mxu0 %v983
    %1335 = vmatprep.subr.mxu0 0.0
    %1336 = vmatpush1.msra.mxu0 0.0
    %1337 = vmatprep.subr.mxu0 0.0
    %1338 = vmatpush1.msra.mxu0 0.0
    %1339 = vmatprep.subr.mxu0 0.0
    %1340 = vmatpush1.msra.mxu0 0.0
    %1341 = vmatprep.subr.mxu0 0.0
    %1342 = vmatpush1.msra.mxu0 0.0
    %1343 = vmatprep.subr.mxu0 0.0
    %1344 = vmatpush1.msra.mxu0 0.0
    %1345 = vmatprep.subr.mxu0 0.0
    %1346 = vmatpush1.msra.mxu0 0.0
    %1347 = vmatprep.subr.mxu0 0.0
    %1348 = vmatpush1.msra.mxu0 0.0
    %1349 = vmatprep.subr.mxu0 0.0
    %1350 = vmatpush1.msra.mxu0 0.0
    %1351 = vmatprep.subr.mxu0 0.0
    %1352 = vmatpush1.msra.mxu0 0.0
    %1353 = vmatprep.subr.mxu0 0.0
    %1354 = vmatpush1.msra.mxu0 0.0
    %1355 = vmatprep.subr.mxu0 0.0
    %1356 = vmatpush1.msra.mxu0 0.0
    %1357 = vmatprep.subr.mxu0 0.0
    %1358 = vmatpush1.msra.mxu0 0.0
    %1359 = vmatprep.subr.mxu0 0.0
    %1360 = vmatpush1.msra.mxu0 0.0
    %1361 = vmatprep.subr.mxu0 0.0
    %1362 = vmatpush1.msra.mxu0 0.0
    %1363 = vmatprep.subr.mxu0 0.0
    %1364 = vmatpush1.msra.mxu0 0.0
    %1365 = vmatprep.subr.mxu0 0.0
    %1366 = vmatpush1.msra.mxu0 0.0
    %1367 = vmatprep.subr.mxu0 0.0
    %1368 = vmatpush1.msra.mxu0 0.0
    %1369 = vmatprep.subr.mxu0 0.0
    %1370 = vmatpush1.msra.mxu0 0.0
    %1371 = vmatprep.subr.mxu0 0.0
    %1372 = vmatpush1.msra.mxu0 0.0
    %1373 = vmatprep.subr.mxu0 0.0
    %1374 = vmatpush1.msra.mxu0 0.0
    %1375 = vmatprep.subr.mxu0 0.0
    %1376 = vmatpush1.msra.mxu0 0.0
    %1377 = vmatprep.subr.mxu0 0.0
    %1378 = vmatpush1.msra.mxu0 0.0
    %1379 = vmatprep.subr.mxu0 0.0
    %1380 = vmatpush1.msra.mxu0 0.0
    %1381 = vmatprep.subr.mxu0 0.0
    %1382 = vmatpush1.msra.mxu0 0.0
    %1383 = vmatprep.subr.mxu0 0.0
    %1384 = vmatpush1.msra.mxu0 0.0
    %1385 = vmatprep.subr.mxu0 0.0
    %1386 = vmatpush1.msra.mxu0 0.0
    %1387 = vmatprep.subr.mxu0 0.0
    %1388 = vmatpush1.msra.mxu0 0.0
    %1389 = vmatprep.subr.mxu0 0.0
    %1390 = vmatpush1.msra.mxu0 0.0
    %1391 = vmatprep.subr.mxu0 0.0
    %1392 = vmatpush1.msra.mxu0 0.0
    %1393 = vmatprep.subr.mxu0 0.0
    %1394 = vmatpush1.msra.mxu0 0.0
    %1395 = vmatprep.mubr.f32.mxu0 0.0
    %1396 = vmatmul.mubr.f32.gmra.mrb[0].mxu0 %v1329
    %v1397 = vpop.f32.mrb[0].mxu0
    %v1398 = vadd.f32 0.0, %v1397
    %v1399 = vpop.f32.mrb[0].mxu0
    %1400 = vdwg.mxu0
    %v1401 = vadd.f32 %v1327, %v1398
    %v1402 = vtanh.pop %v1401
    %v1403 = vsel %vm14, %v1325, %v1321
    %v1405 = vsel %vm122, %v1402, 0
    %1407 = vmatprep.subr.mxu0 0.0
    %1408 = vmatpush1.msra.mxu0 %v982
    %1409 = vmatprep.subr.mxu0 0.0
    %1410 = vmatpush1.msra.mxu0 %v983
    %1411 = vmatprep.subr.mxu0 0.0
    %1412 = vmatpush1.msra.mxu0 0.0
    %1413 = vmatprep.subr.mxu0 0.0
    %1414 = vmatpush1.msra.mxu0 0.0
    %1415 = vmatprep.subr.mxu0 0.0
    %1416 = vmatpush1.msra.mxu0 0.0
    %1417 = vmatprep.subr.mxu0 0.0
    %1418 = vmatpush1.msra.mxu0 0.0
    %1419 = vmatprep.subr.mxu0 0.0
    %1420 = vmatpush1.msra.mxu0 0.0
    %1421 = vmatprep.subr.mxu0 0.0
    %1422 = vmatpush1.msra.mxu0 0.0
    %1423 = vmatprep.subr.mxu0 0.0
    %1424 = vmatpush1.msra.mxu0 0.0
    %1425 = vmatprep.subr.mxu0 0.0
    %1426 = vmatpush1.msra.mxu0 0.0
    %1427 = vmatprep.subr.mxu0 0.0
    %1428 = vmatpush1.msra.mxu0 0.0
    %1429 = vmatprep.subr.mxu0 0.0
    %1430 = vmatpush1.msra.mxu0 0.0
    %1431 = vmatprep.subr.mxu0 0.0
    %1432 = vmatpush1.msra.mxu0 0.0
    %1433 = vmatprep.subr.mxu0 0.0
    %1434 = vmatpush1.msra.mxu0 0.0
    %1435 = vmatprep.subr.mxu0 0.0
    %1436 = vmatpush1.msra.mxu0 0.0
    %1437 = vmatprep.subr.mxu0 0.0
    %1438 = vmatpush1.msra.mxu0 0.0
    %1439 = vmatprep.subr.mxu0 0.0
    %1440 = vmatpush1.msra.mxu0 0.0
    %1441 = vmatprep.subr.mxu0 0.0
    %1442 = vmatpush1.msra.mxu0 0.0
    %1443 = vmatprep.subr.mxu0 0.0
    %1444 = vmatpush1.msra.mxu0 0.0
    %1445 = vmatprep.subr.mxu0 0.0
    %1446 = vmatpush1.msra.mxu0 0.0
    %1447 = vmatprep.subr.mxu0 0.0
    %1448 = vmatpush1.msra.mxu0 0.0
    %1449 = vmatprep.subr.mxu0 0.0
    %1450 = vmatpush1.msra.mxu0 0.0
    %1451 = vmatprep.subr.mxu0 0.0
    %1452 = vmatpush1.msra.mxu0 0.0
    %1453 = vmatprep.subr.mxu0 0.0
    %1454 = vmatpush1.msra.mxu0 0.0
    %1455 = vmatprep.subr.mxu0 0.0
    %1456 = vmatpush1.msra.mxu0 0.0
    %1457 = vmatprep.subr.mxu0 0.0
    %1458 = vmatpush1.msra.mxu0 0.0
    %1459 = vmatprep.subr.mxu0 0.0
    %1460 = vmatpush1.msra.mxu0 0.0
    %1461 = vmatprep.subr.mxu0 0.0
    %1462 = vmatpush1.msra.mxu0 0.0
    %1463 = vmatprep.subr.mxu0 0.0
    %1464 = vmatpush1.msra.mxu0 0.0
    %1465 = vmatprep.subr.mxu0 0.0
    %1466 = vmatpush1.msra.mxu0 0.0
    %1467 = vmatprep.subr.mxu0 0.0
    %1468 = vmatpush1.msra.mxu0 0.0
    %1469 = vmatprep.subr.mxu0 0.0
    %1470 = vmatpush1.msra.mxu0 0.0
    %1471 = vmatprep.mubr.f32.mxu0 0.0
    %1472 = vmatmul.mubr.f32.gmra.mrb[0].mxu0 %v1405
    %v1473 = vpop.f32.mrb[0].mxu0
    %v1474 = vadd.f32 0.0, %v1473
    %v1475 = vpop.f32.mrb[0].mxu0
    %1476 = vdwg.mxu0
    %v1477 = vadd.f32 %v1403, %v1474
    %v1478 = vtanh.pop %v1477
    %v1479 = vsel %vm14, %v1241, %v1237
    %v1481 = vsel %vm122, %v1478, 0
    %1483 = vmatprep.subr.mxu0 0.0
    %1484 = vmatpush1.msra.mxu0 %v982
    %1485 = vmatprep.subr.mxu0 0.0
    %1486 = vmatpush1.msra.mxu0 %v983
    %1487 = vmatprep.subr.mxu0 0.0
    %1488 = vmatpush1.msra.mxu0 0.0
    %1489 = vmatprep.subr.mxu0 0.0
    %1490 = vmatpush1.msra.mxu0 0.0
    %1491 = vmatprep.subr.mxu0 0.0
    %1492 = vmatpush1.msra.mxu0 0.0
    %1493 = vmatprep.subr.mxu0 0.0
    %1494 = vmatpush1.msra.mxu0 0.0
    %1495 = vmatprep.subr.mxu0 0.0
    %1496 = vmatpush1.msra.mxu0 0.0
    %1497 = vmatprep.subr.mxu0 0.0
    %1498 = vmatpush1.msra.mxu0 0.0
    %1499 = vmatprep.subr.mxu0 0.0
    %1500 = vmatpush1.msra.mxu0 0.0
    %1501 = vmatprep.subr.mxu0 0.0
    %1502 = vmatpush1.msra.mxu0 0.0
    %1503 = vmatprep.subr.mxu0 0.0
    %1504 = vmatpush1.msra.mxu0 0.0
    %1505 = vmatprep.subr.mxu0 0.0
    %1506 = vmatpush1.msra.mxu0 0.0
    %1507 = vmatprep.subr.mxu0 0.0
    %1508 = vmatpush1.msra.mxu0 0.0
    %1509 = vmatprep.subr.mxu0 0.0
    %1510 = vmatpush1.msra.mxu0 0.0
    %1511 = vmatprep.subr.mxu0 0.0
    %1512 = vmatpush1.msra.mxu0 0.0
    %1513 = vmatprep.subr.mxu0 0.0
    %1514 = vmatpush1.msra.mxu0 0.0
    %1515 = vmatprep.subr.mxu0 0.0
    %1516 = vmatpush1.msra.mxu0 0.0
    %1517 = vmatprep.subr.mxu0 0.0
    %1518 = vmatpush1.msra.mxu0 0.0
    %1519 = vmatprep.subr.mxu0 0.0
    %1520 = vmatpush1.msra.mxu0 0.0
    %1521 = vmatprep.subr.mxu0 0.0
    %1522 = vmatpush1.msra.mxu0 0.0
    %1523 = vmatprep.subr.mxu0 0.0
    %1524 = vmatpush1.msra.mxu0 0.0
    %1525 = vmatprep.subr.mxu0 0.0
    %1526 = vmatpush1.msra.mxu0 0.0
    %1527 = vmatprep.subr.mxu0 0.0
    %1528 = vmatpush1.msra.mxu0 0.0
    %1529 = vmatprep.subr.mxu0 0.0
    %1530 = vmatpush1.msra.mxu0 0.0
    %1531 = vmatprep.subr.mxu0 0.0
    %1532 = vmatpush1.msra.mxu0 0.0
    %1533 = vmatprep.subr.mxu0 0.0
    %1534 = vmatpush1.msra.mxu0 0.0
    %1535 = vmatprep.subr.mxu0 0.0
    %1536 = vmatpush1.msra.mxu0 0.0
    %1537 = vmatprep.subr.mxu0 0.0
    %1538 = vmatpush1.msra.mxu0 0.0
    %1539 = vmatprep.subr.mxu0 0.0
    %1540 = vmatpush1.msra.mxu0 0.0
    %1541 = vmatprep.subr.mxu0 0.0
    %1542 = vmatpush1.msra.mxu0 0.0
    %1543 = vmatprep.subr.mxu0 0.0
    %1544 = vmatpush1.msra.mxu0 0.0
    %1545 = vmatprep.subr.mxu0 0.0
    %1546 = vmatpush1.msra.mxu0 0.0
    %1547 = vmatprep.mubr.f32.mxu0 0.0
    %1548 = vmatmul.mubr.f32.gmra.mrb[0].mxu0 %v1481
    %v1549 = vpop.f32.mrb[0].mxu0
    %v1550 = vadd.f32 0.0, %v1549
    %v1551 = vpop.f32.mrb[0].mxu0
    %1552 = vdwg.mxu0
    %v1553 = vadd.f32 %v1479, %v1550
    %v1554 = vtanh.pop %v1553
    %v1555 = vsel %vm14, %v1157, %v1153
    %v1557 = vsel %vm122, %v1554, 0
    %1559 = vmatprep.subr.mxu0 0.0
    %1560 = vmatpush1.msra.mxu0 %v982
    %1561 = vmatprep.subr.mxu0 0.0
    %1562 = vmatpush1.msra.mxu0 %v983
    %1563 = vmatprep.subr.mxu0 0.0
    %1564 = vmatpush1.msra.mxu0 0.0
    %1565 = vmatprep.subr.mxu0 0.0
    %1566 = vmatpush1.msra.mxu0 0.0
    %1567 = vmatprep.subr.mxu0 0.0
    %1568 = vmatpush1.msra.mxu0 0.0
    %1569 = vmatprep.subr.mxu0 0.0
    %1570 = vmatpush1.msra.mxu0 0.0
    %1571 = vmatprep.subr.mxu0 0.0
    %1572 = vmatpush1.msra.mxu0 0.0
    %1573 = vmatprep.subr.mxu0 0.0
    %1574 = vmatpush1.msra.mxu0 0.0
    %1575 = vmatprep.subr.mxu0 0.0
    %1576 = vmatpush1.msra.mxu0 0.0
    %1577 = vmatprep.subr.mxu0 0.0
    %1578 = vmatpush1.msra.mxu0 0.0
    %1579 = vmatprep.subr.mxu0 0.0
    %1580 = vmatpush1.msra.mxu0 0.0
    %1581 = vmatprep.subr.mxu0 0.0
    %1582 = vmatpush1.msra.mxu0 0.0
    %1583 = vmatprep.subr.mxu0 0.0
    %1584 = vmatpush1.msra.mxu0 0.0
    %1585 = vmatprep.subr.mxu0 0.0
    %1586 = vmatpush1.msra.mxu0 0.0
    %1587 = vmatprep.subr.mxu0 0.0
    %1588 = vmatpush1.msra.mxu0 0.0
    %1589 = vmatprep.subr.mxu0 0.0
    %1590 = vmatpush1.msra.mxu0 0.0
    %1591 = vmatprep.subr.mxu0 0.0
    %1592 = vmatpush1.msra.mxu0 0.0
    %1593 = vmatprep.subr.mxu0 0.0
    %1594 = vmatpush1.msra.mxu0 0.0
    %1595 = vmatprep.subr.mxu0 0.0
    %1596 = vmatpush1.msra.mxu0 0.0
    %1597 = vmatprep.subr.mxu0 0.0
    %1598 = vmatpush1.msra.mxu0 0.0
    %1599 = vmatprep.subr.mxu0 0.0
    %1600 = vmatpush1.msra.mxu0 0.0
    %1601 = vmatprep.subr.mxu0 0.0
    %1602 = vmatpush1.msra.mxu0 0.0
    %1603 = vmatprep.subr.mxu0 0.0
    %1604 = vmatpush1.msra.mxu0 0.0
    %1605 = vmatprep.subr.mxu0 0.0
    %1606 = vmatpush1.msra.mxu0 0.0
    %1607 = vmatprep.subr.mxu0 0.0
    %1608 = vmatpush1.msra.mxu0 0.0
    %1609 = vmatprep.subr.mxu0 0.0
    %1610 = vmatpush1.msra.mxu0 0.0
    %1611 = vmatprep.subr.mxu0 0.0
    %1612 = vmatpush1.msra.mxu0 0.0
    %1613 = vmatprep.subr.mxu0 0.0
    %1614 = vmatpush1.msra.mxu0 0.0
    %1615 = vmatprep.subr.mxu0 0.0
    %1616 = vmatpush1.msra.mxu0 0.0
    %1617 = vmatprep.subr.mxu0 0.0
    %1618 = vmatpush1.msra.mxu0 0.0
    %1619 = vmatprep.subr.mxu0 0.0
    %1620 = vmatpush1.msra.mxu0 0.0
    %1621 = vmatprep.subr.mxu0 0.0
    %1622 = vmatpush1.msra.mxu0 0.0
    %1623 = vmatprep.mubr.f32.mxu0 0.0
    %1624 = vmatmul.mubr.f32.gmra.mrb[0].mxu0 %v1557
    %v1625 = vpop.f32.mrb[0].mxu0
    %v1626 = vadd.f32 0.0, %v1625
    %v1627 = vpop.f32.mrb[0].mxu0
    %1628 = vdwg.mxu0
    %v1629 = vadd.f32 %v1555, %v1626
    %v1630 = vtanh.pop %v1629
    %v1631 = vsel %vm14, %v1077, %v1073
    %v1633 = vsel %vm122, %v1630, 0
    %1635 = vmatprep.subr.mxu0 0.0
    %1636 = vmatpush1.msra.mxu0 %v982
    %1637 = vmatprep.subr.mxu0 0.0
    %1638 = vmatpush1.msra.mxu0 %v983
    %1639 = vmatprep.subr.mxu0 0.0
    %1640 = vmatpush1.msra.mxu0 0.0
    %1641 = vmatprep.subr.mxu0 0.0
    %1642 = vmatpush1.msra.mxu0 0.0
    %1643 = vmatprep.subr.mxu0 0.0
    %1644 = vmatpush1.msra.mxu0 0.0
    %1645 = vmatprep.subr.mxu0 0.0
    %1646 = vmatpush1.msra.mxu0 0.0
    %1647 = vmatprep.subr.mxu0 0.0
    %1648 = vmatpush1.msra.mxu0 0.0
    %1649 = vmatprep.subr.mxu0 0.0
    %1650 = vmatpush1.msra.mxu0 0.0
    %1651 = vmatprep.subr.mxu0 0.0
    %1652 = vmatpush1.msra.mxu0 0.0
    %1653 = vmatprep.subr.mxu0 0.0
    %1654 = vmatpush1.msra.mxu0 0.0
    %1655 = vmatprep.subr.mxu0 0.0
    %1656 = vmatpush1.msra.mxu0 0.0
    %1657 = vmatprep.subr.mxu0 0.0
    %1658 = vmatpush1.msra.mxu0 0.0
    %1659 = vmatprep.subr.mxu0 0.0
    %1660 = vmatpush1.msra.mxu0 0.0
    %1661 = vmatprep.subr.mxu0 0.0
    %1662 = vmatpush1.msra.mxu0 0.0
    %1663 = vmatprep.subr.mxu0 0.0
    %1664 = vmatpush1.msra.mxu0 0.0
    %1665 = vmatprep.subr.mxu0 0.0
    %1666 = vmatpush1.msra.mxu0 0.0
    %1667 = vmatprep.subr.mxu0 0.0
    %1668 = vmatpush1.msra.mxu0 0.0
    %1669 = vmatprep.subr.mxu0 0.0
    %1670 = vmatpush1.msra.mxu0 0.0
    %1671 = vmatprep.subr.mxu0 0.0
    %1672 = vmatpush1.msra.mxu0 0.0
    %1673 = vmatprep.subr.mxu0 0.0
    %1674 = vmatpush1.msra.mxu0 0.0
    %1675 = vmatprep.subr.mxu0 0.0
    %1676 = vmatpush1.msra.mxu0 0.0
    %1677 = vmatprep.subr.mxu0 0.0
    %1678 = vmatpush1.msra.mxu0 0.0
    %1679 = vmatprep.subr.mxu0 0.0
    %1680 = vmatpush1.msra.mxu0 0.0
    %1681 = vmatprep.subr.mxu0 0.0
    %1682 = vmatpush1.msra.mxu0 0.0
    %1683 = vmatprep.subr.mxu0 0.0
    %1684 = vmatpush1.msra.mxu0 0.0
    %1685 = vmatprep.subr.mxu0 0.0
    %1686 = vmatpush1.msra.mxu0 0.0
    %1687 = vmatprep.subr.mxu0 0.0
    %1688 = vmatpush1.msra.mxu0 0.0
    %1689 = vmatprep.subr.mxu0 0.0
    %1690 = vmatpush1.msra.mxu0 0.0
    %1691 = vmatprep.subr.mxu0 0.0
    %1692 = vmatpush1.msra.mxu0 0.0
    %1693 = vmatprep.subr.mxu0 0.0
    %1694 = vmatpush1.msra.mxu0 0.0
    %1695 = vmatprep.subr.mxu0 0.0
    %1696 = vmatpush1.msra.mxu0 0.0
    %1697 = vmatprep.subr.mxu0 0.0
    %1698 = vmatpush1.msra.mxu0 0.0
    %1699 = vmatprep.mubr.f32.mxu0 0.0
    %1700 = vmatmul.mubr.f32.gmra.mrb[0].mxu0 %v1633
    %v1701 = vpop.f32.mrb[0].mxu0
    %v1702 = vadd.f32 0.0, %v1701
    %v1703 = vpop.f32.mrb[0].mxu0
    %1704 = vdwg.mxu0
    %v1705 = vadd.f32 %v1631, %v1702
    %v1706 = vtanh.pop %v1705
    %v1707 = vsel %vm14, %v1151, %v1706
    %v1710 = vunpack.c.l.s4 1966171168
    %v1711 = vunpack.c.0.s8 %v1710
    %v1712 = vlaneseq
    %v1713 = vshrl.u32 %v1712, 7
    %v1714 = vsub.s32 %v1711, %v1713
    %v1715 = vrot.slane %v1707, %v1714
    %v1716 = vcombine.high %v1715, %v1715
    %v1718 = vunpack.c.l.s4 1966171168
    %v1719 = vunpack.c.0.s8 %v1718
    %v1720 = vlaneseq
    %v1721 = vshrl.u32 %v1720, 7
    %v1722 = vsub.s32 %v1719, %v1721
    %v1723 = vrot.slane %v1715, %v1722
    %v1725 = vunpack.c.l.s4 1966171168
    %v1726 = vunpack.c.0.s8 %v1725
    %v1727 = vlaneseq
    %v1728 = vshrl.u32 %v1727, 7
    %v1729 = vsub.s32 %v1726, %v1728
    %v1730 = vrot.slane %v1716, %v1729
    %1733 = vst.msk [vmem:[#allocation2] sm:$0x1] %vm779, %v1723
    %1734 = vst.msk [vmem:[#allocation2 + $0x8] sm:$0x1] %vm779, %v1730
    %v1735 = vsel %vm14, %v1234, %v1630
    %v1738 = vunpack.c.l.s4 1966171168
    %v1739 = vunpack.c.0.s8 %v1738
    %v1740 = vlaneseq
    %v1741 = vshrl.u32 %v1740, 7
    %v1742 = vsub.s32 %v1739, %v1741
    %v1743 = vrot.slane %v1735, %v1742
    %v1744 = vcombine.high %v1743, %v1743
    %v1746 = vunpack.c.l.s4 1966171168
    %v1747 = vunpack.c.0.s8 %v1746
    %v1748 = vlaneseq
    %v1749 = vshrl.u32 %v1748, 7
    %v1750 = vsub.s32 %v1747, %v1749
    %v1751 = vrot.slane %v1743, %v1750
    %v1753 = vunpack.c.l.s4 1966171168
    %v1754 = vunpack.c.0.s8 %v1753
    %v1755 = vlaneseq
    %v1756 = vshrl.u32 %v1755, 7
    %v1757 = vsub.s32 %v1754, %v1756
    %v1758 = vrot.slane %v1744, %v1757
    %1761 = vst.msk [vmem:[#allocation2 + $0x1] sm:$0x1] %vm779, %v1751
    %1762 = vst.msk [vmem:[#allocation2 + $0x9] sm:$0x1] %vm779, %v1758
    %v1763 = vsel %vm14, %v1318, %v1554
    %v1766 = vunpack.c.l.s4 1966171168
    %v1767 = vunpack.c.0.s8 %v1766
    %v1768 = vlaneseq
    %v1769 = vshrl.u32 %v1768, 7
    %v1770 = vsub.s32 %v1767, %v1769
    %v1771 = vrot.slane %v1763, %v1770
    %v1772 = vcombine.high %v1771, %v1771
    %v1774 = vunpack.c.l.s4 1966171168
    %v1775 = vunpack.c.0.s8 %v1774
    %v1776 = vlaneseq
    %v1777 = vshrl.u32 %v1776, 7
    %v1778 = vsub.s32 %v1775, %v1777
    %v1779 = vrot.slane %v1771, %v1778
    %v1781 = vunpack.c.l.s4 1966171168
    %v1782 = vunpack.c.0.s8 %v1781
    %v1783 = vlaneseq
    %v1784 = vshrl.u32 %v1783, 7
    %v1785 = vsub.s32 %v1782, %v1784
    %v1786 = vrot.slane %v1772, %v1785
    %1789 = vst.msk [vmem:[#allocation2 + $0x2] sm:$0x1] %vm779, %v1779
    %1790 = vst.msk [vmem:[#allocation2 + $0xa] sm:$0x1] %vm779, %v1786
    %v1791 = vsel %vm14, %v1402, %v1478
    %v1794 = vunpack.c.l.s4 1966171168
    %v1795 = vunpack.c.0.s8 %v1794
    %v1796 = vlaneseq
    %v1797 = vshrl.u32 %v1796, 7
    %v1798 = vsub.s32 %v1795, %v1797
    %v1799 = vrot.slane %v1791, %v1798
    %v1800 = vcombine.high %v1799, %v1799
    %v1802 = vunpack.c.l.s4 1966171168
    %v1803 = vunpack.c.0.s8 %v1802
    %v1804 = vlaneseq
    %v1805 = vshrl.u32 %v1804, 7
    %v1806 = vsub.s32 %v1803, %v1805
    %v1807 = vrot.slane %v1799, %v1806
    %v1809 = vunpack.c.l.s4 1966171168
    %v1810 = vunpack.c.0.s8 %v1809
    %v1811 = vlaneseq
    %v1812 = vshrl.u32 %v1811, 7
    %v1813 = vsub.s32 %v1810, %v1812
    %v1814 = vrot.slane %v1800, %v1813
    %1817 = vst.msk [vmem:[#allocation2 + $0x3] sm:$0x1] %vm779, %v1807
    %1818 = vst.msk [vmem:[#allocation2 + $0xb] sm:$0x1] %vm779, %v1814
    %v1819 = vsel %vm14, %v1478, %v1402
    %v1822 = vunpack.c.l.s4 1966171168
    %v1823 = vunpack.c.0.s8 %v1822
    %v1824 = vlaneseq
    %v1825 = vshrl.u32 %v1824, 7
    %v1826 = vsub.s32 %v1823, %v1825
    %v1827 = vrot.slane %v1819, %v1826
    %v1828 = vcombine.high %v1827, %v1827
    %v1830 = vunpack.c.l.s4 1966171168
    %v1831 = vunpack.c.0.s8 %v1830
    %v1832 = vlaneseq
    %v1833 = vshrl.u32 %v1832, 7
    %v1834 = vsub.s32 %v1831, %v1833
    %v1835 = vrot.slane %v1827, %v1834
    %v1837 = vunpack.c.l.s4 1966171168
    %v1838 = vunpack.c.0.s8 %v1837
    %v1839 = vlaneseq
    %v1840 = vshrl.u32 %v1839, 7
    %v1841 = vsub.s32 %v1838, %v1840
    %v1842 = vrot.slane %v1828, %v1841
    %1845 = vst.msk [vmem:[#allocation2 + $0x4] sm:$0x1] %vm779, %v1835
    %1846 = vst.msk [vmem:[#allocation2 + $0xc] sm:$0x1] %vm779, %v1842
    %v1847 = vsel %vm14, %v1554, %v1318
    %v1850 = vunpack.c.l.s4 1966171168
    %v1851 = vunpack.c.0.s8 %v1850
    %v1852 = vlaneseq
    %v1853 = vshrl.u32 %v1852, 7
    %v1854 = vsub.s32 %v1851, %v1853
    %v1855 = vrot.slane %v1847, %v1854
    %v1856 = vcombine.high %v1855, %v1855
    %v1858 = vunpack.c.l.s4 1966171168
    %v1859 = vunpack.c.0.s8 %v1858
    %v1860 = vlaneseq
    %v1861 = vshrl.u32 %v1860, 7
    %v1862 = vsub.s32 %v1859, %v1861
    %v1863 = vrot.slane %v1855, %v1862
    %v1865 = vunpack.c.l.s4 1966171168
    %v1866 = vunpack.c.0.s8 %v1865
    %v1867 = vlaneseq
    %v1868 = vshrl.u32 %v1867, 7
    %v1869 = vsub.s32 %v1866, %v1868
    %v1870 = vrot.slane %v1856, %v1869
    %1873 = vst.msk [vmem:[#allocation2 + $0x5] sm:$0x1] %vm779, %v1863
    %1874 = vst.msk [vmem:[#allocation2 + $0xd] sm:$0x1] %vm779, %v1870
    %v1875 = vsel %vm14, %v1630, %v1234
    %v1878 = vunpack.c.l.s4 1966171168
    %v1879 = vunpack.c.0.s8 %v1878
    %v1880 = vlaneseq
    %v1881 = vshrl.u32 %v1880, 7
    %v1882 = vsub.s32 %v1879, %v1881
    %v1883 = vrot.slane %v1875, %v1882
    %v1884 = vcombine.high %v1883, %v1883
    %v1886 = vunpack.c.l.s4 1966171168
    %v1887 = vunpack.c.0.s8 %v1886
    %v1888 = vlaneseq
    %v1889 = vshrl.u32 %v1888, 7
    %v1890 = vsub.s32 %v1887, %v1889
    %v1891 = vrot.slane %v1883, %v1890
    %v1893 = vunpack.c.l.s4 1966171168
    %v1894 = vunpack.c.0.s8 %v1893
    %v1895 = vlaneseq
    %v1896 = vshrl.u32 %v1895, 7
    %v1897 = vsub.s32 %v1894, %v1896
    %v1898 = vrot.slane %v1884, %v1897
    %1901 = vst.msk [vmem:[#allocation2 + $0x6] sm:$0x1] %vm779, %v1891
    %1902 = vst.msk [vmem:[#allocation2 + $0xe] sm:$0x1] %vm779, %v1898
    %v1903 = vsel %vm14, %v1706, %v1151
    %v1906 = vunpack.c.l.s4 1966171168
    %v1907 = vunpack.c.0.s8 %v1906
    %v1908 = vlaneseq
    %v1909 = vshrl.u32 %v1908, 7
    %v1910 = vsub.s32 %v1907, %v1909
    %v1911 = vrot.slane %v1903, %v1910
    %v1912 = vcombine.high %v1911, %v1911
    %v1914 = vunpack.c.l.s4 1966171168
    %v1915 = vunpack.c.0.s8 %v1914
    %v1916 = vlaneseq
    %v1917 = vshrl.u32 %v1916, 7
    %v1918 = vsub.s32 %v1915, %v1917
    %v1919 = vrot.slane %v1911, %v1918
    %v1921 = vunpack.c.l.s4 1966171168
    %v1922 = vunpack.c.0.s8 %v1921
    %v1923 = vlaneseq
    %v1924 = vshrl.u32 %v1923, 7
    %v1925 = vsub.s32 %v1922, %v1924
    %v1926 = vrot.slane %v1912, %v1925
    %1929 = vst.msk [vmem:[#allocation2 + $0x7] sm:$0x1] %vm779, %v1919
    %1930 = vst.msk [vmem:[#allocation2 + $0xf] sm:$0x1] %vm779, %v1926
    %v1931 = vld [vmem:[#allocation2] sm:$0xff]
    %v1932 = vld [vmem:[#allocation2 + $0x8] sm:$0xff]
    %v1933 = vld [vmem:[%s1 + $0x42] sm:$0xff]
    %v1934 = vld [vmem:[%s1 + $0x4a] sm:$0xff]
    %v1935 = vld [vmem:[%s1 + $0x52] sm:$0x3f]
    %v1937 = vsel %vm122, %v1931, 0
    %v1940 = vsel %vm122, %v1932, 0
    %1942 = vmatprep.subr.mxu0 0.0
    %1943 = vmatpush1.msra.mxu0 %v1933
    %1944 = vmatprep.subr.mxu0 0.0
    %1945 = vmatpush1.msra.mxu0 %v1934
    %1946 = vmatprep.subr.mxu0 0.0
    %1947 = vmatpush1.msra.mxu0 0.0
    %1948 = vmatprep.subr.mxu0 0.0
    %1949 = vmatpush1.msra.mxu0 0.0
    %1950 = vmatprep.subr.mxu0 0.0
    %1951 = vmatpush1.msra.mxu0 0.0
    %1952 = vmatprep.subr.mxu0 0.0
    %1953 = vmatpush1.msra.mxu0 0.0
    %1954 = vmatprep.subr.mxu0 0.0
    %1955 = vmatpush1.msra.mxu0 0.0
    %1956 = vmatprep.subr.mxu0 0.0
    %1957 = vmatpush1.msra.mxu0 0.0
    %1958 = vmatprep.subr.mxu0 0.0
    %1959 = vmatpush1.msra.mxu0 0.0
    %1960 = vmatprep.subr.mxu0 0.0
    %1961 = vmatpush1.msra.mxu0 0.0
    %1962 = vmatprep.subr.mxu0 0.0
    %1963 = vmatpush1.msra.mxu0 0.0
    %1964 = vmatprep.subr.mxu0 0.0
    %1965 = vmatpush1.msra.mxu0 0.0
    %1966 = vmatprep.subr.mxu0 0.0
    %1967 = vmatpush1.msra.mxu0 0.0
    %1968 = vmatprep.subr.mxu0 0.0
    %1969 = vmatpush1.msra.mxu0 0.0
    %1970 = vmatprep.subr.mxu0 0.0
    %1971 = vmatpush1.msra.mxu0 0.0
    %1972 = vmatprep.subr.mxu0 0.0
    %1973 = vmatpush1.msra.mxu0 0.0
    %1974 = vmatprep.subr.mxu0 0.0
    %1975 = vmatpush1.msra.mxu0 0.0
    %1976 = vmatprep.subr.mxu0 0.0
    %1977 = vmatpush1.msra.mxu0 0.0
    %1978 = vmatprep.subr.mxu0 0.0
    %1979 = vmatpush1.msra.mxu0 0.0
    %1980 = vmatprep.subr.mxu0 0.0
    %1981 = vmatpush1.msra.mxu0 0.0
    %1982 = vmatprep.subr.mxu0 0.0
    %1983 = vmatpush1.msra.mxu0 0.0
    %1984 = vmatprep.subr.mxu0 0.0
    %1985 = vmatpush1.msra.mxu0 0.0
    %1986 = vmatprep.subr.mxu0 0.0
    %1987 = vmatpush1.msra.mxu0 0.0
    %1988 = vmatprep.subr.mxu0 0.0
    %1989 = vmatpush1.msra.mxu0 0.0
    %1990 = vmatprep.subr.mxu0 0.0
    %1991 = vmatpush1.msra.mxu0 0.0
    %1992 = vmatprep.subr.mxu0 0.0
    %1993 = vmatpush1.msra.mxu0 0.0
    %1994 = vmatprep.subr.mxu0 0.0
    %1995 = vmatpush1.msra.mxu0 0.0
    %1996 = vmatprep.subr.mxu0 0.0
    %1997 = vmatpush1.msra.mxu0 0.0
    %1998 = vmatprep.subr.mxu0 0.0
    %1999 = vmatpush1.msra.mxu0 0.0
    %2000 = vmatprep.subr.mxu0 0.0
    %2001 = vmatpush1.msra.mxu0 0.0
    %2002 = vmatprep.subr.mxu0 0.0
    %2003 = vmatpush1.msra.mxu0 0.0
    %2004 = vmatprep.subr.mxu0 0.0
    %2005 = vmatpush1.msra.mxu0 0.0
    %2006 = vmatprep.mubr.f32.mxu0 0.0
    %2007 = vmatmul.mubr.f32.gmra.mrb[0].mxu0 %v1937
    %v2008 = vpop.f32.mrb[0].mxu0
    %v2009 = vadd.f32 0.0, %v2008
    %v2010 = vpop.f32.mrb[0].mxu0
    %2011 = vmatprep.mubr.f32.mxu0 0.0
    %2012 = vmatmul.mubr.f32.gmra.mrb[0].mxu0 %v1940
    %v2013 = vpop.f32.mrb[0].mxu0
    %v2014 = vadd.f32 0.0, %v2013
    %v2015 = vpop.f32.mrb[0].mxu0
    %2016 = vdwg.mxu0
    %v2017 = vtanh.pop %v2009
    %v2018 = vtanh.pop %v2014
    %vm2019 = vcmask 48128
    %v2021 = vsel %vm2019, %v2017, 0
    %v2024 = vsel %vm2019, %v2018, 0
    %vm2026 = vcmask 1045504
    %v2028 = vsel %vm2026, %v1935, 0
    %2030 = vmatprep.subr.mxu0 0.0
    %2031 = vmatpush1.msra.mxu0 %v2028
    %2032 = vmatprep.subr.mxu0 0.0
    %2033 = vmatpush1.msra.mxu0 0.0
    %2034 = vmatprep.subr.mxu0 0.0
    %2035 = vmatpush1.msra.mxu0 0.0
    %2036 = vmatprep.subr.mxu0 0.0
    %2037 = vmatpush1.msra.mxu0 0.0
    %2038 = vmatprep.subr.mxu0 0.0
    %2039 = vmatpush1.msra.mxu0 0.0
    %2040 = vmatprep.subr.mxu0 0.0
    %2041 = vmatpush1.msra.mxu0 0.0
    %2042 = vmatprep.subr.mxu0 0.0
    %2043 = vmatpush1.msra.mxu0 0.0
    %2044 = vmatprep.subr.mxu0 0.0
    %2045 = vmatpush1.msra.mxu0 0.0
    %2046 = vmatprep.subr.mxu0 0.0
    %2047 = vmatpush1.msra.mxu0 0.0
    %2048 = vmatprep.subr.mxu0 0.0
    %2049 = vmatpush1.msra.mxu0 0.0
    %2050 = vmatprep.subr.mxu0 0.0
    %2051 = vmatpush1.msra.mxu0 0.0
    %2052 = vmatprep.subr.mxu0 0.0
    %2053 = vmatpush1.msra.mxu0 0.0
    %2054 = vmatprep.subr.mxu0 0.0
    %2055 = vmatpush1.msra.mxu0 0.0
    %2056 = vmatprep.subr.mxu0 0.0
    %2057 = vmatpush1.msra.mxu0 0.0
    %2058 = vmatprep.subr.mxu0 0.0
    %2059 = vmatpush1.msra.mxu0 0.0
    %2060 = vmatprep.subr.mxu0 0.0
    %2061 = vmatpush1.msra.mxu0 0.0
    %2062 = vmatprep.subr.mxu0 0.0
    %2063 = vmatpush1.msra.mxu0 0.0
    %2064 = vmatprep.subr.mxu0 0.0
    %2065 = vmatpush1.msra.mxu0 0.0
    %2066 = vmatprep.subr.mxu0 0.0
    %2067 = vmatpush1.msra.mxu0 0.0
    %2068 = vmatprep.subr.mxu0 0.0
    %2069 = vmatpush1.msra.mxu0 0.0
    %2070 = vmatprep.subr.mxu0 0.0
    %2071 = vmatpush1.msra.mxu0 0.0
    %2072 = vmatprep.subr.mxu0 0.0
    %2073 = vmatpush1.msra.mxu0 0.0
    %2074 = vmatprep.subr.mxu0 0.0
    %2075 = vmatpush1.msra.mxu0 0.0
    %2076 = vmatprep.subr.mxu0 0.0
    %2077 = vmatpush1.msra.mxu0 0.0
    %2078 = vmatprep.subr.mxu0 0.0
    %2079 = vmatpush1.msra.mxu0 0.0
    %2080 = vmatprep.subr.mxu0 0.0
    %2081 = vmatpush1.msra.mxu0 0.0
    %2082 = vmatprep.subr.mxu0 0.0
    %2083 = vmatpush1.msra.mxu0 0.0
    %2084 = vmatprep.subr.mxu0 0.0
    %2085 = vmatpush1.msra.mxu0 0.0
    %2086 = vmatprep.subr.mxu0 0.0
    %2087 = vmatpush1.msra.mxu0 0.0
    %2088 = vmatprep.subr.mxu0 0.0
    %2089 = vmatpush1.msra.mxu0 0.0
    %2090 = vmatprep.subr.mxu0 0.0
    %2091 = vmatpush1.msra.mxu0 0.0
    %2092 = vmatprep.subr.mxu0 0.0
    %2093 = vmatpush1.msra.mxu0 0.0
    %2094 = vmatprep.mubr.f32.mxu0 0.0
    %2095 = vmatmul.mubr.f32.gmra.mrb[0].mxu0 %v2021
    %v2096 = vpop.f32.mrb[0].mxu0
    %v2097 = vadd.f32 0.0, %v2096
    %v2098 = vpop.f32.mrb[0].mxu0
    %2099 = vmatprep.mubr.f32.mxu0 0.0
    %2100 = vmatmul.mubr.f32.gmra.mrb[0].mxu0 %v2024
    %v2101 = vpop.f32.mrb[0].mxu0
    %v2102 = vadd.f32 0.0, %v2101
    %v2103 = vpop.f32.mrb[0].mxu0
    %2104 = vdwg.mxu0
    %v2107 = vrot.slane %v2097, 1
    %v2108 = vrot.slane %v2102, 1
    %v2111 = vmax.f32 %v2097, %v2107
    %v2112 = vmax.f32 %v2102, %v2108
    %v2113 = vrot.slane %v2097, 2
    %v2114 = vrot.slane %v2102, 2
    %v2117 = vmax.f32 %v2111, %v2113
    %v2118 = vmax.f32 %v2112, %v2114
    %v2119 = vrot.slane %v2097, 3
    %v2120 = vrot.slane %v2102, 3
    %v2123 = vmax.f32 %v2117, %v2119
    %v2124 = vmax.f32 %v2118, %v2120
    %v2125 = vrot.slane %v2097, 4
    %v2126 = vrot.slane %v2102, 4
    %v2129 = vmax.f32 %v2123, %v2125
    %v2130 = vmax.f32 %v2124, %v2126
    %v2131 = vrot.slane %v2097, 5
    %v2132 = vrot.slane %v2102, 5
    %v2135 = vmax.f32 %v2129, %v2131
    %v2136 = vmax.f32 %v2130, %v2132
    %v2137 = vrot.slane %v2097, 6
    %v2138 = vrot.slane %v2102, 6
    %v2141 = vmax.f32 %v2135, %v2137
    %v2142 = vmax.f32 %v2136, %v2138
    %v2143 = vrot.slane %v2097, 7
    %v2144 = vrot.slane %v2102, 7
    %v2147 = vmax.f32 %v2141, %v2143
    %v2148 = vmax.f32 %v2142, %v2144
    %v2149 = vsub.f32 %v2097, %v2147
    %v2150 = vsub.f32 %v2102, %v2148
    %v2151 = vmul.f32 %v2149, 1.442695
    %v2152 = vpow.pop %v2151
    %v2153 = vmul.f32 %v2150, 1.442695
    %v2154 = vpow.pop %v2153
    %v2157 = vrot.slane %v2147, 7
    %v2158 = vrot.slane %v2148, 7
    %v2161 = vsub.f32 %v2097, %v2157
    %v2162 = vsub.f32 %v2102, %v2158
    %v2163 = vmul.f32 %v2161, 1.442695
    %v2164 = vpow.pop %v2163
    %v2165 = vmul.f32 %v2162, 1.442695
    %v2166 = vpow.pop %v2165
    %v2167 = vrot.slane %v2147, 6
    %v2168 = vrot.slane %v2148, 6
    %v2171 = vsub.f32 %v2097, %v2167
    %v2172 = vsub.f32 %v2102, %v2168
    %v2173 = vmul.f32 %v2171, 1.442695
    %v2174 = vpow.pop %v2173
    %v2175 = vmul.f32 %v2172, 1.442695
    %v2176 = vpow.pop %v2175
    %v2177 = vrot.slane %v2147, 5
    %v2178 = vrot.slane %v2148, 5
    %v2181 = vsub.f32 %v2097, %v2177
    %v2182 = vsub.f32 %v2102, %v2178
    %v2183 = vmul.f32 %v2181, 1.442695
    %v2184 = vpow.pop %v2183
    %v2185 = vmul.f32 %v2182, 1.442695
    %v2186 = vpow.pop %v2185
    %v2187 = vrot.slane %v2147, 4
    %v2188 = vrot.slane %v2148, 4
    %v2191 = vsub.f32 %v2097, %v2187
    %v2192 = vsub.f32 %v2102, %v2188
    %v2193 = vmul.f32 %v2191, 1.442695
    %v2194 = vpow.pop %v2193
    %v2195 = vmul.f32 %v2192, 1.442695
    %v2196 = vpow.pop %v2195
    %v2197 = vrot.slane %v2147, 3
    %v2198 = vrot.slane %v2148, 3
    %v2201 = vsub.f32 %v2097, %v2197
    %v2202 = vsub.f32 %v2102, %v2198
    %v2203 = vmul.f32 %v2201, 1.442695
    %v2204 = vpow.pop %v2203
    %v2205 = vmul.f32 %v2202, 1.442695
    %v2206 = vpow.pop %v2205
    %v2207 = vrot.slane %v2147, 2
    %v2208 = vrot.slane %v2148, 2
    %v2211 = vsub.f32 %v2097, %v2207
    %v2212 = vsub.f32 %v2102, %v2208
    %v2213 = vmul.f32 %v2211, 1.442695
    %v2214 = vpow.pop %v2213
    %v2215 = vmul.f32 %v2212, 1.442695
    %v2216 = vpow.pop %v2215
    %v2217 = vrot.slane %v2147, 1
    %v2218 = vrot.slane %v2148, 1
    %v2221 = vsub.f32 %v2097, %v2217
    %v2222 = vsub.f32 %v2102, %v2218
    %v2223 = vmul.f32 %v2221, 1.442695
    %v2224 = vpow.pop %v2223
    %v2225 = vmul.f32 %v2222, 1.442695
    %v2226 = vpow.pop %v2225
    %v2229 = vrot.slane %v2164, 1
    %v2230 = vrot.slane %v2166, 1
    %v2233 = vadd.f32 %v2152, %v2229
    %v2234 = vadd.f32 %v2154, %v2230
    %v2237 = vrot.slane %v2174, 2
    %v2238 = vrot.slane %v2176, 2
    %v2241 = vadd.f32 %v2233, %v2237
    %v2242 = vadd.f32 %v2234, %v2238
    %v2245 = vrot.slane %v2184, 3
    %v2246 = vrot.slane %v2186, 3
    %v2249 = vadd.f32 %v2241, %v2245
    %v2250 = vadd.f32 %v2242, %v2246
    %v2253 = vrot.slane %v2194, 4
    %v2254 = vrot.slane %v2196, 4
    %v2257 = vadd.f32 %v2249, %v2253
    %v2258 = vadd.f32 %v2250, %v2254
    %v2261 = vrot.slane %v2204, 5
    %v2262 = vrot.slane %v2206, 5
    %v2265 = vadd.f32 %v2257, %v2261
    %v2266 = vadd.f32 %v2258, %v2262
    %v2269 = vrot.slane %v2214, 6
    %v2270 = vrot.slane %v2216, 6
    %v2273 = vadd.f32 %v2265, %v2269
    %v2274 = vadd.f32 %v2266, %v2270
    %v2277 = vrot.slane %v2224, 7
    %v2278 = vrot.slane %v2226, 7
    %v2281 = vadd.f32 %v2273, %v2277
    %v2282 = vadd.f32 %v2274, %v2278
    %v2283 = vrcp.pop %v2281
    %v2284 = vmul.f32 1.0, %v2283
    %v2285 = vrcp.pop %v2282
    %v2286 = vmul.f32 1.0, %v2285
    %v2287 = vld [vmem:[%s1 + $0x88] sm:$0x1]
    %2289 = vset.pattern.permute.xlu0 0
    %2290 = vperm.xlu0 %2289, %v2152
    %v2291 = vpop.permute.xlu0 %2290
    %2294 = vset.pattern.permute.xlu0 0
    %2295 = vperm.xlu0 %2294, %v2154
    %v2296 = vpop.permute.xlu0 %2295
    %v2298 = vmul.f32 %v2291, %v1931
    %v2299 = vmul.f32 %v2296, %v1932
    %2300 = vset.pattern.permute.xlu0 0
    %2301 = vperm.xlu0 %2300, %v2164
    %v2302 = vpop.permute.xlu0 %2301
    %2304 = vset.pattern.permute.xlu0 0
    %2305 = vperm.xlu0 %2304, %v2166
    %v2306 = vpop.permute.xlu0 %2305
    %v2308 = vmul.f32 %v2302, %v1931
    %v2309 = vmul.f32 %v2306, %v1932
    %v2312 = vrot.slane %v2308, 1
    %v2313 = vrot.slane %v2309, 1
    %v2316 = vadd.f32 %v2298, %v2312
    %v2317 = vadd.f32 %v2299, %v2313
    %2318 = vset.pattern.permute.xlu0 0
    %2319 = vperm.xlu0 %2318, %v2174
    %v2320 = vpop.permute.xlu0 %2319
    %2322 = vset.pattern.permute.xlu0 0
    %2323 = vperm.xlu0 %2322, %v2176
    %v2324 = vpop.permute.xlu0 %2323
    %v2326 = vmul.f32 %v2320, %v1931
    %v2327 = vmul.f32 %v2324, %v1932
    %v2330 = vrot.slane %v2326, 2
    %v2331 = vrot.slane %v2327, 2
    %v2334 = vadd.f32 %v2316, %v2330
    %v2335 = vadd.f32 %v2317, %v2331
    %2336 = vset.pattern.permute.xlu0 0
    %2337 = vperm.xlu0 %2336, %v2184
    %v2338 = vpop.permute.xlu0 %2337
    %2340 = vset.pattern.permute.xlu0 0
    %2341 = vperm.xlu0 %2340, %v2186
    %v2342 = vpop.permute.xlu0 %2341
    %v2344 = vmul.f32 %v2338, %v1931
    %v2345 = vmul.f32 %v2342, %v1932
    %v2348 = vrot.slane %v2344, 3
    %v2349 = vrot.slane %v2345, 3
    %v2352 = vadd.f32 %v2334, %v2348
    %v2353 = vadd.f32 %v2335, %v2349
    %2354 = vset.pattern.permute.xlu0 0
    %2355 = vperm.xlu0 %2354, %v2194
    %v2356 = vpop.permute.xlu0 %2355
    %2358 = vset.pattern.permute.xlu0 0
    %2359 = vperm.xlu0 %2358, %v2196
    %v2360 = vpop.permute.xlu0 %2359
    %v2362 = vmul.f32 %v2356, %v1931
    %v2363 = vmul.f32 %v2360, %v1932
    %v2366 = vrot.slane %v2362, 4
    %v2367 = vrot.slane %v2363, 4
    %v2370 = vadd.f32 %v2352, %v2366
    %v2371 = vadd.f32 %v2353, %v2367
    %2372 = vset.pattern.permute.xlu0 0
    %2373 = vperm.xlu0 %2372, %v2204
    %v2374 = vpop.permute.xlu0 %2373
    %2376 = vset.pattern.permute.xlu0 0
    %2377 = vperm.xlu0 %2376, %v2206
    %v2378 = vpop.permute.xlu0 %2377
    %v2380 = vmul.f32 %v2374, %v1931
    %v2381 = vmul.f32 %v2378, %v1932
    %v2384 = vrot.slane %v2380, 5
    %v2385 = vrot.slane %v2381, 5
    %v2388 = vadd.f32 %v2370, %v2384
    %v2389 = vadd.f32 %v2371, %v2385
    %2390 = vset.pattern.permute.xlu0 0
    %2391 = vperm.xlu0 %2390, %v2214
    %v2392 = vpop.permute.xlu0 %2391
    %2394 = vset.pattern.permute.xlu0 0
    %2395 = vperm.xlu0 %2394, %v2216
    %v2396 = vpop.permute.xlu0 %2395
    %v2398 = vmul.f32 %v2392, %v1931
    %v2399 = vmul.f32 %v2396, %v1932
    %v2402 = vrot.slane %v2398, 6
    %v2403 = vrot.slane %v2399, 6
    %v2406 = vadd.f32 %v2388, %v2402
    %v2407 = vadd.f32 %v2389, %v2403
    %2408 = vset.pattern.permute.xlu0 0
    %2409 = vperm.xlu0 %2408, %v2224
    %v2410 = vpop.permute.xlu0 %2409
    %2412 = vset.pattern.permute.xlu0 0
    %2413 = vperm.xlu0 %2412, %v2226
    %v2414 = vpop.permute.xlu0 %2413
    %v2416 = vmul.f32 %v2410, %v1931
    %v2417 = vmul.f32 %v2414, %v1932
    %v2420 = vrot.slane %v2416, 7
    %v2421 = vrot.slane %v2417, 7
    %v2424 = vadd.f32 %v2406, %v2420
    %v2425 = vadd.f32 %v2407, %v2421
    %2427 = vset.pattern.permute.xlu0 0
    %2428 = vperm.xlu0 %2427, %v2284
    %v2429 = vpop.permute.xlu0 %2428
    %2432 = vset.pattern.permute.xlu0 0
    %2433 = vperm.xlu0 %2432, %v2286
    %v2434 = vpop.permute.xlu0 %2433
    %v2436 = vmul.f32 %v2429, %v2424
    %v2437 = vmul.f32 %v2434, %v2425
    %v2438 = vld [vmem:[%s1 + $0x58] sm:$0xff]
    %v2439 = vld [vmem:[%s1 + $0x60] sm:$0xff]
    %2440 = vset.pattern.permute.xlu0 1
    %2441 = vperm.xlu0 %2440, %v2152
    %v2442 = vpop.permute.xlu0 %2441
    %2444 = vset.pattern.permute.xlu0 1
    %2445 = vperm.xlu0 %2444, %v2154
    %v2446 = vpop.permute.xlu0 %2445
    %v2448 = vmul.f32 %v2442, %v1931
    %v2449 = vmul.f32 %v2446, %v1932
    %2450 = vset.pattern.permute.xlu0 1
    %2451 = vperm.xlu0 %2450, %v2164
    %v2452 = vpop.permute.xlu0 %2451
    %2454 = vset.pattern.permute.xlu0 1
    %2455 = vperm.xlu0 %2454, %v2166
    %v2456 = vpop.permute.xlu0 %2455
    %v2458 = vmul.f32 %v2452, %v1931
    %v2459 = vmul.f32 %v2456, %v1932
    %v2462 = vrot.slane %v2458, 1
    %v2463 = vrot.slane %v2459, 1
    %v2466 = vadd.f32 %v2448, %v2462
    %v2467 = vadd.f32 %v2449, %v2463
    %2468 = vset.pattern.permute.xlu0 1
    %2469 = vperm.xlu0 %2468, %v2174
    %v2470 = vpop.permute.xlu0 %2469
    %2472 = vset.pattern.permute.xlu0 1
    %2473 = vperm.xlu0 %2472, %v2176
    %v2474 = vpop.permute.xlu0 %2473
    %v2476 = vmul.f32 %v2470, %v1931
    %v2477 = vmul.f32 %v2474, %v1932
    %v2480 = vrot.slane %v2476, 2
    %v2481 = vrot.slane %v2477, 2
    %v2484 = vadd.f32 %v2466, %v2480
    %v2485 = vadd.f32 %v2467, %v2481
    %2486 = vset.pattern.permute.xlu0 1
    %2487 = vperm.xlu0 %2486, %v2184
    %v2488 = vpop.permute.xlu0 %2487
    %2490 = vset.pattern.permute.xlu0 1
    %2491 = vperm.xlu0 %2490, %v2186
    %v2492 = vpop.permute.xlu0 %2491
    %v2494 = vmul.f32 %v2488, %v1931
    %v2495 = vmul.f32 %v2492, %v1932
    %v2498 = vrot.slane %v2494, 3
    %v2499 = vrot.slane %v2495, 3
    %v2502 = vadd.f32 %v2484, %v2498
    %v2503 = vadd.f32 %v2485, %v2499
    %2504 = vset.pattern.permute.xlu0 1
    %2505 = vperm.xlu0 %2504, %v2194
    %v2506 = vpop.permute.xlu0 %2505
    %2508 = vset.pattern.permute.xlu0 1
    %2509 = vperm.xlu0 %2508, %v2196
    %v2510 = vpop.permute.xlu0 %2509
    %v2512 = vmul.f32 %v2506, %v1931
    %v2513 = vmul.f32 %v2510, %v1932
    %v2516 = vrot.slane %v2512, 4
    %v2517 = vrot.slane %v2513, 4
    %v2520 = vadd.f32 %v2502, %v2516
    %v2521 = vadd.f32 %v2503, %v2517
    %2522 = vset.pattern.permute.xlu0 1
    %2523 = vperm.xlu0 %2522, %v2204
    %v2524 = vpop.permute.xlu0 %2523
    %2526 = vset.pattern.permute.xlu0 1
    %2527 = vperm.xlu0 %2526, %v2206
    %v2528 = vpop.permute.xlu0 %2527
    %v2530 = vmul.f32 %v2524, %v1931
    %v2531 = vmul.f32 %v2528, %v1932
    %v2534 = vrot.slane %v2530, 5
    %v2535 = vrot.slane %v2531, 5
    %v2538 = vadd.f32 %v2520, %v2534
    %v2539 = vadd.f32 %v2521, %v2535
    %2540 = vset.pattern.permute.xlu0 1
    %2541 = vperm.xlu0 %2540, %v2214
    %v2542 = vpop.permute.xlu0 %2541
    %2544 = vset.pattern.permute.xlu0 1
    %2545 = vperm.xlu0 %2544, %v2216
    %v2546 = vpop.permute.xlu0 %2545
    %v2548 = vmul.f32 %v2542, %v1931
    %v2549 = vmul.f32 %v2546, %v1932
    %v2552 = vrot.slane %v2548, 6
    %v2553 = vrot.slane %v2549, 6
    %v2556 = vadd.f32 %v2538, %v2552
    %v2557 = vadd.f32 %v2539, %v2553
    %2558 = vset.pattern.permute.xlu0 1
    %2559 = vperm.xlu0 %2558, %v2224
    %v2560 = vpop.permute.xlu0 %2559
    %2562 = vset.pattern.permute.xlu0 1
    %2563 = vperm.xlu0 %2562, %v2226
    %v2564 = vpop.permute.xlu0 %2563
    %v2566 = vmul.f32 %v2560, %v1931
    %v2567 = vmul.f32 %v2564, %v1932
    %v2570 = vrot.slane %v2566, 7
    %v2571 = vrot.slane %v2567, 7
    %v2574 = vadd.f32 %v2556, %v2570
    %v2575 = vadd.f32 %v2557, %v2571
    %2576 = vset.pattern.permute.xlu0 1
    %2577 = vperm.xlu0 %2576, %v2284
    %v2578 = vpop.permute.xlu0 %2577
    %2580 = vset.pattern.permute.xlu0 1
    %2581 = vperm.xlu0 %2580, %v2286
    %v2582 = vpop.permute.xlu0 %2581
    %v2584 = vmul.f32 %v2578, %v2574
    %v2585 = vmul.f32 %v2582, %v2575
    %v2586 = vld [vmem:[%s1 + $0x68] sm:$0xff]
    %v2587 = vld [vmem:[%s1 + $0x70] sm:$0xff]
    %v2590 = vrot.slane %v2585, 7
    %v2591 = vsel %vm114, %v2590, %v2584
    %v2592 = vsel %vm122, %v2591, 0
    %2594 = vmatprep.subr.mxu0 0.0
    %2595 = vmatpush1.msra.mxu0 %v2586
    %2596 = vmatprep.subr.mxu0 0.0
    %2597 = vmatpush1.msra.mxu0 %v2587
    %2598 = vmatprep.subr.mxu0 0.0
    %2599 = vmatpush1.msra.mxu0 0.0
    %2600 = vmatprep.subr.mxu0 0.0
    %2601 = vmatpush1.msra.mxu0 0.0
    %2602 = vmatprep.subr.mxu0 0.0
    %2603 = vmatpush1.msra.mxu0 0.0
    %2604 = vmatprep.subr.mxu0 0.0
    %2605 = vmatpush1.msra.mxu0 0.0
    %2606 = vmatprep.subr.mxu0 0.0
    %2607 = vmatpush1.msra.mxu0 0.0
    %2608 = vmatprep.subr.mxu0 0.0
    %2609 = vmatpush1.msra.mxu0 0.0
    %2610 = vmatprep.subr.mxu0 0.0
    %2611 = vmatpush1.msra.mxu0 0.0
    %2612 = vmatprep.subr.mxu0 0.0
    %2613 = vmatpush1.msra.mxu0 0.0
    %2614 = vmatprep.subr.mxu0 0.0
    %2615 = vmatpush1.msra.mxu0 0.0
    %2616 = vmatprep.subr.mxu0 0.0
    %2617 = vmatpush1.msra.mxu0 0.0
    %2618 = vmatprep.subr.mxu0 0.0
    %2619 = vmatpush1.msra.mxu0 0.0
    %2620 = vmatprep.subr.mxu0 0.0
    %2621 = vmatpush1.msra.mxu0 0.0
    %2622 = vmatprep.subr.mxu0 0.0
    %2623 = vmatpush1.msra.mxu0 0.0
    %2624 = vmatprep.subr.mxu0 0.0
    %2625 = vmatpush1.msra.mxu0 0.0
    %2626 = vmatprep.subr.mxu0 0.0
    %2627 = vmatpush1.msra.mxu0 0.0
    %2628 = vmatprep.subr.mxu0 0.0
    %2629 = vmatpush1.msra.mxu0 0.0
    %2630 = vmatprep.subr.mxu0 0.0
    %2631 = vmatpush1.msra.mxu0 0.0
    %2632 = vmatprep.subr.mxu0 0.0
    %2633 = vmatpush1.msra.mxu0 0.0
    %2634 = vmatprep.subr.mxu0 0.0
    %2635 = vmatpush1.msra.mxu0 0.0
    %2636 = vmatprep.subr.mxu0 0.0
    %2637 = vmatpush1.msra.mxu0 0.0
    %2638 = vmatprep.subr.mxu0 0.0
    %2639 = vmatpush1.msra.mxu0 0.0
    %2640 = vmatprep.subr.mxu0 0.0
    %2641 = vmatpush1.msra.mxu0 0.0
    %2642 = vmatprep.subr.mxu0 0.0
    %2643 = vmatpush1.msra.mxu0 0.0
    %2644 = vmatprep.subr.mxu0 0.0
    %2645 = vmatpush1.msra.mxu0 0.0
    %2646 = vmatprep.subr.mxu0 0.0
    %2647 = vmatpush1.msra.mxu0 0.0
    %2648 = vmatprep.subr.mxu0 0.0
    %2649 = vmatpush1.msra.mxu0 0.0
    %2650 = vmatprep.subr.mxu0 0.0
    %2651 = vmatpush1.msra.mxu0 0.0
    %2652 = vmatprep.subr.mxu0 0.0
    %2653 = vmatpush1.msra.mxu0 0.0
    %2654 = vmatprep.subr.mxu0 0.0
    %2655 = vmatpush1.msra.mxu0 0.0
    %2656 = vmatprep.subr.mxu0 0.0
    %2657 = vmatpush1.msra.mxu0 0.0
    %2658 = vmatprep.mubr.f32.mxu0 0.0
    %2659 = vmatmul.mubr.f32.gmra.mrb[0].mxu0 %v2592
    %v2660 = vpop.f32.mrb[0].mxu0
    %v2661 = vadd.f32 0.0, %v2660
    %v2662 = vpop.f32.mrb[0].mxu0
    %2663 = vdwg.mxu0
    %v2666 = vrot.slane %v2437, 7
    %v2667 = vsel %vm114, %v2666, %v2436
    %v2668 = vsel %vm122, %v2667, 0
    %2670 = vmatprep.subr.mxu0 0.0
    %2671 = vmatpush1.msra.mxu0 %v2438
    %2672 = vmatprep.subr.mxu0 0.0
    %2673 = vmatpush1.msra.mxu0 %v2439
    %2674 = vmatprep.subr.mxu0 0.0
    %2675 = vmatpush1.msra.mxu0 0.0
    %2676 = vmatprep.subr.mxu0 0.0
    %2677 = vmatpush1.msra.mxu0 0.0
    %2678 = vmatprep.subr.mxu0 0.0
    %2679 = vmatpush1.msra.mxu0 0.0
    %2680 = vmatprep.subr.mxu0 0.0
    %2681 = vmatpush1.msra.mxu0 0.0
    %2682 = vmatprep.subr.mxu0 0.0
    %2683 = vmatpush1.msra.mxu0 0.0
    %2684 = vmatprep.subr.mxu0 0.0
    %2685 = vmatpush1.msra.mxu0 0.0
    %2686 = vmatprep.subr.mxu0 0.0
    %2687 = vmatpush1.msra.mxu0 0.0
    %2688 = vmatprep.subr.mxu0 0.0
    %2689 = vmatpush1.msra.mxu0 0.0
    %2690 = vmatprep.subr.mxu0 0.0
    %2691 = vmatpush1.msra.mxu0 0.0
    %2692 = vmatprep.subr.mxu0 0.0
    %2693 = vmatpush1.msra.mxu0 0.0
    %2694 = vmatprep.subr.mxu0 0.0
    %2695 = vmatpush1.msra.mxu0 0.0
    %2696 = vmatprep.subr.mxu0 0.0
    %2697 = vmatpush1.msra.mxu0 0.0
    %2698 = vmatprep.subr.mxu0 0.0
    %2699 = vmatpush1.msra.mxu0 0.0
    %2700 = vmatprep.subr.mxu0 0.0
    %2701 = vmatpush1.msra.mxu0 0.0
    %2702 = vmatprep.subr.mxu0 0.0
    %2703 = vmatpush1.msra.mxu0 0.0
    %2704 = vmatprep.subr.mxu0 0.0
    %2705 = vmatpush1.msra.mxu0 0.0
    %2706 = vmatprep.subr.mxu0 0.0
    %2707 = vmatpush1.msra.mxu0 0.0
    %2708 = vmatprep.subr.mxu0 0.0
    %2709 = vmatpush1.msra.mxu0 0.0
    %2710 = vmatprep.subr.mxu0 0.0
    %2711 = vmatpush1.msra.mxu0 0.0
    %2712 = vmatprep.subr.mxu0 0.0
    %2713 = vmatpush1.msra.mxu0 0.0
    %2714 = vmatprep.subr.mxu0 0.0
    %2715 = vmatpush1.msra.mxu0 0.0
    %2716 = vmatprep.subr.mxu0 0.0
    %2717 = vmatpush1.msra.mxu0 0.0
    %2718 = vmatprep.subr.mxu0 0.0
    %2719 = vmatpush1.msra.mxu0 0.0
    %2720 = vmatprep.subr.mxu0 0.0
    %2721 = vmatpush1.msra.mxu0 0.0
    %2722 = vmatprep.subr.mxu0 0.0
    %2723 = vmatpush1.msra.mxu0 0.0
    %2724 = vmatprep.subr.mxu0 0.0
    %2725 = vmatpush1.msra.mxu0 0.0
    %2726 = vmatprep.subr.mxu0 0.0
    %2727 = vmatpush1.msra.mxu0 0.0
    %2728 = vmatprep.subr.mxu0 0.0
    %2729 = vmatpush1.msra.mxu0 0.0
    %2730 = vmatprep.subr.mxu0 0.0
    %2731 = vmatpush1.msra.mxu0 0.0
    %2732 = vmatprep.subr.mxu0 0.0
    %2733 = vmatpush1.msra.mxu0 0.0
    %2734 = vmatprep.mubr.f32.mxu0 0.0
    %2735 = vmatmul.mubr.f32.gmra.mrb[0].mxu0 %v2668
    %v2736 = vpop.f32.mrb[0].mxu0
    %v2737 = vadd.f32 %v2661, %v2736
    %v2738 = vpop.f32.mrb[0].mxu0
    %2739 = vdwg.mxu0
    %2740 = vset.pattern.permute.xlu0 2
    %2741 = vperm.xlu0 %2740, %v2152
    %v2742 = vpop.permute.xlu0 %2741
    %2744 = vset.pattern.permute.xlu0 2
    %2745 = vperm.xlu0 %2744, %v2154
    %v2746 = vpop.permute.xlu0 %2745
    %v2748 = vmul.f32 %v2742, %v1931
    %v2749 = vmul.f32 %v2746, %v1932
    %2750 = vset.pattern.permute.xlu0 2
    %2751 = vperm.xlu0 %2750, %v2164
    %v2752 = vpop.permute.xlu0 %2751
    %2754 = vset.pattern.permute.xlu0 2
    %2755 = vperm.xlu0 %2754, %v2166
    %v2756 = vpop.permute.xlu0 %2755
    %v2758 = vmul.f32 %v2752, %v1931
    %v2759 = vmul.f32 %v2756, %v1932
    %v2762 = vrot.slane %v2758, 1
    %v2763 = vrot.slane %v2759, 1
    %v2766 = vadd.f32 %v2748, %v2762
    %v2767 = vadd.f32 %v2749, %v2763
    %2768 = vset.pattern.permute.xlu0 2
    %2769 = vperm.xlu0 %2768, %v2174
    %v2770 = vpop.permute.xlu0 %2769
    %2772 = vset.pattern.permute.xlu0 2
    %2773 = vperm.xlu0 %2772, %v2176
    %v2774 = vpop.permute.xlu0 %2773
    %v2776 = vmul.f32 %v2770, %v1931
    %v2777 = vmul.f32 %v2774, %v1932
    %v2780 = vrot.slane %v2776, 2
    %v2781 = vrot.slane %v2777, 2
    %v2784 = vadd.f32 %v2766, %v2780
    %v2785 = vadd.f32 %v2767, %v2781
    %2786 = vset.pattern.permute.xlu0 2
    %2787 = vperm.xlu0 %2786, %v2184
    %v2788 = vpop.permute.xlu0 %2787
    %2790 = vset.pattern.permute.xlu0 2
    %2791 = vperm.xlu0 %2790, %v2186
    %v2792 = vpop.permute.xlu0 %2791
    %v2794 = vmul.f32 %v2788, %v1931
    %v2795 = vmul.f32 %v2792, %v1932
    %v2798 = vrot.slane %v2794, 3
    %v2799 = vrot.slane %v2795, 3
    %v2802 = vadd.f32 %v2784, %v2798
    %v2803 = vadd.f32 %v2785, %v2799
    %2804 = vset.pattern.permute.xlu0 2
    %2805 = vperm.xlu0 %2804, %v2194
    %v2806 = vpop.permute.xlu0 %2805
    %2808 = vset.pattern.permute.xlu0 2
    %2809 = vperm.xlu0 %2808, %v2196
    %v2810 = vpop.permute.xlu0 %2809
    %v2812 = vmul.f32 %v2806, %v1931
    %v2813 = vmul.f32 %v2810, %v1932
    %v2816 = vrot.slane %v2812, 4
    %v2817 = vrot.slane %v2813, 4
    %v2820 = vadd.f32 %v2802, %v2816
    %v2821 = vadd.f32 %v2803, %v2817
    %2822 = vset.pattern.permute.xlu0 2
    %2823 = vperm.xlu0 %2822, %v2204
    %v2824 = vpop.permute.xlu0 %2823
    %2826 = vset.pattern.permute.xlu0 2
    %2827 = vperm.xlu0 %2826, %v2206
    %v2828 = vpop.permute.xlu0 %2827
    %v2830 = vmul.f32 %v2824, %v1931
    %v2831 = vmul.f32 %v2828, %v1932
    %v2834 = vrot.slane %v2830, 5
    %v2835 = vrot.slane %v2831, 5
    %v2838 = vadd.f32 %v2820, %v2834
    %v2839 = vadd.f32 %v2821, %v2835
    %2840 = vset.pattern.permute.xlu0 2
    %2841 = vperm.xlu0 %2840, %v2214
    %v2842 = vpop.permute.xlu0 %2841
    %2844 = vset.pattern.permute.xlu0 2
    %2845 = vperm.xlu0 %2844, %v2216
    %v2846 = vpop.permute.xlu0 %2845
    %v2848 = vmul.f32 %v2842, %v1931
    %v2849 = vmul.f32 %v2846, %v1932
    %v2852 = vrot.slane %v2848, 6
    %v2853 = vrot.slane %v2849, 6
    %v2856 = vadd.f32 %v2838, %v2852
    %v2857 = vadd.f32 %v2839, %v2853
    %2858 = vset.pattern.permute.xlu0 2
    %2859 = vperm.xlu0 %2858, %v2224
    %v2860 = vpop.permute.xlu0 %2859
    %2862 = vset.pattern.permute.xlu0 2
    %2863 = vperm.xlu0 %2862, %v2226
    %v2864 = vpop.permute.xlu0 %2863
    %v2866 = vmul.f32 %v2860, %v1931
    %v2867 = vmul.f32 %v2864, %v1932
    %v2870 = vrot.slane %v2866, 7
    %v2871 = vrot.slane %v2867, 7
    %v2874 = vadd.f32 %v2856, %v2870
    %v2875 = vadd.f32 %v2857, %v2871
    %2876 = vset.pattern.permute.xlu0 2
    %2877 = vperm.xlu0 %2876, %v2284
    %v2878 = vpop.permute.xlu0 %2877
    %2880 = vset.pattern.permute.xlu0 2
    %2881 = vperm.xlu0 %2880, %v2286
    %v2882 = vpop.permute.xlu0 %2881
    %v2884 = vmul.f32 %v2878, %v2874
    %v2885 = vmul.f32 %v2882, %v2875
    %v2886 = vld [vmem:[%s1 + $0x78] sm:$0xff]
    %v2887 = vld [vmem:[%s1 + $0x80] sm:$0xff]
    %v2890 = vrot.slane %v2885, 7
    %v2891 = vsel %vm114, %v2890, %v2884
    %v2892 = vsel %vm122, %v2891, 0
    %2894 = vmatprep.subr.mxu0 0.0
    %2895 = vmatpush1.msra.mxu0 %v2886
    %2896 = vmatprep.subr.mxu0 0.0
    %2897 = vmatpush1.msra.mxu0 %v2887
    %2898 = vmatprep.subr.mxu0 0.0
    %2899 = vmatpush1.msra.mxu0 0.0
    %2900 = vmatprep.subr.mxu0 0.0
    %2901 = vmatpush1.msra.mxu0 0.0
    %2902 = vmatprep.subr.mxu0 0.0
    %2903 = vmatpush1.msra.mxu0 0.0
    %2904 = vmatprep.subr.mxu0 0.0
    %2905 = vmatpush1.msra.mxu0 0.0
    %2906 = vmatprep.subr.mxu0 0.0
    %2907 = vmatpush1.msra.mxu0 0.0
    %2908 = vmatprep.subr.mxu0 0.0
    %2909 = vmatpush1.msra.mxu0 0.0
    %2910 = vmatprep.subr.mxu0 0.0
    %2911 = vmatpush1.msra.mxu0 0.0
    %2912 = vmatprep.subr.mxu0 0.0
    %2913 = vmatpush1.msra.mxu0 0.0
    %2914 = vmatprep.subr.mxu0 0.0
    %2915 = vmatpush1.msra.mxu0 0.0
    %2916 = vmatprep.subr.mxu0 0.0
    %2917 = vmatpush1.msra.mxu0 0.0
    %2918 = vmatprep.subr.mxu0 0.0
    %2919 = vmatpush1.msra.mxu0 0.0
    %2920 = vmatprep.subr.mxu0 0.0
    %2921 = vmatpush1.msra.mxu0 0.0
    %2922 = vmatprep.subr.mxu0 0.0
    %2923 = vmatpush1.msra.mxu0 0.0
    %2924 = vmatprep.subr.mxu0 0.0
    %2925 = vmatpush1.msra.mxu0 0.0
    %2926 = vmatprep.subr.mxu0 0.0
    %2927 = vmatpush1.msra.mxu0 0.0
    %2928 = vmatprep.subr.mxu0 0.0
    %2929 = vmatpush1.msra.mxu0 0.0
    %2930 = vmatprep.subr.mxu0 0.0
    %2931 = vmatpush1.msra.mxu0 0.0
    %2932 = vmatprep.subr.mxu0 0.0
    %2933 = vmatpush1.msra.mxu0 0.0
    %2934 = vmatprep.subr.mxu0 0.0
    %2935 = vmatpush1.msra.mxu0 0.0
    %2936 = vmatprep.subr.mxu0 0.0
    %2937 = vmatpush1.msra.mxu0 0.0
    %2938 = vmatprep.subr.mxu0 0.0
    %2939 = vmatpush1.msra.mxu0 0.0
    %2940 = vmatprep.subr.mxu0 0.0
    %2941 = vmatpush1.msra.mxu0 0.0
    %2942 = vmatprep.subr.mxu0 0.0
    %2943 = vmatpush1.msra.mxu0 0.0
    %2944 = vmatprep.subr.mxu0 0.0
    %2945 = vmatpush1.msra.mxu0 0.0
    %2946 = vmatprep.subr.mxu0 0.0
    %2947 = vmatpush1.msra.mxu0 0.0
    %2948 = vmatprep.subr.mxu0 0.0
    %2949 = vmatpush1.msra.mxu0 0.0
    %2950 = vmatprep.subr.mxu0 0.0
    %2951 = vmatpush1.msra.mxu0 0.0
    %2952 = vmatprep.subr.mxu0 0.0
    %2953 = vmatpush1.msra.mxu0 0.0
    %2954 = vmatprep.subr.mxu0 0.0
    %2955 = vmatpush1.msra.mxu0 0.0
    %2956 = vmatprep.subr.mxu0 0.0
    %2957 = vmatpush1.msra.mxu0 0.0
    %2958 = vmatprep.mubr.f32.mxu0 0.0
    %2959 = vmatmul.mubr.f32.gmra.mrb[0].mxu0 %v2892
    %v2960 = vpop.f32.mrb[0].mxu0
    %v2961 = vadd.f32 0.0, %v2960
    %v2962 = vpop.f32.mrb[0].mxu0
    %2963 = vdwg.mxu0
    %v2964 = vadd.f32 %v2737, %v2961
    %v2965 = vlaneseq
    %v2966 = vshrl.u32 %v2965, 7
    %v2967 = vsub.s32 0, %v2966
    %v2968 = vrot.slane %v2287, %v2967
    %v2969 = vadd.f32 %v2964, %v2968
    %vm2970 = vcmask 33792
    %2971 = vst.msk [vmem:[#allocation3] sm:$0x3] %vm2970, %v2969
    // Predicated region
    $region10: #{tpu_custom_call.1} parent=1 // pred_check
      _
    $region11: #{tpu_custom_call.1} parent=1 // pred_check_branch
      %2973 = sbr.rel (0) target = $region13
    $region12: #{tpu_custom_call.1} parent=1 // pred_region
      %s2975 = ssub.s32 32, 32
      %2976 = vsyncadd [#allocation4], %s2975
      %s2978 = sshll.u32 [#allocation3], 4
      %s2979 = int_to_ptr.vmem [resolvable:$true] %s2978
      %2981 = dma.vmem_to_hbm [thread:$0]  %s2979, 32, %s2, [#allocation4]
    $region13: #{tpu_custom_call.1} parent=1 // pred_fallthru
      _
    // Predicated region
    $region14: #{tpu_custom_call.1} parent=1 // pred_check
      _
    $region15: #{tpu_custom_call.1} parent=1 // pred_check_branch
      %2983 = sbr.rel (0) target = $region17
    $region16: #{tpu_custom_call.1} parent=1 // pred_region
      %2984 = dma.done [#allocation4], 32
    $region17: #{tpu_custom_call.1} parent=1 // pred_fallthru
      _
    %2985 = vsyncpa [#allocation4], 1

</llo_original>
